<compile_context>
chip_gen: v7x
topology: tpu7x:2x2x1
jax: 0.10.0
libtpu: 0.0.40
codegen_flags: <defaults>
</compile_context>

<pallas_src>
import functools

import numpy as np

import jax
import jax.numpy as jnp
from jax import lax
from jax.experimental import pallas as pl
from jax.experimental.pallas import tpu as pltpu

EPS = 1e-5  # PyTorch InstanceNorm2d default


# ---------------------------------------------------------------------------
# Fused kernel: implicit concat + 3x3 conv (+bias) + InstanceNorm + ELU
# for one block of Nb batch samples.
# ---------------------------------------------------------------------------
def _concat_conv_in_elu_kernel(x_ref, y_ref, m_ref, w_ref, b_ref, g_ref, bt_ref,
                               o_ref, *, H, W, Cx, Cy, Cout, Nb):
    # x_ref : (Cx, 1, Nb, HW)   input channels, channel-major, flat spatial
    # y_ref : (Cy, 1, Nb, HW)   condition channels
    # m_ref : (9, 1, HW)        tap-validity masks (0/1 f32)
    # w_ref : (C*9, Cout, 1)    conv weights as per-(ci,tap) Cout-columns (VMEM)
    # b_ref / g_ref / bt_ref : (Cout, 1)  conv bias / IN gamma / IN beta (VMEM)
    # o_ref : (Nb, Cout, HW)
    HW = H * W
    C = Cx + Cy
    inv_hw = jnp.float32(1.0 / HW)

    taps = [(dy, dx) for dy in range(3) for dx in range(3)]

    # Tap-validity masks hoisted out of the channel loop (9 compares total).
    keep = [m_ref[t] > jnp.float32(0.5) for t in range(9)]      # each (1, HW) bool

    # Stacked accumulator (Nb, Cout, HW), initialised with the conv bias.
    acc = jnp.zeros((Nb, Cout, HW), jnp.float32) + b_ref[...][None, :, :]

    # 3x3 conv (over the implicitly concatenated x||y channels) as 9 rolled
    # taps per input channel: roll (XLU) + select (VPU) + one broadcasted
    # multiply-add against the (Cout, 1) weight column.
    for ci in range(C):
        slab = (x_ref[ci, 0] if ci < Cx else y_ref[ci - Cx, 0])  # (Nb, HW)
        slab = slab.astype(jnp.float32)
        for t, (dy, dx) in enumerate(taps):
            s = (dy - 1) * W + (dx - 1)                 # flat offset of this tap
            if s == 0:
                sh = slab                               # centre tap: no wrap
            else:
                sh = pltpu.roll(slab, (-s) % HW, axis=1)        # (Nb, HW)
                sh = jnp.where(keep[t], sh, jnp.float32(0.0))   # true zero padding
            wv = w_ref[ci * 9 + t]                      # (Cout, 1) weight column
            acc = acc + wv[None, :, :] * sh[:, None, :]  # (Nb, Cout, HW)

    # InstanceNorm (per-instance, biased stats over HW) + affine + ELU,
    # then ONE lane-dense store of the whole (Nb, Cout, HW) block.
    mean = jnp.sum(acc, axis=-1, keepdims=True) * inv_hw        # (Nb, Cout, 1)
    cen = acc - mean
    var = jnp.sum(cen * cen, axis=-1, keepdims=True) * inv_hw
    scale = lax.rsqrt(var + jnp.float32(EPS)) * g_ref[...][None, :, :]
    v = cen * scale + bt_ref[...][None, :, :]
    v = jnp.where(v > 0, v,
                  jnp.exp(jnp.minimum(v, jnp.float32(0.0))) - jnp.float32(1.0))
    o_ref[...] = v.astype(o_ref.dtype)


# ---------------------------------------------------------------------------
# Wrapper: NCHW in / NCHW out (like the PyTorch module).
# ---------------------------------------------------------------------------
def concatenate_condition_transform(x_nchw, y_nchw, params):
    N, Cx, H, W = x_nchw.shape
    Ny, Cy, Hy, Wy = y_nchw.shape
    assert (N, H, W) == (Ny, Hy, Wy)
    C = Cx + Cy
    HW = H * W

    w = jnp.asarray(params["weight"], jnp.float32)      # (Cout, Cx+Cy, 3, 3) OIHW
    b = jnp.asarray(params["bias"], jnp.float32)        # (Cout,)
    gamma = jnp.asarray(params["gamma"], jnp.float32)   # (Cout,)
    beta = jnp.asarray(params["beta"], jnp.float32)     # (Cout,)
    Cout = w.shape[0]
    assert w.shape == (Cout, C, 3, 3)

    # Samples per grid step: largest divisor of N <= 8 (fills vreg sublanes and
    # amortises per-step overhead) while keeping the grid length >= 2 when
    # possible (so v7x megacore can shard the batch axis across its two TCs).
    divisors = [d for d in range(1, min(N, 8) + 1) if N % d == 0]
    cand = [d for d in divisors if N // d >= 2]
    Nb = max(cand) if cand else max(divisors)
    G = N // Nb

    # Layout plumbing (tiny one-time XLA ops in HBM, not compute hoisting).
    x_t = x_nchw.reshape(N, Cx, HW).transpose(1, 0, 2).reshape(Cx, G, Nb, HW)
    y_t = y_nchw.reshape(N, Cy, HW).transpose(1, 0, 2).reshape(Cy, G, Nb, HW)
    w_col = w.reshape(Cout, C * 9).T.reshape(C * 9, Cout, 1)   # [(ci,tap), co, 1]
    b_col = b.reshape(Cout, 1)
    g_col = gamma.reshape(Cout, 1)
    bt_col = beta.reshape(Cout, 1)

    # Tap-validity masks (host constants): tap (dy, dx) is valid at flat pixel
    # p = h*W + w iff (h+dy-1, w+dx-1) lies inside the image.
    hh = np.arange(HW, dtype=np.int64) // W
    ww = np.arange(HW, dtype=np.int64) % W
    masks = np.zeros((9, 1, HW), np.float32)
    for t, (dy, dx) in enumerate([(dy, dx) for dy in range(3) for dx in range(3)]):
        ok = ((hh + dy - 1 >= 0) & (hh + dy - 1 < H) &
              (ww + dx - 1 >= 0) & (ww + dx - 1 < W))
        masks[t, 0, :] = ok.astype(np.float32)
    masks = jnp.asarray(masks)

    kernel = functools.partial(_concat_conv_in_elu_kernel,
                               H=H, W=W, Cx=Cx, Cy=Cy, Cout=Cout, Nb=Nb)

    itemsize = np.dtype(x_nchw.dtype).itemsize
    cost = pl.CostEstimate(
        flops=int(2 * N * Cout * C * 9 * HW + 8 * N * Cout * HW),
        transcendentals=int(N * Cout * HW),
        bytes_accessed=int(itemsize * (N * C * HW + N * Cout * HW)
                           + 4 * (C * 9 * Cout + 3 * Cout + 9 * HW)),
    )

    out = pl.pallas_call(
        kernel,
        out_shape=jax.ShapeDtypeStruct((N, Cout, HW), x_nchw.dtype),
        grid_spec=pltpu.PrefetchScalarGridSpec(
            num_scalar_prefetch=0,
            grid=(G,),
            in_specs=[
                pl.BlockSpec((Cx, 1, Nb, HW), lambda g: (0, g, 0, 0)),
                pl.BlockSpec((Cy, 1, Nb, HW), lambda g: (0, g, 0, 0)),
                pl.BlockSpec((9, 1, HW), lambda g: (0, 0, 0)),
                pl.BlockSpec((C * 9, Cout, 1), lambda g: (0, 0, 0)),
                pl.BlockSpec((Cout, 1), lambda g: (0, 0)),
                pl.BlockSpec((Cout, 1), lambda g: (0, 0)),
                pl.BlockSpec((Cout, 1), lambda g: (0, 0)),
            ],
            out_specs=pl.BlockSpec((Nb, Cout, HW), lambda g: (g, 0, 0)),
        ),
        compiler_params=pltpu.CompilerParams(
            dimension_semantics=("parallel",)),   # per-sample work -> megacore
        cost_estimate=cost,
    )(x_t, y_t, masks, w_col, b_col, g_col, bt_col)

    return out.reshape(N, Cout, H, W)


# ---------------------------------------------------------------------------
# Pure-JAX reference (for correctness check)
# ---------------------------------------------------------------------------
def reference(x, y, params):
    cat = jnp.concatenate([x, y], axis=1)
    out = lax.conv_general_dilated(
        cat, params["weight"], (1, 1), ((1, 1), (1, 1)),
        dimension_numbers=("NCHW", "OIHW", "NCHW"))
    out = out + params["bias"][None, :, None, None]
    mean = jnp.mean(out, axis=(2, 3), keepdims=True)
    var = jnp.mean((out - mean) ** 2, axis=(2, 3), keepdims=True)
    yn = (out - mean) / jnp.sqrt(var + EPS)
    yn = yn * params["gamma"][None, :, None, None] + params["beta"][None, :, None, None]
    return jnp.where(yn > 0, yn, jnp.exp(jnp.minimum(yn, 0.0)) - 1.0)


if __name__ == "__main__":
    key = jax.random.PRNGKey(0)
    in_channels, condition_channels = 4, 6
    N, H, W = 2, 16, 16

    ks = jax.random.split(key, 6)
    x = jax.random.normal(ks[0], (N, in_channels, H, W), jnp.float32)
    y = jax.random.normal(ks[1], (N, condition_channels, H, W), jnp.float32)

    C = in_channels + condition_channels
    params = dict(
        # Conv2d(in_channels + condition_channels, in_channels, 3, padding=1)
        weight=0.1 * jax.random.normal(ks[2], (in_channels, C, 3, 3), jnp.float32),
        bias=0.1 * jax.random.normal(ks[3], (in_channels,), jnp.float32),
        # InstanceNorm2d(in_channels, affine=True)
        gamma=1.0 + 0.1 * jax.random.normal(ks[4], (in_channels,), jnp.float32),
        beta=0.1 * jax.random.normal(ks[5], (in_channels,), jnp.float32),
    )

    out = concatenate_condition_transform(x, y, params)
    out = jax.block_until_ready(out)

    assert out.shape == (N, in_channels, H, W), out.shape
    ref = reference(x, y, params)
    max_err = float(jnp.max(jnp.abs(out - ref)))
    assert jnp.allclose(out, ref, atol=2e-3, rtol=2e-3), max_err

    print("KERNEL_OK")
</pallas_src>

<mosaic_0001>
module attributes {stable_mosaic.version = 11 : i64} {
  func.func @_concat_conv_in_elu_kernel(%arg0: i32, %arg1: memref<4x1x1x256xf32, #tpu.memory_space<vmem>>, %arg2: memref<6x1x1x256xf32, #tpu.memory_space<vmem>>, %arg3: memref<9x1x256xf32, #tpu.memory_space<vmem>>, %arg4: memref<90x4x1xf32, #tpu.memory_space<vmem>>, %arg5: memref<4x1xf32, #tpu.memory_space<vmem>>, %arg6: memref<4x1xf32, #tpu.memory_space<vmem>>, %arg7: memref<4x1xf32, #tpu.memory_space<vmem>>, %arg8: memref<1x4x256xf32, #tpu.memory_space<vmem>>) attributes {dimension_semantics = [#tpu.dimension_semantics<parallel>], iteration_bounds = array<i64: 2>, scalar_prefetch = 0 : i64, scratch_operands = 0 : i64, tpu.core_type = #tpu.core_type<tc>, window_params = [{transform_indices = @transform_0, window_bounds = array<i64: 4, 1, 1, 256>}, {transform_indices = @transform_1, window_bounds = array<i64: 6, 1, 1, 256>}, {pipeline_mode = #tpu.pipeline_mode<synchronous>, transform_indices = @transform_2, window_bounds = array<i64: 9, 1, 256>}, {pipeline_mode = #tpu.pipeline_mode<synchronous>, transform_indices = @transform_3, window_bounds = array<i64: 90, 4, 1>}, {pipeline_mode = #tpu.pipeline_mode<synchronous>, transform_indices = @transform_4, window_bounds = array<i64: 4, 1>}, {pipeline_mode = #tpu.pipeline_mode<synchronous>, transform_indices = @transform_5, window_bounds = array<i64: 4, 1>}, {pipeline_mode = #tpu.pipeline_mode<synchronous>, transform_indices = @transform_6, window_bounds = array<i64: 4, 1>}, {transform_indices = @transform_7, window_bounds = array<i64: 1, 4, 256>}]} {
    %c0 = arith.constant 0 : index
    %c0_0 = arith.constant 0 : index
    %c0_1 = arith.constant 0 : index
    %0 = vector.load %arg3[%c0, %c0_0, %c0_1] : memref<9x1x256xf32, #tpu.memory_space<vmem>>, vector<1x1x256xf32>
    %1 = vector.shape_cast %0 : vector<1x1x256xf32> to vector<1x256xf32>
    %cst = arith.constant 5.000000e-01 : f32
    %2 = vector.broadcast %cst : f32 to vector<1x256xf32>
    %3 = arith.cmpf ogt, %1, %2 : vector<1x256xf32>
    %c1 = arith.constant 1 : index
    %c0_2 = arith.constant 0 : index
    %c0_3 = arith.constant 0 : index
    %4 = vector.load %arg3[%c1, %c0_2, %c0_3] : memref<9x1x256xf32, #tpu.memory_space<vmem>>, vector<1x1x256xf32>
    %5 = vector.shape_cast %4 : vector<1x1x256xf32> to vector<1x256xf32>
    %cst_4 = arith.constant 5.000000e-01 : f32
    %6 = vector.broadcast %cst_4 : f32 to vector<1x256xf32>
    %7 = arith.cmpf ogt, %5, %6 : vector<1x256xf32>
    %c2 = arith.constant 2 : index
    %c0_5 = arith.constant 0 : index
    %c0_6 = arith.constant 0 : index
    %8 = vector.load %arg3[%c2, %c0_5, %c0_6] : memref<9x1x256xf32, #tpu.memory_space<vmem>>, vector<1x1x256xf32>
    %9 = vector.shape_cast %8 : vector<1x1x256xf32> to vector<1x256xf32>
    %cst_7 = arith.constant 5.000000e-01 : f32
    %10 = vector.broadcast %cst_7 : f32 to vector<1x256xf32>
    %11 = arith.cmpf ogt, %9, %10 : vector<1x256xf32>
    %c3 = arith.constant 3 : index
    %c0_8 = arith.constant 0 : index
    %c0_9 = arith.constant 0 : index
    %12 = vector.load %arg3[%c3, %c0_8, %c0_9] : memref<9x1x256xf32, #tpu.memory_space<vmem>>, vector<1x1x256xf32>
    %13 = vector.shape_cast %12 : vector<1x1x256xf32> to vector<1x256xf32>
    %cst_10 = arith.constant 5.000000e-01 : f32
    %14 = vector.broadcast %cst_10 : f32 to vector<1x256xf32>
    %15 = arith.cmpf ogt, %13, %14 : vector<1x256xf32>
    %c5 = arith.constant 5 : index
    %c0_11 = arith.constant 0 : index
    %c0_12 = arith.constant 0 : index
    %16 = vector.load %arg3[%c5, %c0_11, %c0_12] : memref<9x1x256xf32, #tpu.memory_space<vmem>>, vector<1x1x256xf32>
    %17 = vector.shape_cast %16 : vector<1x1x256xf32> to vector<1x256xf32>
    %cst_13 = arith.constant 5.000000e-01 : f32
    %18 = vector.broadcast %cst_13 : f32 to vector<1x256xf32>
    %19 = arith.cmpf ogt, %17, %18 : vector<1x256xf32>
    %c6 = arith.constant 6 : index
    %c0_14 = arith.constant 0 : index
    %c0_15 = arith.constant 0 : index
    %20 = vector.load %arg3[%c6, %c0_14, %c0_15] : memref<9x1x256xf32, #tpu.memory_space<vmem>>, vector<1x1x256xf32>
    %21 = vector.shape_cast %20 : vector<1x1x256xf32> to vector<1x256xf32>
    %cst_16 = arith.constant 5.000000e-01 : f32
    %22 = vector.broadcast %cst_16 : f32 to vector<1x256xf32>
    %23 = arith.cmpf ogt, %21, %22 : vector<1x256xf32>
    %c7 = arith.constant 7 : index
    %c0_17 = arith.constant 0 : index
    %c0_18 = arith.constant 0 : index
    %24 = vector.load %arg3[%c7, %c0_17, %c0_18] : memref<9x1x256xf32, #tpu.memory_space<vmem>>, vector<1x1x256xf32>
    %25 = vector.shape_cast %24 : vector<1x1x256xf32> to vector<1x256xf32>
    %cst_19 = arith.constant 5.000000e-01 : f32
    %26 = vector.broadcast %cst_19 : f32 to vector<1x256xf32>
    %27 = arith.cmpf ogt, %25, %26 : vector<1x256xf32>
    %c8 = arith.constant 8 : index
    %c0_20 = arith.constant 0 : index
    %c0_21 = arith.constant 0 : index
    %28 = vector.load %arg3[%c8, %c0_20, %c0_21] : memref<9x1x256xf32, #tpu.memory_space<vmem>>, vector<1x1x256xf32>
    %29 = vector.shape_cast %28 : vector<1x1x256xf32> to vector<1x256xf32>
    %cst_22 = arith.constant 5.000000e-01 : f32
    %30 = vector.broadcast %cst_22 : f32 to vector<1x256xf32>
    %31 = arith.cmpf ogt, %29, %30 : vector<1x256xf32>
    %cst_23 = arith.constant 0.000000e+00 : f32
    %32 = vector.broadcast %cst_23 : f32 to vector<1x4x256xf32>
    %c0_24 = arith.constant 0 : index
    %c0_25 = arith.constant 0 : index
    %33 = vector.load %arg5[%c0_24, %c0_25] : memref<4x1xf32, #tpu.memory_space<vmem>>, vector<4x1xf32>
    %34 = vector.shape_cast %33 : vector<4x1xf32> to vector<1x4x1xf32>
    %35 = vector.broadcast %34 : vector<1x4x1xf32> to vector<1x4x256xf32>
    %36 = arith.addf %32, %35 : vector<1x4x256xf32>
    %c0_26 = arith.constant 0 : index
    %c0_27 = arith.constant 0 : index
    %c0_28 = arith.constant 0 : index
    %c0_29 = arith.constant 0 : index
    %37 = vector.load %arg1[%c0_26, %c0_27, %c0_28, %c0_29] : memref<4x1x1x256xf32, #tpu.memory_space<vmem>>, vector<1x1x1x256xf32>
    %38 = vector.shape_cast %37 : vector<1x1x1x256xf32> to vector<1x256xf32>
    %c17_i32 = arith.constant 17 : i32
    %39 = tpu.dynamic_rotate %38 by %c17_i32 dim 1 : vector<1x256xf32>, i32 -> vector<1x256xf32>
    %cst_30 = arith.constant 0.000000e+00 : f32
    %40 = vector.broadcast %cst_30 : f32 to vector<1x256xf32>
    %41 = arith.select %3, %39, %40 : vector<1x256xi1>, vector<1x256xf32>
    %c0_31 = arith.constant 0 : index
    %c0_32 = arith.constant 0 : index
    %c0_33 = arith.constant 0 : index
    %42 = vector.load %arg4[%c0_31, %c0_32, %c0_33] : memref<90x4x1xf32, #tpu.memory_space<vmem>>, vector<1x4x1xf32>
    %43 = vector.shape_cast %42 : vector<1x4x1xf32> to vector<4x1xf32>
    %44 = vector.shape_cast %43 : vector<4x1xf32> to vector<1x4x1xf32>
    %45 = vector.shape_cast %41 : vector<1x256xf32> to vector<1x1x256xf32>
    %46 = vector.broadcast %44 : vector<1x4x1xf32> to vector<1x4x256xf32>
    %47 = vector.broadcast %45 : vector<1x1x256xf32> to vector<1x4x256xf32>
    %48 = arith.mulf %46, %47 : vector<1x4x256xf32>
    %49 = arith.addf %36, %48 : vector<1x4x256xf32>
    %c16_i32 = arith.constant 16 : i32
    %50 = tpu.dynamic_rotate %38 by %c16_i32 dim 1 : vector<1x256xf32>, i32 -> vector<1x256xf32>
    %cst_34 = arith.constant 0.000000e+00 : f32
    %51 = vector.broadcast %cst_34 : f32 to vector<1x256xf32>
    %52 = arith.select %7, %50, %51 : vector<1x256xi1>, vector<1x256xf32>
    %c1_35 = arith.constant 1 : index
    %c0_36 = arith.constant 0 : index
    %c0_37 = arith.constant 0 : index
    %53 = vector.load %arg4[%c1_35, %c0_36, %c0_37] : memref<90x4x1xf32, #tpu.memory_space<vmem>>, vector<1x4x1xf32>
    %54 = vector.shape_cast %53 : vector<1x4x1xf32> to vector<4x1xf32>
    %55 = vector.shape_cast %54 : vector<4x1xf32> to vector<1x4x1xf32>
    %56 = vector.shape_cast %52 : vector<1x256xf32> to vector<1x1x256xf32>
    %57 = vector.broadcast %55 : vector<1x4x1xf32> to vector<1x4x256xf32>
    %58 = vector.broadcast %56 : vector<1x1x256xf32> to vector<1x4x256xf32>
    %59 = arith.mulf %57, %58 : vector<1x4x256xf32>
    %60 = arith.addf %49, %59 : vector<1x4x256xf32>
    %c15_i32 = arith.constant 15 : i32
    %61 = tpu.dynamic_rotate %38 by %c15_i32 dim 1 : vector<1x256xf32>, i32 -> vector<1x256xf32>
    %cst_38 = arith.constant 0.000000e+00 : f32
    %62 = vector.broadcast %cst_38 : f32 to vector<1x256xf32>
    %63 = arith.select %11, %61, %62 : vector<1x256xi1>, vector<1x256xf32>
    %c2_39 = arith.constant 2 : index
    %c0_40 = arith.constant 0 : index
    %c0_41 = arith.constant 0 : index
    %64 = vector.load %arg4[%c2_39, %c0_40, %c0_41] : memref<90x4x1xf32, #tpu.memory_space<vmem>>, vector<1x4x1xf32>
    %65 = vector.shape_cast %64 : vector<1x4x1xf32> to vector<4x1xf32>
    %66 = vector.shape_cast %65 : vector<4x1xf32> to vector<1x4x1xf32>
    %67 = vector.shape_cast %63 : vector<1x256xf32> to vector<1x1x256xf32>
    %68 = vector.broadcast %66 : vector<1x4x1xf32> to vector<1x4x256xf32>
    %69 = vector.broadcast %67 : vector<1x1x256xf32> to vector<1x4x256xf32>
    %70 = arith.mulf %68, %69 : vector<1x4x256xf32>
    %71 = arith.addf %60, %70 : vector<1x4x256xf32>
    %c1_i32 = arith.constant 1 : i32
    %72 = tpu.dynamic_rotate %38 by %c1_i32 dim 1 : vector<1x256xf32>, i32 -> vector<1x256xf32>
    %cst_42 = arith.constant 0.000000e+00 : f32
    %73 = vector.broadcast %cst_42 : f32 to vector<1x256xf32>
    %74 = arith.select %15, %72, %73 : vector<1x256xi1>, vector<1x256xf32>
    %c3_43 = arith.constant 3 : index
    %c0_44 = arith.constant 0 : index
    %c0_45 = arith.constant 0 : index
    %75 = vector.load %arg4[%c3_43, %c0_44, %c0_45] : memref<90x4x1xf32, #tpu.memory_space<vmem>>, vector<1x4x1xf32>
    %76 = vector.shape_cast %75 : vector<1x4x1xf32> to vector<4x1xf32>
    %77 = vector.shape_cast %76 : vector<4x1xf32> to vector<1x4x1xf32>
    %78 = vector.shape_cast %74 : vector<1x256xf32> to vector<1x1x256xf32>
    %79 = vector.broadcast %77 : vector<1x4x1xf32> to vector<1x4x256xf32>
    %80 = vector.broadcast %78 : vector<1x1x256xf32> to vector<1x4x256xf32>
    %81 = arith.mulf %79, %80 : vector<1x4x256xf32>
    %82 = arith.addf %71, %81 : vector<1x4x256xf32>
    %c4 = arith.constant 4 : index
    %c0_46 = arith.constant 0 : index
    %c0_47 = arith.constant 0 : index
    %83 = vector.load %arg4[%c4, %c0_46, %c0_47] : memref<90x4x1xf32, #tpu.memory_space<vmem>>, vector<1x4x1xf32>
    %84 = vector.shape_cast %83 : vector<1x4x1xf32> to vector<4x1xf32>
    %85 = vector.shape_cast %84 : vector<4x1xf32> to vector<1x4x1xf32>
    %86 = vector.shape_cast %38 : vector<1x256xf32> to vector<1x1x256xf32>
    %87 = vector.broadcast %85 : vector<1x4x1xf32> to vector<1x4x256xf32>
    %88 = vector.broadcast %86 : vector<1x1x256xf32> to vector<1x4x256xf32>
    %89 = arith.mulf %87, %88 : vector<1x4x256xf32>
    %90 = arith.addf %82, %89 : vector<1x4x256xf32>
    %c255_i32 = arith.constant 255 : i32
    %91 = tpu.dynamic_rotate %38 by %c255_i32 dim 1 : vector<1x256xf32>, i32 -> vector<1x256xf32>
    %cst_48 = arith.constant 0.000000e+00 : f32
    %92 = vector.broadcast %cst_48 : f32 to vector<1x256xf32>
    %93 = arith.select %19, %91, %92 : vector<1x256xi1>, vector<1x256xf32>
    %c5_49 = arith.constant 5 : index
    %c0_50 = arith.constant 0 : index
    %c0_51 = arith.constant 0 : index
    %94 = vector.load %arg4[%c5_49, %c0_50, %c0_51] : memref<90x4x1xf32, #tpu.memory_space<vmem>>, vector<1x4x1xf32>
    %95 = vector.shape_cast %94 : vector<1x4x1xf32> to vector<4x1xf32>
    %96 = vector.shape_cast %95 : vector<4x1xf32> to vector<1x4x1xf32>
    %97 = vector.shape_cast %93 : vector<1x256xf32> to vector<1x1x256xf32>
    %98 = vector.broadcast %96 : vector<1x4x1xf32> to vector<1x4x256xf32>
    %99 = vector.broadcast %97 : vector<1x1x256xf32> to vector<1x4x256xf32>
    %100 = arith.mulf %98, %99 : vector<1x4x256xf32>
    %101 = arith.addf %90, %100 : vector<1x4x256xf32>
    %c241_i32 = arith.constant 241 : i32
    %102 = tpu.dynamic_rotate %38 by %c241_i32 dim 1 : vector<1x256xf32>, i32 -> vector<1x256xf32>
    %cst_52 = arith.constant 0.000000e+00 : f32
    %103 = vector.broadcast %cst_52 : f32 to vector<1x256xf32>
    %104 = arith.select %23, %102, %103 : vector<1x256xi1>, vector<1x256xf32>
    %c6_53 = arith.constant 6 : index
    %c0_54 = arith.constant 0 : index
    %c0_55 = arith.constant 0 : index
    %105 = vector.load %arg4[%c6_53, %c0_54, %c0_55] : memref<90x4x1xf32, #tpu.memory_space<vmem>>, vector<1x4x1xf32>
    %106 = vector.shape_cast %105 : vector<1x4x1xf32> to vector<4x1xf32>
    %107 = vector.shape_cast %106 : vector<4x1xf32> to vector<1x4x1xf32>
    %108 = vector.shape_cast %104 : vector<1x256xf32> to vector<1x1x256xf32>
    %109 = vector.broadcast %107 : vector<1x4x1xf32> to vector<1x4x256xf32>
    %110 = vector.broadcast %108 : vector<1x1x256xf32> to vector<1x4x256xf32>
    %111 = arith.mulf %109, %110 : vector<1x4x256xf32>
    %112 = arith.addf %101, %111 : vector<1x4x256xf32>
    %c240_i32 = arith.constant 240 : i32
    %113 = tpu.dynamic_rotate %38 by %c240_i32 dim 1 : vector<1x256xf32>, i32 -> vector<1x256xf32>
    %cst_56 = arith.constant 0.000000e+00 : f32
    %114 = vector.broadcast %cst_56 : f32 to vector<1x256xf32>
    %115 = arith.select %27, %113, %114 : vector<1x256xi1>, vector<1x256xf32>
    %c7_57 = arith.constant 7 : index
    %c0_58 = arith.constant 0 : index
    %c0_59 = arith.constant 0 : index
    %116 = vector.load %arg4[%c7_57, %c0_58, %c0_59] : memref<90x4x1xf32, #tpu.memory_space<vmem>>, vector<1x4x1xf32>
    %117 = vector.shape_cast %116 : vector<1x4x1xf32> to vector<4x1xf32>
    %118 = vector.shape_cast %117 : vector<4x1xf32> to vector<1x4x1xf32>
    %119 = vector.shape_cast %115 : vector<1x256xf32> to vector<1x1x256xf32>
    %120 = vector.broadcast %118 : vector<1x4x1xf32> to vector<1x4x256xf32>
    %121 = vector.broadcast %119 : vector<1x1x256xf32> to vector<1x4x256xf32>
    %122 = arith.mulf %120, %121 : vector<1x4x256xf32>
    %123 = arith.addf %112, %122 : vector<1x4x256xf32>
    %c239_i32 = arith.constant 239 : i32
    %124 = tpu.dynamic_rotate %38 by %c239_i32 dim 1 : vector<1x256xf32>, i32 -> vector<1x256xf32>
    %cst_60 = arith.constant 0.000000e+00 : f32
    %125 = vector.broadcast %cst_60 : f32 to vector<1x256xf32>
    %126 = arith.select %31, %124, %125 : vector<1x256xi1>, vector<1x256xf32>
    %c8_61 = arith.constant 8 : index
    %c0_62 = arith.constant 0 : index
    %c0_63 = arith.constant 0 : index
    %127 = vector.load %arg4[%c8_61, %c0_62, %c0_63] : memref<90x4x1xf32, #tpu.memory_space<vmem>>, vector<1x4x1xf32>
    %128 = vector.shape_cast %127 : vector<1x4x1xf32> to vector<4x1xf32>
    %129 = vector.shape_cast %128 : vector<4x1xf32> to vector<1x4x1xf32>
    %130 = vector.shape_cast %126 : vector<1x256xf32> to vector<1x1x256xf32>
    %131 = vector.broadcast %129 : vector<1x4x1xf32> to vector<1x4x256xf32>
    %132 = vector.broadcast %130 : vector<1x1x256xf32> to vector<1x4x256xf32>
    %133 = arith.mulf %131, %132 : vector<1x4x256xf32>
    %134 = arith.addf %123, %133 : vector<1x4x256xf32>
    %c1_64 = arith.constant 1 : index
    %c0_65 = arith.constant 0 : index
    %c0_66 = arith.constant 0 : index
    %c0_67 = arith.constant 0 : index
    %135 = vector.load %arg1[%c1_64, %c0_65, %c0_66, %c0_67] : memref<4x1x1x256xf32, #tpu.memory_space<vmem>>, vector<1x1x1x256xf32>
    %136 = vector.shape_cast %135 : vector<1x1x1x256xf32> to vector<1x256xf32>
    %c17_i32_68 = arith.constant 17 : i32
    %137 = tpu.dynamic_rotate %136 by %c17_i32_68 dim 1 : vector<1x256xf32>, i32 -> vector<1x256xf32>
    %cst_69 = arith.constant 0.000000e+00 : f32
    %138 = vector.broadcast %cst_69 : f32 to vector<1x256xf32>
    %139 = arith.select %3, %137, %138 : vector<1x256xi1>, vector<1x256xf32>
    %c9 = arith.constant 9 : index
    %c0_70 = arith.constant 0 : index
    %c0_71 = arith.constant 0 : index
    %140 = vector.load %arg4[%c9, %c0_70, %c0_71] : memref<90x4x1xf32, #tpu.memory_space<vmem>>, vector<1x4x1xf32>
    %141 = vector.shape_cast %140 : vector<1x4x1xf32> to vector<4x1xf32>
    %142 = vector.shape_cast %141 : vector<4x1xf32> to vector<1x4x1xf32>
    %143 = vector.shape_cast %139 : vector<1x256xf32> to vector<1x1x256xf32>
    %144 = vector.broadcast %142 : vector<1x4x1xf32> to vector<1x4x256xf32>
    %145 = vector.broadcast %143 : vector<1x1x256xf32> to vector<1x4x256xf32>
    %146 = arith.mulf %144, %145 : vector<1x4x256xf32>
    %147 = arith.addf %134, %146 : vector<1x4x256xf32>
    %c16_i32_72 = arith.constant 16 : i32
    %148 = tpu.dynamic_rotate %136 by %c16_i32_72 dim 1 : vector<1x256xf32>, i32 -> vector<1x256xf32>
    %cst_73 = arith.constant 0.000000e+00 : f32
    %149 = vector.broadcast %cst_73 : f32 to vector<1x256xf32>
    %150 = arith.select %7, %148, %149 : vector<1x256xi1>, vector<1x256xf32>
    %c10 = arith.constant 10 : index
    %c0_74 = arith.constant 0 : index
    %c0_75 = arith.constant 0 : index
    %151 = vector.load %arg4[%c10, %c0_74, %c0_75] : memref<90x4x1xf32, #tpu.memory_space<vmem>>, vector<1x4x1xf32>
    %152 = vector.shape_cast %151 : vector<1x4x1xf32> to vector<4x1xf32>
    %153 = vector.shape_cast %152 : vector<4x1xf32> to vector<1x4x1xf32>
    %154 = vector.shape_cast %150 : vector<1x256xf32> to vector<1x1x256xf32>
    %155 = vector.broadcast %153 : vector<1x4x1xf32> to vector<1x4x256xf32>
    %156 = vector.broadcast %154 : vector<1x1x256xf32> to vector<1x4x256xf32>
    %157 = arith.mulf %155, %156 : vector<1x4x256xf32>
    %158 = arith.addf %147, %157 : vector<1x4x256xf32>
    %c15_i32_76 = arith.constant 15 : i32
    %159 = tpu.dynamic_rotate %136 by %c15_i32_76 dim 1 : vector<1x256xf32>, i32 -> vector<1x256xf32>
    %cst_77 = arith.constant 0.000000e+00 : f32
    %160 = vector.broadcast %cst_77 : f32 to vector<1x256xf32>
    %161 = arith.select %11, %159, %160 : vector<1x256xi1>, vector<1x256xf32>
    %c11 = arith.constant 11 : index
    %c0_78 = arith.constant 0 : index
    %c0_79 = arith.constant 0 : index
    %162 = vector.load %arg4[%c11, %c0_78, %c0_79] : memref<90x4x1xf32, #tpu.memory_space<vmem>>, vector<1x4x1xf32>
    %163 = vector.shape_cast %162 : vector<1x4x1xf32> to vector<4x1xf32>
    %164 = vector.shape_cast %163 : vector<4x1xf32> to vector<1x4x1xf32>
    %165 = vector.shape_cast %161 : vector<1x256xf32> to vector<1x1x256xf32>
    %166 = vector.broadcast %164 : vector<1x4x1xf32> to vector<1x4x256xf32>
    %167 = vector.broadcast %165 : vector<1x1x256xf32> to vector<1x4x256xf32>
    %168 = arith.mulf %166, %167 : vector<1x4x256xf32>
    %169 = arith.addf %158, %168 : vector<1x4x256xf32>
    %c1_i32_80 = arith.constant 1 : i32
    %170 = tpu.dynamic_rotate %136 by %c1_i32_80 dim 1 : vector<1x256xf32>, i32 -> vector<1x256xf32>
    %cst_81 = arith.constant 0.000000e+00 : f32
    %171 = vector.broadcast %cst_81 : f32 to vector<1x256xf32>
    %172 = arith.select %15, %170, %171 : vector<1x256xi1>, vector<1x256xf32>
    %c12 = arith.constant 12 : index
    %c0_82 = arith.constant 0 : index
    %c0_83 = arith.constant 0 : index
    %173 = vector.load %arg4[%c12, %c0_82, %c0_83] : memref<90x4x1xf32, #tpu.memory_space<vmem>>, vector<1x4x1xf32>
    %174 = vector.shape_cast %173 : vector<1x4x1xf32> to vector<4x1xf32>
    %175 = vector.shape_cast %174 : vector<4x1xf32> to vector<1x4x1xf32>
    %176 = vector.shape_cast %172 : vector<1x256xf32> to vector<1x1x256xf32>
    %177 = vector.broadcast %175 : vector<1x4x1xf32> to vector<1x4x256xf32>
    %178 = vector.broadcast %176 : vector<1x1x256xf32> to vector<1x4x256xf32>
    %179 = arith.mulf %177, %178 : vector<1x4x256xf32>
    %180 = arith.addf %169, %179 : vector<1x4x256xf32>
    %c13 = arith.constant 13 : index
    %c0_84 = arith.constant 0 : index
    %c0_85 = arith.constant 0 : index
    %181 = vector.load %arg4[%c13, %c0_84, %c0_85] : memref<90x4x1xf32, #tpu.memory_space<vmem>>, vector<1x4x1xf32>
    %182 = vector.shape_cast %181 : vector<1x4x1xf32> to vector<4x1xf32>
    %183 = vector.shape_cast %182 : vector<4x1xf32> to vector<1x4x1xf32>
    %184 = vector.shape_cast %136 : vector<1x256xf32> to vector<1x1x256xf32>
    %185 = vector.broadcast %183 : vector<1x4x1xf32> to vector<1x4x256xf32>
    %186 = vector.broadcast %184 : vector<1x1x256xf32> to vector<1x4x256xf32>
    %187 = arith.mulf %185, %186 : vector<1x4x256xf32>
    %188 = arith.addf %180, %187 : vector<1x4x256xf32>
    %c255_i32_86 = arith.constant 255 : i32
    %189 = tpu.dynamic_rotate %136 by %c255_i32_86 dim 1 : vector<1x256xf32>, i32 -> vector<1x256xf32>
    %cst_87 = arith.constant 0.000000e+00 : f32
    %190 = vector.broadcast %cst_87 : f32 to vector<1x256xf32>
    %191 = arith.select %19, %189, %190 : vector<1x256xi1>, vector<1x256xf32>
    %c14 = arith.constant 14 : index
    %c0_88 = arith.constant 0 : index
    %c0_89 = arith.constant 0 : index
    %192 = vector.load %arg4[%c14, %c0_88, %c0_89] : memref<90x4x1xf32, #tpu.memory_space<vmem>>, vector<1x4x1xf32>
    %193 = vector.shape_cast %192 : vector<1x4x1xf32> to vector<4x1xf32>
    %194 = vector.shape_cast %193 : vector<4x1xf32> to vector<1x4x1xf32>
    %195 = vector.shape_cast %191 : vector<1x256xf32> to vector<1x1x256xf32>
    %196 = vector.broadcast %194 : vector<1x4x1xf32> to vector<1x4x256xf32>
    %197 = vector.broadcast %195 : vector<1x1x256xf32> to vector<1x4x256xf32>
    %198 = arith.mulf %196, %197 : vector<1x4x256xf32>
    %199 = arith.addf %188, %198 : vector<1x4x256xf32>
    %c241_i32_90 = arith.constant 241 : i32
    %200 = tpu.dynamic_rotate %136 by %c241_i32_90 dim 1 : vector<1x256xf32>, i32 -> vector<1x256xf32>
    %cst_91 = arith.constant 0.000000e+00 : f32
    %201 = vector.broadcast %cst_91 : f32 to vector<1x256xf32>
    %202 = arith.select %23, %200, %201 : vector<1x256xi1>, vector<1x256xf32>
    %c15 = arith.constant 15 : index
    %c0_92 = arith.constant 0 : index
    %c0_93 = arith.constant 0 : index
    %203 = vector.load %arg4[%c15, %c0_92, %c0_93] : memref<90x4x1xf32, #tpu.memory_space<vmem>>, vector<1x4x1xf32>
    %204 = vector.shape_cast %203 : vector<1x4x1xf32> to vector<4x1xf32>
    %205 = vector.shape_cast %204 : vector<4x1xf32> to vector<1x4x1xf32>
    %206 = vector.shape_cast %202 : vector<1x256xf32> to vector<1x1x256xf32>
    %207 = vector.broadcast %205 : vector<1x4x1xf32> to vector<1x4x256xf32>
    %208 = vector.broadcast %206 : vector<1x1x256xf32> to vector<1x4x256xf32>
    %209 = arith.mulf %207, %208 : vector<1x4x256xf32>
    %210 = arith.addf %199, %209 : vector<1x4x256xf32>
    %c240_i32_94 = arith.constant 240 : i32
    %211 = tpu.dynamic_rotate %136 by %c240_i32_94 dim 1 : vector<1x256xf32>, i32 -> vector<1x256xf32>
    %cst_95 = arith.constant 0.000000e+00 : f32
    %212 = vector.broadcast %cst_95 : f32 to vector<1x256xf32>
    %213 = arith.select %27, %211, %212 : vector<1x256xi1>, vector<1x256xf32>
    %c16 = arith.constant 16 : index
    %c0_96 = arith.constant 0 : index
    %c0_97 = arith.constant 0 : index
    %214 = vector.load %arg4[%c16, %c0_96, %c0_97] : memref<90x4x1xf32, #tpu.memory_space<vmem>>, vector<1x4x1xf32>
    %215 = vector.shape_cast %214 : vector<1x4x1xf32> to vector<4x1xf32>
    %216 = vector.shape_cast %215 : vector<4x1xf32> to vector<1x4x1xf32>
    %217 = vector.shape_cast %213 : vector<1x256xf32> to vector<1x1x256xf32>
    %218 = vector.broadcast %216 : vector<1x4x1xf32> to vector<1x4x256xf32>
    %219 = vector.broadcast %217 : vector<1x1x256xf32> to vector<1x4x256xf32>
    %220 = arith.mulf %218, %219 : vector<1x4x256xf32>
    %221 = arith.addf %210, %220 : vector<1x4x256xf32>
    %c239_i32_98 = arith.constant 239 : i32
    %222 = tpu.dynamic_rotate %136 by %c239_i32_98 dim 1 : vector<1x256xf32>, i32 -> vector<1x256xf32>
    %cst_99 = arith.constant 0.000000e+00 : f32
    %223 = vector.broadcast %cst_99 : f32 to vector<1x256xf32>
    %224 = arith.select %31, %222, %223 : vector<1x256xi1>, vector<1x256xf32>
    %c17 = arith.constant 17 : index
    %c0_100 = arith.constant 0 : index
    %c0_101 = arith.constant 0 : index
    %225 = vector.load %arg4[%c17, %c0_100, %c0_101] : memref<90x4x1xf32, #tpu.memory_space<vmem>>, vector<1x4x1xf32>
    %226 = vector.shape_cast %225 : vector<1x4x1xf32> to vector<4x1xf32>
    %227 = vector.shape_cast %226 : vector<4x1xf32> to vector<1x4x1xf32>
    %228 = vector.shape_cast %224 : vector<1x256xf32> to vector<1x1x256xf32>
    %229 = vector.broadcast %227 : vector<1x4x1xf32> to vector<1x4x256xf32>
    %230 = vector.broadcast %228 : vector<1x1x256xf32> to vector<1x4x256xf32>
    %231 = arith.mulf %229, %230 : vector<1x4x256xf32>
    %232 = arith.addf %221, %231 : vector<1x4x256xf32>
    %c2_102 = arith.constant 2 : index
    %c0_103 = arith.constant 0 : index
    %c0_104 = arith.constant 0 : index
    %c0_105 = arith.constant 0 : index
    %233 = vector.load %arg1[%c2_102, %c0_103, %c0_104, %c0_105] : memref<4x1x1x256xf32, #tpu.memory_space<vmem>>, vector<1x1x1x256xf32>
    %234 = vector.shape_cast %233 : vector<1x1x1x256xf32> to vector<1x256xf32>
    %c17_i32_106 = arith.constant 17 : i32
    %235 = tpu.dynamic_rotate %234 by %c17_i32_106 dim 1 : vector<1x256xf32>, i32 -> vector<1x256xf32>
    %cst_107 = arith.constant 0.000000e+00 : f32
    %236 = vector.broadcast %cst_107 : f32 to vector<1x256xf32>
    %237 = arith.select %3, %235, %236 : vector<1x256xi1>, vector<1x256xf32>
    %c18 = arith.constant 18 : index
    %c0_108 = arith.constant 0 : index
    %c0_109 = arith.constant 0 : index
    %238 = vector.load %arg4[%c18, %c0_108, %c0_109] : memref<90x4x1xf32, #tpu.memory_space<vmem>>, vector<1x4x1xf32>
    %239 = vector.shape_cast %238 : vector<1x4x1xf32> to vector<4x1xf32>
    %240 = vector.shape_cast %239 : vector<4x1xf32> to vector<1x4x1xf32>
    %241 = vector.shape_cast %237 : vector<1x256xf32> to vector<1x1x256xf32>
    %242 = vector.broadcast %240 : vector<1x4x1xf32> to vector<1x4x256xf32>
    %243 = vector.broadcast %241 : vector<1x1x256xf32> to vector<1x4x256xf32>
    %244 = arith.mulf %242, %243 : vector<1x4x256xf32>
    %245 = arith.addf %232, %244 : vector<1x4x256xf32>
    %c16_i32_110 = arith.constant 16 : i32
    %246 = tpu.dynamic_rotate %234 by %c16_i32_110 dim 1 : vector<1x256xf32>, i32 -> vector<1x256xf32>
    %cst_111 = arith.constant 0.000000e+00 : f32
    %247 = vector.broadcast %cst_111 : f32 to vector<1x256xf32>
    %248 = arith.select %7, %246, %247 : vector<1x256xi1>, vector<1x256xf32>
    %c19 = arith.constant 19 : index
    %c0_112 = arith.constant 0 : index
    %c0_113 = arith.constant 0 : index
    %249 = vector.load %arg4[%c19, %c0_112, %c0_113] : memref<90x4x1xf32, #tpu.memory_space<vmem>>, vector<1x4x1xf32>
    %250 = vector.shape_cast %249 : vector<1x4x1xf32> to vector<4x1xf32>
    %251 = vector.shape_cast %250 : vector<4x1xf32> to vector<1x4x1xf32>
    %252 = vector.shape_cast %248 : vector<1x256xf32> to vector<1x1x256xf32>
    %253 = vector.broadcast %251 : vector<1x4x1xf32> to vector<1x4x256xf32>
    %254 = vector.broadcast %252 : vector<1x1x256xf32> to vector<1x4x256xf32>
    %255 = arith.mulf %253, %254 : vector<1x4x256xf32>
    %256 = arith.addf %245, %255 : vector<1x4x256xf32>
    %c15_i32_114 = arith.constant 15 : i32
    %257 = tpu.dynamic_rotate %234 by %c15_i32_114 dim 1 : vector<1x256xf32>, i32 -> vector<1x256xf32>
    %cst_115 = arith.constant 0.000000e+00 : f32
    %258 = vector.broadcast %cst_115 : f32 to vector<1x256xf32>
    %259 = arith.select %11, %257, %258 : vector<1x256xi1>, vector<1x256xf32>
    %c20 = arith.constant 20 : index
    %c0_116 = arith.constant 0 : index
    %c0_117 = arith.constant 0 : index
    %260 = vector.load %arg4[%c20, %c0_116, %c0_117] : memref<90x4x1xf32, #tpu.memory_space<vmem>>, vector<1x4x1xf32>
    %261 = vector.shape_cast %260 : vector<1x4x1xf32> to vector<4x1xf32>
    %262 = vector.shape_cast %261 : vector<4x1xf32> to vector<1x4x1xf32>
    %263 = vector.shape_cast %259 : vector<1x256xf32> to vector<1x1x256xf32>
    %264 = vector.broadcast %262 : vector<1x4x1xf32> to vector<1x4x256xf32>
    %265 = vector.broadcast %263 : vector<1x1x256xf32> to vector<1x4x256xf32>
    %266 = arith.mulf %264, %265 : vector<1x4x256xf32>
    %267 = arith.addf %256, %266 : vector<1x4x256xf32>
    %c1_i32_118 = arith.constant 1 : i32
    %268 = tpu.dynamic_rotate %234 by %c1_i32_118 dim 1 : vector<1x256xf32>, i32 -> vector<1x256xf32>
    %cst_119 = arith.constant 0.000000e+00 : f32
    %269 = vector.broadcast %cst_119 : f32 to vector<1x256xf32>
    %270 = arith.select %15, %268, %269 : vector<1x256xi1>, vector<1x256xf32>
    %c21 = arith.constant 21 : index
    %c0_120 = arith.constant 0 : index
    %c0_121 = arith.constant 0 : index
    %271 = vector.load %arg4[%c21, %c0_120, %c0_121] : memref<90x4x1xf32, #tpu.memory_space<vmem>>, vector<1x4x1xf32>
    %272 = vector.shape_cast %271 : vector<1x4x1xf32> to vector<4x1xf32>
    %273 = vector.shape_cast %272 : vector<4x1xf32> to vector<1x4x1xf32>
    %274 = vector.shape_cast %270 : vector<1x256xf32> to vector<1x1x256xf32>
    %275 = vector.broadcast %273 : vector<1x4x1xf32> to vector<1x4x256xf32>
    %276 = vector.broadcast %274 : vector<1x1x256xf32> to vector<1x4x256xf32>
    %277 = arith.mulf %275, %276 : vector<1x4x256xf32>
    %278 = arith.addf %267, %277 : vector<1x4x256xf32>
    %c22 = arith.constant 22 : index
    %c0_122 = arith.constant 0 : index
    %c0_123 = arith.constant 0 : index
    %279 = vector.load %arg4[%c22, %c0_122, %c0_123] : memref<90x4x1xf32, #tpu.memory_space<vmem>>, vector<1x4x1xf32>
    %280 = vector.shape_cast %279 : vector<1x4x1xf32> to vector<4x1xf32>
    %281 = vector.shape_cast %280 : vector<4x1xf32> to vector<1x4x1xf32>
    %282 = vector.shape_cast %234 : vector<1x256xf32> to vector<1x1x256xf32>
    %283 = vector.broadcast %281 : vector<1x4x1xf32> to vector<1x4x256xf32>
    %284 = vector.broadcast %282 : vector<1x1x256xf32> to vector<1x4x256xf32>
    %285 = arith.mulf %283, %284 : vector<1x4x256xf32>
    %286 = arith.addf %278, %285 : vector<1x4x256xf32>
    %c255_i32_124 = arith.constant 255 : i32
    %287 = tpu.dynamic_rotate %234 by %c255_i32_124 dim 1 : vector<1x256xf32>, i32 -> vector<1x256xf32>
    %cst_125 = arith.constant 0.000000e+00 : f32
    %288 = vector.broadcast %cst_125 : f32 to vector<1x256xf32>
    %289 = arith.select %19, %287, %288 : vector<1x256xi1>, vector<1x256xf32>
    %c23 = arith.constant 23 : index
    %c0_126 = arith.constant 0 : index
    %c0_127 = arith.constant 0 : index
    %290 = vector.load %arg4[%c23, %c0_126, %c0_127] : memref<90x4x1xf32, #tpu.memory_space<vmem>>, vector<1x4x1xf32>
    %291 = vector.shape_cast %290 : vector<1x4x1xf32> to vector<4x1xf32>
    %292 = vector.shape_cast %291 : vector<4x1xf32> to vector<1x4x1xf32>
    %293 = vector.shape_cast %289 : vector<1x256xf32> to vector<1x1x256xf32>
    %294 = vector.broadcast %292 : vector<1x4x1xf32> to vector<1x4x256xf32>
    %295 = vector.broadcast %293 : vector<1x1x256xf32> to vector<1x4x256xf32>
    %296 = arith.mulf %294, %295 : vector<1x4x256xf32>
    %297 = arith.addf %286, %296 : vector<1x4x256xf32>
    %c241_i32_128 = arith.constant 241 : i32
    %298 = tpu.dynamic_rotate %234 by %c241_i32_128 dim 1 : vector<1x256xf32>, i32 -> vector<1x256xf32>
    %cst_129 = arith.constant 0.000000e+00 : f32
    %299 = vector.broadcast %cst_129 : f32 to vector<1x256xf32>
    %300 = arith.select %23, %298, %299 : vector<1x256xi1>, vector<1x256xf32>
    %c24 = arith.constant 24 : index
    %c0_130 = arith.constant 0 : index
    %c0_131 = arith.constant 0 : index
    %301 = vector.load %arg4[%c24, %c0_130, %c0_131] : memref<90x4x1xf32, #tpu.memory_space<vmem>>, vector<1x4x1xf32>
    %302 = vector.shape_cast %301 : vector<1x4x1xf32> to vector<4x1xf32>
    %303 = vector.shape_cast %302 : vector<4x1xf32> to vector<1x4x1xf32>
    %304 = vector.shape_cast %300 : vector<1x256xf32> to vector<1x1x256xf32>
    %305 = vector.broadcast %303 : vector<1x4x1xf32> to vector<1x4x256xf32>
    %306 = vector.broadcast %304 : vector<1x1x256xf32> to vector<1x4x256xf32>
    %307 = arith.mulf %305, %306 : vector<1x4x256xf32>
    %308 = arith.addf %297, %307 : vector<1x4x256xf32>
    %c240_i32_132 = arith.constant 240 : i32
    %309 = tpu.dynamic_rotate %234 by %c240_i32_132 dim 1 : vector<1x256xf32>, i32 -> vector<1x256xf32>
    %cst_133 = arith.constant 0.000000e+00 : f32
    %310 = vector.broadcast %cst_133 : f32 to vector<1x256xf32>
    %311 = arith.select %27, %309, %310 : vector<1x256xi1>, vector<1x256xf32>
    %c25 = arith.constant 25 : index
    %c0_134 = arith.constant 0 : index
    %c0_135 = arith.constant 0 : index
    %312 = vector.load %arg4[%c25, %c0_134, %c0_135] : memref<90x4x1xf32, #tpu.memory_space<vmem>>, vector<1x4x1xf32>
    %313 = vector.shape_cast %312 : vector<1x4x1xf32> to vector<4x1xf32>
    %314 = vector.shape_cast %313 : vector<4x1xf32> to vector<1x4x1xf32>
    %315 = vector.shape_cast %311 : vector<1x256xf32> to vector<1x1x256xf32>
    %316 = vector.broadcast %314 : vector<1x4x1xf32> to vector<1x4x256xf32>
    %317 = vector.broadcast %315 : vector<1x1x256xf32> to vector<1x4x256xf32>
    %318 = arith.mulf %316, %317 : vector<1x4x256xf32>
    %319 = arith.addf %308, %318 : vector<1x4x256xf32>
    %c239_i32_136 = arith.constant 239 : i32
    %320 = tpu.dynamic_rotate %234 by %c239_i32_136 dim 1 : vector<1x256xf32>, i32 -> vector<1x256xf32>
    %cst_137 = arith.constant 0.000000e+00 : f32
    %321 = vector.broadcast %cst_137 : f32 to vector<1x256xf32>
    %322 = arith.select %31, %320, %321 : vector<1x256xi1>, vector<1x256xf32>
    %c26 = arith.constant 26 : index
    %c0_138 = arith.constant 0 : index
    %c0_139 = arith.constant 0 : index
    %323 = vector.load %arg4[%c26, %c0_138, %c0_139] : memref<90x4x1xf32, #tpu.memory_space<vmem>>, vector<1x4x1xf32>
    %324 = vector.shape_cast %323 : vector<1x4x1xf32> to vector<4x1xf32>
    %325 = vector.shape_cast %324 : vector<4x1xf32> to vector<1x4x1xf32>
    %326 = vector.shape_cast %322 : vector<1x256xf32> to vector<1x1x256xf32>
    %327 = vector.broadcast %325 : vector<1x4x1xf32> to vector<1x4x256xf32>
    %328 = vector.broadcast %326 : vector<1x1x256xf32> to vector<1x4x256xf32>
    %329 = arith.mulf %327, %328 : vector<1x4x256xf32>
    %330 = arith.addf %319, %329 : vector<1x4x256xf32>
    %c3_140 = arith.constant 3 : index
    %c0_141 = arith.constant 0 : index
    %c0_142 = arith.constant 0 : index
    %c0_143 = arith.constant 0 : index
    %331 = vector.load %arg1[%c3_140, %c0_141, %c0_142, %c0_143] : memref<4x1x1x256xf32, #tpu.memory_space<vmem>>, vector<1x1x1x256xf32>
    %332 = vector.shape_cast %331 : vector<1x1x1x256xf32> to vector<1x256xf32>
    %c17_i32_144 = arith.constant 17 : i32
    %333 = tpu.dynamic_rotate %332 by %c17_i32_144 dim 1 : vector<1x256xf32>, i32 -> vector<1x256xf32>
    %cst_145 = arith.constant 0.000000e+00 : f32
    %334 = vector.broadcast %cst_145 : f32 to vector<1x256xf32>
    %335 = arith.select %3, %333, %334 : vector<1x256xi1>, vector<1x256xf32>
    %c27 = arith.constant 27 : index
    %c0_146 = arith.constant 0 : index
    %c0_147 = arith.constant 0 : index
    %336 = vector.load %arg4[%c27, %c0_146, %c0_147] : memref<90x4x1xf32, #tpu.memory_space<vmem>>, vector<1x4x1xf32>
    %337 = vector.shape_cast %336 : vector<1x4x1xf32> to vector<4x1xf32>
    %338 = vector.shape_cast %337 : vector<4x1xf32> to vector<1x4x1xf32>
    %339 = vector.shape_cast %335 : vector<1x256xf32> to vector<1x1x256xf32>
    %340 = vector.broadcast %338 : vector<1x4x1xf32> to vector<1x4x256xf32>
    %341 = vector.broadcast %339 : vector<1x1x256xf32> to vector<1x4x256xf32>
    %342 = arith.mulf %340, %341 : vector<1x4x256xf32>
    %343 = arith.addf %330, %342 : vector<1x4x256xf32>
    %c16_i32_148 = arith.constant 16 : i32
    %344 = tpu.dynamic_rotate %332 by %c16_i32_148 dim 1 : vector<1x256xf32>, i32 -> vector<1x256xf32>
    %cst_149 = arith.constant 0.000000e+00 : f32
    %345 = vector.broadcast %cst_149 : f32 to vector<1x256xf32>
    %346 = arith.select %7, %344, %345 : vector<1x256xi1>, vector<1x256xf32>
    %c28 = arith.constant 28 : index
    %c0_150 = arith.constant 0 : index
    %c0_151 = arith.constant 0 : index
    %347 = vector.load %arg4[%c28, %c0_150, %c0_151] : memref<90x4x1xf32, #tpu.memory_space<vmem>>, vector<1x4x1xf32>
    %348 = vector.shape_cast %347 : vector<1x4x1xf32> to vector<4x1xf32>
    %349 = vector.shape_cast %348 : vector<4x1xf32> to vector<1x4x1xf32>
    %350 = vector.shape_cast %346 : vector<1x256xf32> to vector<1x1x256xf32>
    %351 = vector.broadcast %349 : vector<1x4x1xf32> to vector<1x4x256xf32>
    %352 = vector.broadcast %350 : vector<1x1x256xf32> to vector<1x4x256xf32>
    %353 = arith.mulf %351, %352 : vector<1x4x256xf32>
    %354 = arith.addf %343, %353 : vector<1x4x256xf32>
    %c15_i32_152 = arith.constant 15 : i32
    %355 = tpu.dynamic_rotate %332 by %c15_i32_152 dim 1 : vector<1x256xf32>, i32 -> vector<1x256xf32>
    %cst_153 = arith.constant 0.000000e+00 : f32
    %356 = vector.broadcast %cst_153 : f32 to vector<1x256xf32>
    %357 = arith.select %11, %355, %356 : vector<1x256xi1>, vector<1x256xf32>
    %c29 = arith.constant 29 : index
    %c0_154 = arith.constant 0 : index
    %c0_155 = arith.constant 0 : index
    %358 = vector.load %arg4[%c29, %c0_154, %c0_155] : memref<90x4x1xf32, #tpu.memory_space<vmem>>, vector<1x4x1xf32>
    %359 = vector.shape_cast %358 : vector<1x4x1xf32> to vector<4x1xf32>
    %360 = vector.shape_cast %359 : vector<4x1xf32> to vector<1x4x1xf32>
    %361 = vector.shape_cast %357 : vector<1x256xf32> to vector<1x1x256xf32>
    %362 = vector.broadcast %360 : vector<1x4x1xf32> to vector<1x4x256xf32>
    %363 = vector.broadcast %361 : vector<1x1x256xf32> to vector<1x4x256xf32>
    %364 = arith.mulf %362, %363 : vector<1x4x256xf32>
    %365 = arith.addf %354, %364 : vector<1x4x256xf32>
    %c1_i32_156 = arith.constant 1 : i32
    %366 = tpu.dynamic_rotate %332 by %c1_i32_156 dim 1 : vector<1x256xf32>, i32 -> vector<1x256xf32>
    %cst_157 = arith.constant 0.000000e+00 : f32
    %367 = vector.broadcast %cst_157 : f32 to vector<1x256xf32>
    %368 = arith.select %15, %366, %367 : vector<1x256xi1>, vector<1x256xf32>
    %c30 = arith.constant 30 : index
    %c0_158 = arith.constant 0 : index
    %c0_159 = arith.constant 0 : index
    %369 = vector.load %arg4[%c30, %c0_158, %c0_159] : memref<90x4x1xf32, #tpu.memory_space<vmem>>, vector<1x4x1xf32>
    %370 = vector.shape_cast %369 : vector<1x4x1xf32> to vector<4x1xf32>
    %371 = vector.shape_cast %370 : vector<4x1xf32> to vector<1x4x1xf32>
    %372 = vector.shape_cast %368 : vector<1x256xf32> to vector<1x1x256xf32>
    %373 = vector.broadcast %371 : vector<1x4x1xf32> to vector<1x4x256xf32>
    %374 = vector.broadcast %372 : vector<1x1x256xf32> to vector<1x4x256xf32>
    %375 = arith.mulf %373, %374 : vector<1x4x256xf32>
    %376 = arith.addf %365, %375 : vector<1x4x256xf32>
    %c31 = arith.constant 31 : index
    %c0_160 = arith.constant 0 : index
    %c0_161 = arith.constant 0 : index
    %377 = vector.load %arg4[%c31, %c0_160, %c0_161] : memref<90x4x1xf32, #tpu.memory_space<vmem>>, vector<1x4x1xf32>
    %378 = vector.shape_cast %377 : vector<1x4x1xf32> to vector<4x1xf32>
    %379 = vector.shape_cast %378 : vector<4x1xf32> to vector<1x4x1xf32>
    %380 = vector.shape_cast %332 : vector<1x256xf32> to vector<1x1x256xf32>
    %381 = vector.broadcast %379 : vector<1x4x1xf32> to vector<1x4x256xf32>
    %382 = vector.broadcast %380 : vector<1x1x256xf32> to vector<1x4x256xf32>
    %383 = arith.mulf %381, %382 : vector<1x4x256xf32>
    %384 = arith.addf %376, %383 : vector<1x4x256xf32>
    %c255_i32_162 = arith.constant 255 : i32
    %385 = tpu.dynamic_rotate %332 by %c255_i32_162 dim 1 : vector<1x256xf32>, i32 -> vector<1x256xf32>
    %cst_163 = arith.constant 0.000000e+00 : f32
    %386 = vector.broadcast %cst_163 : f32 to vector<1x256xf32>
    %387 = arith.select %19, %385, %386 : vector<1x256xi1>, vector<1x256xf32>
    %c32 = arith.constant 32 : index
    %c0_164 = arith.constant 0 : index
    %c0_165 = arith.constant 0 : index
    %388 = vector.load %arg4[%c32, %c0_164, %c0_165] : memref<90x4x1xf32, #tpu.memory_space<vmem>>, vector<1x4x1xf32>
    %389 = vector.shape_cast %388 : vector<1x4x1xf32> to vector<4x1xf32>
    %390 = vector.shape_cast %389 : vector<4x1xf32> to vector<1x4x1xf32>
    %391 = vector.shape_cast %387 : vector<1x256xf32> to vector<1x1x256xf32>
    %392 = vector.broadcast %390 : vector<1x4x1xf32> to vector<1x4x256xf32>
    %393 = vector.broadcast %391 : vector<1x1x256xf32> to vector<1x4x256xf32>
    %394 = arith.mulf %392, %393 : vector<1x4x256xf32>
    %395 = arith.addf %384, %394 : vector<1x4x256xf32>
    %c241_i32_166 = arith.constant 241 : i32
    %396 = tpu.dynamic_rotate %332 by %c241_i32_166 dim 1 : vector<1x256xf32>, i32 -> vector<1x256xf32>
    %cst_167 = arith.constant 0.000000e+00 : f32
    %397 = vector.broadcast %cst_167 : f32 to vector<1x256xf32>
    %398 = arith.select %23, %396, %397 : vector<1x256xi1>, vector<1x256xf32>
    %c33 = arith.constant 33 : index
    %c0_168 = arith.constant 0 : index
    %c0_169 = arith.constant 0 : index
    %399 = vector.load %arg4[%c33, %c0_168, %c0_169] : memref<90x4x1xf32, #tpu.memory_space<vmem>>, vector<1x4x1xf32>
    %400 = vector.shape_cast %399 : vector<1x4x1xf32> to vector<4x1xf32>
    %401 = vector.shape_cast %400 : vector<4x1xf32> to vector<1x4x1xf32>
    %402 = vector.shape_cast %398 : vector<1x256xf32> to vector<1x1x256xf32>
    %403 = vector.broadcast %401 : vector<1x4x1xf32> to vector<1x4x256xf32>
    %404 = vector.broadcast %402 : vector<1x1x256xf32> to vector<1x4x256xf32>
    %405 = arith.mulf %403, %404 : vector<1x4x256xf32>
    %406 = arith.addf %395, %405 : vector<1x4x256xf32>
    %c240_i32_170 = arith.constant 240 : i32
    %407 = tpu.dynamic_rotate %332 by %c240_i32_170 dim 1 : vector<1x256xf32>, i32 -> vector<1x256xf32>
    %cst_171 = arith.constant 0.000000e+00 : f32
    %408 = vector.broadcast %cst_171 : f32 to vector<1x256xf32>
    %409 = arith.select %27, %407, %408 : vector<1x256xi1>, vector<1x256xf32>
    %c34 = arith.constant 34 : index
    %c0_172 = arith.constant 0 : index
    %c0_173 = arith.constant 0 : index
    %410 = vector.load %arg4[%c34, %c0_172, %c0_173] : memref<90x4x1xf32, #tpu.memory_space<vmem>>, vector<1x4x1xf32>
    %411 = vector.shape_cast %410 : vector<1x4x1xf32> to vector<4x1xf32>
    %412 = vector.shape_cast %411 : vector<4x1xf32> to vector<1x4x1xf32>
    %413 = vector.shape_cast %409 : vector<1x256xf32> to vector<1x1x256xf32>
    %414 = vector.broadcast %412 : vector<1x4x1xf32> to vector<1x4x256xf32>
    %415 = vector.broadcast %413 : vector<1x1x256xf32> to vector<1x4x256xf32>
    %416 = arith.mulf %414, %415 : vector<1x4x256xf32>
    %417 = arith.addf %406, %416 : vector<1x4x256xf32>
    %c239_i32_174 = arith.constant 239 : i32
    %418 = tpu.dynamic_rotate %332 by %c239_i32_174 dim 1 : vector<1x256xf32>, i32 -> vector<1x256xf32>
    %cst_175 = arith.constant 0.000000e+00 : f32
    %419 = vector.broadcast %cst_175 : f32 to vector<1x256xf32>
    %420 = arith.select %31, %418, %419 : vector<1x256xi1>, vector<1x256xf32>
    %c35 = arith.constant 35 : index
    %c0_176 = arith.constant 0 : index
    %c0_177 = arith.constant 0 : index
    %421 = vector.load %arg4[%c35, %c0_176, %c0_177] : memref<90x4x1xf32, #tpu.memory_space<vmem>>, vector<1x4x1xf32>
    %422 = vector.shape_cast %421 : vector<1x4x1xf32> to vector<4x1xf32>
    %423 = vector.shape_cast %422 : vector<4x1xf32> to vector<1x4x1xf32>
    %424 = vector.shape_cast %420 : vector<1x256xf32> to vector<1x1x256xf32>
    %425 = vector.broadcast %423 : vector<1x4x1xf32> to vector<1x4x256xf32>
    %426 = vector.broadcast %424 : vector<1x1x256xf32> to vector<1x4x256xf32>
    %427 = arith.mulf %425, %426 : vector<1x4x256xf32>
    %428 = arith.addf %417, %427 : vector<1x4x256xf32>
    %c0_178 = arith.constant 0 : index
    %c0_179 = arith.constant 0 : index
    %c0_180 = arith.constant 0 : index
    %c0_181 = arith.constant 0 : index
    %429 = vector.load %arg2[%c0_178, %c0_179, %c0_180, %c0_181] : memref<6x1x1x256xf32, #tpu.memory_space<vmem>>, vector<1x1x1x256xf32>
    %430 = vector.shape_cast %429 : vector<1x1x1x256xf32> to vector<1x256xf32>
    %c17_i32_182 = arith.constant 17 : i32
    %431 = tpu.dynamic_rotate %430 by %c17_i32_182 dim 1 : vector<1x256xf32>, i32 -> vector<1x256xf32>
    %cst_183 = arith.constant 0.000000e+00 : f32
    %432 = vector.broadcast %cst_183 : f32 to vector<1x256xf32>
    %433 = arith.select %3, %431, %432 : vector<1x256xi1>, vector<1x256xf32>
    %c36 = arith.constant 36 : index
    %c0_184 = arith.constant 0 : index
    %c0_185 = arith.constant 0 : index
    %434 = vector.load %arg4[%c36, %c0_184, %c0_185] : memref<90x4x1xf32, #tpu.memory_space<vmem>>, vector<1x4x1xf32>
    %435 = vector.shape_cast %434 : vector<1x4x1xf32> to vector<4x1xf32>
    %436 = vector.shape_cast %435 : vector<4x1xf32> to vector<1x4x1xf32>
    %437 = vector.shape_cast %433 : vector<1x256xf32> to vector<1x1x256xf32>
    %438 = vector.broadcast %436 : vector<1x4x1xf32> to vector<1x4x256xf32>
    %439 = vector.broadcast %437 : vector<1x1x256xf32> to vector<1x4x256xf32>
    %440 = arith.mulf %438, %439 : vector<1x4x256xf32>
    %441 = arith.addf %428, %440 : vector<1x4x256xf32>
    %c16_i32_186 = arith.constant 16 : i32
    %442 = tpu.dynamic_rotate %430 by %c16_i32_186 dim 1 : vector<1x256xf32>, i32 -> vector<1x256xf32>
    %cst_187 = arith.constant 0.000000e+00 : f32
    %443 = vector.broadcast %cst_187 : f32 to vector<1x256xf32>
    %444 = arith.select %7, %442, %443 : vector<1x256xi1>, vector<1x256xf32>
    %c37 = arith.constant 37 : index
    %c0_188 = arith.constant 0 : index
    %c0_189 = arith.constant 0 : index
    %445 = vector.load %arg4[%c37, %c0_188, %c0_189] : memref<90x4x1xf32, #tpu.memory_space<vmem>>, vector<1x4x1xf32>
    %446 = vector.shape_cast %445 : vector<1x4x1xf32> to vector<4x1xf32>
    %447 = vector.shape_cast %446 : vector<4x1xf32> to vector<1x4x1xf32>
    %448 = vector.shape_cast %444 : vector<1x256xf32> to vector<1x1x256xf32>
    %449 = vector.broadcast %447 : vector<1x4x1xf32> to vector<1x4x256xf32>
    %450 = vector.broadcast %448 : vector<1x1x256xf32> to vector<1x4x256xf32>
    %451 = arith.mulf %449, %450 : vector<1x4x256xf32>
    %452 = arith.addf %441, %451 : vector<1x4x256xf32>
    %c15_i32_190 = arith.constant 15 : i32
    %453 = tpu.dynamic_rotate %430 by %c15_i32_190 dim 1 : vector<1x256xf32>, i32 -> vector<1x256xf32>
    %cst_191 = arith.constant 0.000000e+00 : f32
    %454 = vector.broadcast %cst_191 : f32 to vector<1x256xf32>
    %455 = arith.select %11, %453, %454 : vector<1x256xi1>, vector<1x256xf32>
    %c38 = arith.constant 38 : index
    %c0_192 = arith.constant 0 : index
    %c0_193 = arith.constant 0 : index
    %456 = vector.load %arg4[%c38, %c0_192, %c0_193] : memref<90x4x1xf32, #tpu.memory_space<vmem>>, vector<1x4x1xf32>
    %457 = vector.shape_cast %456 : vector<1x4x1xf32> to vector<4x1xf32>
    %458 = vector.shape_cast %457 : vector<4x1xf32> to vector<1x4x1xf32>
    %459 = vector.shape_cast %455 : vector<1x256xf32> to vector<1x1x256xf32>
    %460 = vector.broadcast %458 : vector<1x4x1xf32> to vector<1x4x256xf32>
    %461 = vector.broadcast %459 : vector<1x1x256xf32> to vector<1x4x256xf32>
    %462 = arith.mulf %460, %461 : vector<1x4x256xf32>
    %463 = arith.addf %452, %462 : vector<1x4x256xf32>
    %c1_i32_194 = arith.constant 1 : i32
    %464 = tpu.dynamic_rotate %430 by %c1_i32_194 dim 1 : vector<1x256xf32>, i32 -> vector<1x256xf32>
    %cst_195 = arith.constant 0.000000e+00 : f32
    %465 = vector.broadcast %cst_195 : f32 to vector<1x256xf32>
    %466 = arith.select %15, %464, %465 : vector<1x256xi1>, vector<1x256xf32>
    %c39 = arith.constant 39 : index
    %c0_196 = arith.constant 0 : index
    %c0_197 = arith.constant 0 : index
    %467 = vector.load %arg4[%c39, %c0_196, %c0_197] : memref<90x4x1xf32, #tpu.memory_space<vmem>>, vector<1x4x1xf32>
    %468 = vector.shape_cast %467 : vector<1x4x1xf32> to vector<4x1xf32>
    %469 = vector.shape_cast %468 : vector<4x1xf32> to vector<1x4x1xf32>
    %470 = vector.shape_cast %466 : vector<1x256xf32> to vector<1x1x256xf32>
    %471 = vector.broadcast %469 : vector<1x4x1xf32> to vector<1x4x256xf32>
    %472 = vector.broadcast %470 : vector<1x1x256xf32> to vector<1x4x256xf32>
    %473 = arith.mulf %471, %472 : vector<1x4x256xf32>
    %474 = arith.addf %463, %473 : vector<1x4x256xf32>
    %c40 = arith.constant 40 : index
    %c0_198 = arith.constant 0 : index
    %c0_199 = arith.constant 0 : index
    %475 = vector.load %arg4[%c40, %c0_198, %c0_199] : memref<90x4x1xf32, #tpu.memory_space<vmem>>, vector<1x4x1xf32>
    %476 = vector.shape_cast %475 : vector<1x4x1xf32> to vector<4x1xf32>
    %477 = vector.shape_cast %476 : vector<4x1xf32> to vector<1x4x1xf32>
    %478 = vector.shape_cast %430 : vector<1x256xf32> to vector<1x1x256xf32>
    %479 = vector.broadcast %477 : vector<1x4x1xf32> to vector<1x4x256xf32>
    %480 = vector.broadcast %478 : vector<1x1x256xf32> to vector<1x4x256xf32>
    %481 = arith.mulf %479, %480 : vector<1x4x256xf32>
    %482 = arith.addf %474, %481 : vector<1x4x256xf32>
    %c255_i32_200 = arith.constant 255 : i32
    %483 = tpu.dynamic_rotate %430 by %c255_i32_200 dim 1 : vector<1x256xf32>, i32 -> vector<1x256xf32>
    %cst_201 = arith.constant 0.000000e+00 : f32
    %484 = vector.broadcast %cst_201 : f32 to vector<1x256xf32>
    %485 = arith.select %19, %483, %484 : vector<1x256xi1>, vector<1x256xf32>
    %c41 = arith.constant 41 : index
    %c0_202 = arith.constant 0 : index
    %c0_203 = arith.constant 0 : index
    %486 = vector.load %arg4[%c41, %c0_202, %c0_203] : memref<90x4x1xf32, #tpu.memory_space<vmem>>, vector<1x4x1xf32>
    %487 = vector.shape_cast %486 : vector<1x4x1xf32> to vector<4x1xf32>
    %488 = vector.shape_cast %487 : vector<4x1xf32> to vector<1x4x1xf32>
    %489 = vector.shape_cast %485 : vector<1x256xf32> to vector<1x1x256xf32>
    %490 = vector.broadcast %488 : vector<1x4x1xf32> to vector<1x4x256xf32>
    %491 = vector.broadcast %489 : vector<1x1x256xf32> to vector<1x4x256xf32>
    %492 = arith.mulf %490, %491 : vector<1x4x256xf32>
    %493 = arith.addf %482, %492 : vector<1x4x256xf32>
    %c241_i32_204 = arith.constant 241 : i32
    %494 = tpu.dynamic_rotate %430 by %c241_i32_204 dim 1 : vector<1x256xf32>, i32 -> vector<1x256xf32>
    %cst_205 = arith.constant 0.000000e+00 : f32
    %495 = vector.broadcast %cst_205 : f32 to vector<1x256xf32>
    %496 = arith.select %23, %494, %495 : vector<1x256xi1>, vector<1x256xf32>
    %c42 = arith.constant 42 : index
    %c0_206 = arith.constant 0 : index
    %c0_207 = arith.constant 0 : index
    %497 = vector.load %arg4[%c42, %c0_206, %c0_207] : memref<90x4x1xf32, #tpu.memory_space<vmem>>, vector<1x4x1xf32>
    %498 = vector.shape_cast %497 : vector<1x4x1xf32> to vector<4x1xf32>
    %499 = vector.shape_cast %498 : vector<4x1xf32> to vector<1x4x1xf32>
    %500 = vector.shape_cast %496 : vector<1x256xf32> to vector<1x1x256xf32>
    %501 = vector.broadcast %499 : vector<1x4x1xf32> to vector<1x4x256xf32>
    %502 = vector.broadcast %500 : vector<1x1x256xf32> to vector<1x4x256xf32>
    %503 = arith.mulf %501, %502 : vector<1x4x256xf32>
    %504 = arith.addf %493, %503 : vector<1x4x256xf32>
    %c240_i32_208 = arith.constant 240 : i32
    %505 = tpu.dynamic_rotate %430 by %c240_i32_208 dim 1 : vector<1x256xf32>, i32 -> vector<1x256xf32>
    %cst_209 = arith.constant 0.000000e+00 : f32
    %506 = vector.broadcast %cst_209 : f32 to vector<1x256xf32>
    %507 = arith.select %27, %505, %506 : vector<1x256xi1>, vector<1x256xf32>
    %c43 = arith.constant 43 : index
    %c0_210 = arith.constant 0 : index
    %c0_211 = arith.constant 0 : index
    %508 = vector.load %arg4[%c43, %c0_210, %c0_211] : memref<90x4x1xf32, #tpu.memory_space<vmem>>, vector<1x4x1xf32>
    %509 = vector.shape_cast %508 : vector<1x4x1xf32> to vector<4x1xf32>
    %510 = vector.shape_cast %509 : vector<4x1xf32> to vector<1x4x1xf32>
    %511 = vector.shape_cast %507 : vector<1x256xf32> to vector<1x1x256xf32>
    %512 = vector.broadcast %510 : vector<1x4x1xf32> to vector<1x4x256xf32>
    %513 = vector.broadcast %511 : vector<1x1x256xf32> to vector<1x4x256xf32>
    %514 = arith.mulf %512, %513 : vector<1x4x256xf32>
    %515 = arith.addf %504, %514 : vector<1x4x256xf32>
    %c239_i32_212 = arith.constant 239 : i32
    %516 = tpu.dynamic_rotate %430 by %c239_i32_212 dim 1 : vector<1x256xf32>, i32 -> vector<1x256xf32>
    %cst_213 = arith.constant 0.000000e+00 : f32
    %517 = vector.broadcast %cst_213 : f32 to vector<1x256xf32>
    %518 = arith.select %31, %516, %517 : vector<1x256xi1>, vector<1x256xf32>
    %c44 = arith.constant 44 : index
    %c0_214 = arith.constant 0 : index
    %c0_215 = arith.constant 0 : index
    %519 = vector.load %arg4[%c44, %c0_214, %c0_215] : memref<90x4x1xf32, #tpu.memory_space<vmem>>, vector<1x4x1xf32>
    %520 = vector.shape_cast %519 : vector<1x4x1xf32> to vector<4x1xf32>
    %521 = vector.shape_cast %520 : vector<4x1xf32> to vector<1x4x1xf32>
    %522 = vector.shape_cast %518 : vector<1x256xf32> to vector<1x1x256xf32>
    %523 = vector.broadcast %521 : vector<1x4x1xf32> to vector<1x4x256xf32>
    %524 = vector.broadcast %522 : vector<1x1x256xf32> to vector<1x4x256xf32>
    %525 = arith.mulf %523, %524 : vector<1x4x256xf32>
    %526 = arith.addf %515, %525 : vector<1x4x256xf32>
    %c1_216 = arith.constant 1 : index
    %c0_217 = arith.constant 0 : index
    %c0_218 = arith.constant 0 : index
    %c0_219 = arith.constant 0 : index
    %527 = vector.load %arg2[%c1_216, %c0_217, %c0_218, %c0_219] : memref<6x1x1x256xf32, #tpu.memory_space<vmem>>, vector<1x1x1x256xf32>
    %528 = vector.shape_cast %527 : vector<1x1x1x256xf32> to vector<1x256xf32>
    %c17_i32_220 = arith.constant 17 : i32
    %529 = tpu.dynamic_rotate %528 by %c17_i32_220 dim 1 : vector<1x256xf32>, i32 -> vector<1x256xf32>
    %cst_221 = arith.constant 0.000000e+00 : f32
    %530 = vector.broadcast %cst_221 : f32 to vector<1x256xf32>
    %531 = arith.select %3, %529, %530 : vector<1x256xi1>, vector<1x256xf32>
    %c45 = arith.constant 45 : index
    %c0_222 = arith.constant 0 : index
    %c0_223 = arith.constant 0 : index
    %532 = vector.load %arg4[%c45, %c0_222, %c0_223] : memref<90x4x1xf32, #tpu.memory_space<vmem>>, vector<1x4x1xf32>
    %533 = vector.shape_cast %532 : vector<1x4x1xf32> to vector<4x1xf32>
    %534 = vector.shape_cast %533 : vector<4x1xf32> to vector<1x4x1xf32>
    %535 = vector.shape_cast %531 : vector<1x256xf32> to vector<1x1x256xf32>
    %536 = vector.broadcast %534 : vector<1x4x1xf32> to vector<1x4x256xf32>
    %537 = vector.broadcast %535 : vector<1x1x256xf32> to vector<1x4x256xf32>
    %538 = arith.mulf %536, %537 : vector<1x4x256xf32>
    %539 = arith.addf %526, %538 : vector<1x4x256xf32>
    %c16_i32_224 = arith.constant 16 : i32
    %540 = tpu.dynamic_rotate %528 by %c16_i32_224 dim 1 : vector<1x256xf32>, i32 -> vector<1x256xf32>
    %cst_225 = arith.constant 0.000000e+00 : f32
    %541 = vector.broadcast %cst_225 : f32 to vector<1x256xf32>
    %542 = arith.select %7, %540, %541 : vector<1x256xi1>, vector<1x256xf32>
    %c46 = arith.constant 46 : index
    %c0_226 = arith.constant 0 : index
    %c0_227 = arith.constant 0 : index
    %543 = vector.load %arg4[%c46, %c0_226, %c0_227] : memref<90x4x1xf32, #tpu.memory_space<vmem>>, vector<1x4x1xf32>
    %544 = vector.shape_cast %543 : vector<1x4x1xf32> to vector<4x1xf32>
    %545 = vector.shape_cast %544 : vector<4x1xf32> to vector<1x4x1xf32>
    %546 = vector.shape_cast %542 : vector<1x256xf32> to vector<1x1x256xf32>
    %547 = vector.broadcast %545 : vector<1x4x1xf32> to vector<1x4x256xf32>
    %548 = vector.broadcast %546 : vector<1x1x256xf32> to vector<1x4x256xf32>
    %549 = arith.mulf %547, %548 : vector<1x4x256xf32>
    %550 = arith.addf %539, %549 : vector<1x4x256xf32>
    %c15_i32_228 = arith.constant 15 : i32
    %551 = tpu.dynamic_rotate %528 by %c15_i32_228 dim 1 : vector<1x256xf32>, i32 -> vector<1x256xf32>
    %cst_229 = arith.constant 0.000000e+00 : f32
    %552 = vector.broadcast %cst_229 : f32 to vector<1x256xf32>
    %553 = arith.select %11, %551, %552 : vector<1x256xi1>, vector<1x256xf32>
    %c47 = arith.constant 47 : index
    %c0_230 = arith.constant 0 : index
    %c0_231 = arith.constant 0 : index
    %554 = vector.load %arg4[%c47, %c0_230, %c0_231] : memref<90x4x1xf32, #tpu.memory_space<vmem>>, vector<1x4x1xf32>
    %555 = vector.shape_cast %554 : vector<1x4x1xf32> to vector<4x1xf32>
    %556 = vector.shape_cast %555 : vector<4x1xf32> to vector<1x4x1xf32>
    %557 = vector.shape_cast %553 : vector<1x256xf32> to vector<1x1x256xf32>
    %558 = vector.broadcast %556 : vector<1x4x1xf32> to vector<1x4x256xf32>
    %559 = vector.broadcast %557 : vector<1x1x256xf32> to vector<1x4x256xf32>
    %560 = arith.mulf %558, %559 : vector<1x4x256xf32>
    %561 = arith.addf %550, %560 : vector<1x4x256xf32>
    %c1_i32_232 = arith.constant 1 : i32
    %562 = tpu.dynamic_rotate %528 by %c1_i32_232 dim 1 : vector<1x256xf32>, i32 -> vector<1x256xf32>
    %cst_233 = arith.constant 0.000000e+00 : f32
    %563 = vector.broadcast %cst_233 : f32 to vector<1x256xf32>
    %564 = arith.select %15, %562, %563 : vector<1x256xi1>, vector<1x256xf32>
    %c48 = arith.constant 48 : index
    %c0_234 = arith.constant 0 : index
    %c0_235 = arith.constant 0 : index
    %565 = vector.load %arg4[%c48, %c0_234, %c0_235] : memref<90x4x1xf32, #tpu.memory_space<vmem>>, vector<1x4x1xf32>
    %566 = vector.shape_cast %565 : vector<1x4x1xf32> to vector<4x1xf32>
    %567 = vector.shape_cast %566 : vector<4x1xf32> to vector<1x4x1xf32>
    %568 = vector.shape_cast %564 : vector<1x256xf32> to vector<1x1x256xf32>
    %569 = vector.broadcast %567 : vector<1x4x1xf32> to vector<1x4x256xf32>
    %570 = vector.broadcast %568 : vector<1x1x256xf32> to vector<1x4x256xf32>
    %571 = arith.mulf %569, %570 : vector<1x4x256xf32>
    %572 = arith.addf %561, %571 : vector<1x4x256xf32>
    %c49 = arith.constant 49 : index
    %c0_236 = arith.constant 0 : index
    %c0_237 = arith.constant 0 : index
    %573 = vector.load %arg4[%c49, %c0_236, %c0_237] : memref<90x4x1xf32, #tpu.memory_space<vmem>>, vector<1x4x1xf32>
    %574 = vector.shape_cast %573 : vector<1x4x1xf32> to vector<4x1xf32>
    %575 = vector.shape_cast %574 : vector<4x1xf32> to vector<1x4x1xf32>
    %576 = vector.shape_cast %528 : vector<1x256xf32> to vector<1x1x256xf32>
    %577 = vector.broadcast %575 : vector<1x4x1xf32> to vector<1x4x256xf32>
    %578 = vector.broadcast %576 : vector<1x1x256xf32> to vector<1x4x256xf32>
    %579 = arith.mulf %577, %578 : vector<1x4x256xf32>
    %580 = arith.addf %572, %579 : vector<1x4x256xf32>
    %c255_i32_238 = arith.constant 255 : i32
    %581 = tpu.dynamic_rotate %528 by %c255_i32_238 dim 1 : vector<1x256xf32>, i32 -> vector<1x256xf32>
    %cst_239 = arith.constant 0.000000e+00 : f32
    %582 = vector.broadcast %cst_239 : f32 to vector<1x256xf32>
    %583 = arith.select %19, %581, %582 : vector<1x256xi1>, vector<1x256xf32>
    %c50 = arith.constant 50 : index
    %c0_240 = arith.constant 0 : index
    %c0_241 = arith.constant 0 : index
    %584 = vector.load %arg4[%c50, %c0_240, %c0_241] : memref<90x4x1xf32, #tpu.memory_space<vmem>>, vector<1x4x1xf32>
    %585 = vector.shape_cast %584 : vector<1x4x1xf32> to vector<4x1xf32>
    %586 = vector.shape_cast %585 : vector<4x1xf32> to vector<1x4x1xf32>
    %587 = vector.shape_cast %583 : vector<1x256xf32> to vector<1x1x256xf32>
    %588 = vector.broadcast %586 : vector<1x4x1xf32> to vector<1x4x256xf32>
    %589 = vector.broadcast %587 : vector<1x1x256xf32> to vector<1x4x256xf32>
    %590 = arith.mulf %588, %589 : vector<1x4x256xf32>
    %591 = arith.addf %580, %590 : vector<1x4x256xf32>
    %c241_i32_242 = arith.constant 241 : i32
    %592 = tpu.dynamic_rotate %528 by %c241_i32_242 dim 1 : vector<1x256xf32>, i32 -> vector<1x256xf32>
    %cst_243 = arith.constant 0.000000e+00 : f32
    %593 = vector.broadcast %cst_243 : f32 to vector<1x256xf32>
    %594 = arith.select %23, %592, %593 : vector<1x256xi1>, vector<1x256xf32>
    %c51 = arith.constant 51 : index
    %c0_244 = arith.constant 0 : index
    %c0_245 = arith.constant 0 : index
    %595 = vector.load %arg4[%c51, %c0_244, %c0_245] : memref<90x4x1xf32, #tpu.memory_space<vmem>>, vector<1x4x1xf32>
    %596 = vector.shape_cast %595 : vector<1x4x1xf32> to vector<4x1xf32>
    %597 = vector.shape_cast %596 : vector<4x1xf32> to vector<1x4x1xf32>
    %598 = vector.shape_cast %594 : vector<1x256xf32> to vector<1x1x256xf32>
    %599 = vector.broadcast %597 : vector<1x4x1xf32> to vector<1x4x256xf32>
    %600 = vector.broadcast %598 : vector<1x1x256xf32> to vector<1x4x256xf32>
    %601 = arith.mulf %599, %600 : vector<1x4x256xf32>
    %602 = arith.addf %591, %601 : vector<1x4x256xf32>
    %c240_i32_246 = arith.constant 240 : i32
    %603 = tpu.dynamic_rotate %528 by %c240_i32_246 dim 1 : vector<1x256xf32>, i32 -> vector<1x256xf32>
    %cst_247 = arith.constant 0.000000e+00 : f32
    %604 = vector.broadcast %cst_247 : f32 to vector<1x256xf32>
    %605 = arith.select %27, %603, %604 : vector<1x256xi1>, vector<1x256xf32>
    %c52 = arith.constant 52 : index
    %c0_248 = arith.constant 0 : index
    %c0_249 = arith.constant 0 : index
    %606 = vector.load %arg4[%c52, %c0_248, %c0_249] : memref<90x4x1xf32, #tpu.memory_space<vmem>>, vector<1x4x1xf32>
    %607 = vector.shape_cast %606 : vector<1x4x1xf32> to vector<4x1xf32>
    %608 = vector.shape_cast %607 : vector<4x1xf32> to vector<1x4x1xf32>
    %609 = vector.shape_cast %605 : vector<1x256xf32> to vector<1x1x256xf32>
    %610 = vector.broadcast %608 : vector<1x4x1xf32> to vector<1x4x256xf32>
    %611 = vector.broadcast %609 : vector<1x1x256xf32> to vector<1x4x256xf32>
    %612 = arith.mulf %610, %611 : vector<1x4x256xf32>
    %613 = arith.addf %602, %612 : vector<1x4x256xf32>
    %c239_i32_250 = arith.constant 239 : i32
    %614 = tpu.dynamic_rotate %528 by %c239_i32_250 dim 1 : vector<1x256xf32>, i32 -> vector<1x256xf32>
    %cst_251 = arith.constant 0.000000e+00 : f32
    %615 = vector.broadcast %cst_251 : f32 to vector<1x256xf32>
    %616 = arith.select %31, %614, %615 : vector<1x256xi1>, vector<1x256xf32>
    %c53 = arith.constant 53 : index
    %c0_252 = arith.constant 0 : index
    %c0_253 = arith.constant 0 : index
    %617 = vector.load %arg4[%c53, %c0_252, %c0_253] : memref<90x4x1xf32, #tpu.memory_space<vmem>>, vector<1x4x1xf32>
    %618 = vector.shape_cast %617 : vector<1x4x1xf32> to vector<4x1xf32>
    %619 = vector.shape_cast %618 : vector<4x1xf32> to vector<1x4x1xf32>
    %620 = vector.shape_cast %616 : vector<1x256xf32> to vector<1x1x256xf32>
    %621 = vector.broadcast %619 : vector<1x4x1xf32> to vector<1x4x256xf32>
    %622 = vector.broadcast %620 : vector<1x1x256xf32> to vector<1x4x256xf32>
    %623 = arith.mulf %621, %622 : vector<1x4x256xf32>
    %624 = arith.addf %613, %623 : vector<1x4x256xf32>
    %c2_254 = arith.constant 2 : index
    %c0_255 = arith.constant 0 : index
    %c0_256 = arith.constant 0 : index
    %c0_257 = arith.constant 0 : index
    %625 = vector.load %arg2[%c2_254, %c0_255, %c0_256, %c0_257] : memref<6x1x1x256xf32, #tpu.memory_space<vmem>>, vector<1x1x1x256xf32>
    %626 = vector.shape_cast %625 : vector<1x1x1x256xf32> to vector<1x256xf32>
    %c17_i32_258 = arith.constant 17 : i32
    %627 = tpu.dynamic_rotate %626 by %c17_i32_258 dim 1 : vector<1x256xf32>, i32 -> vector<1x256xf32>
    %cst_259 = arith.constant 0.000000e+00 : f32
    %628 = vector.broadcast %cst_259 : f32 to vector<1x256xf32>
    %629 = arith.select %3, %627, %628 : vector<1x256xi1>, vector<1x256xf32>
    %c54 = arith.constant 54 : index
    %c0_260 = arith.constant 0 : index
    %c0_261 = arith.constant 0 : index
    %630 = vector.load %arg4[%c54, %c0_260, %c0_261] : memref<90x4x1xf32, #tpu.memory_space<vmem>>, vector<1x4x1xf32>
    %631 = vector.shape_cast %630 : vector<1x4x1xf32> to vector<4x1xf32>
    %632 = vector.shape_cast %631 : vector<4x1xf32> to vector<1x4x1xf32>
    %633 = vector.shape_cast %629 : vector<1x256xf32> to vector<1x1x256xf32>
    %634 = vector.broadcast %632 : vector<1x4x1xf32> to vector<1x4x256xf32>
    %635 = vector.broadcast %633 : vector<1x1x256xf32> to vector<1x4x256xf32>
    %636 = arith.mulf %634, %635 : vector<1x4x256xf32>
    %637 = arith.addf %624, %636 : vector<1x4x256xf32>
    %c16_i32_262 = arith.constant 16 : i32
    %638 = tpu.dynamic_rotate %626 by %c16_i32_262 dim 1 : vector<1x256xf32>, i32 -> vector<1x256xf32>
    %cst_263 = arith.constant 0.000000e+00 : f32
    %639 = vector.broadcast %cst_263 : f32 to vector<1x256xf32>
    %640 = arith.select %7, %638, %639 : vector<1x256xi1>, vector<1x256xf32>
    %c55 = arith.constant 55 : index
    %c0_264 = arith.constant 0 : index
    %c0_265 = arith.constant 0 : index
    %641 = vector.load %arg4[%c55, %c0_264, %c0_265] : memref<90x4x1xf32, #tpu.memory_space<vmem>>, vector<1x4x1xf32>
    %642 = vector.shape_cast %641 : vector<1x4x1xf32> to vector<4x1xf32>
    %643 = vector.shape_cast %642 : vector<4x1xf32> to vector<1x4x1xf32>
    %644 = vector.shape_cast %640 : vector<1x256xf32> to vector<1x1x256xf32>
    %645 = vector.broadcast %643 : vector<1x4x1xf32> to vector<1x4x256xf32>
    %646 = vector.broadcast %644 : vector<1x1x256xf32> to vector<1x4x256xf32>
    %647 = arith.mulf %645, %646 : vector<1x4x256xf32>
    %648 = arith.addf %637, %647 : vector<1x4x256xf32>
    %c15_i32_266 = arith.constant 15 : i32
    %649 = tpu.dynamic_rotate %626 by %c15_i32_266 dim 1 : vector<1x256xf32>, i32 -> vector<1x256xf32>
    %cst_267 = arith.constant 0.000000e+00 : f32
    %650 = vector.broadcast %cst_267 : f32 to vector<1x256xf32>
    %651 = arith.select %11, %649, %650 : vector<1x256xi1>, vector<1x256xf32>
    %c56 = arith.constant 56 : index
    %c0_268 = arith.constant 0 : index
    %c0_269 = arith.constant 0 : index
    %652 = vector.load %arg4[%c56, %c0_268, %c0_269] : memref<90x4x1xf32, #tpu.memory_space<vmem>>, vector<1x4x1xf32>
    %653 = vector.shape_cast %652 : vector<1x4x1xf32> to vector<4x1xf32>
    %654 = vector.shape_cast %653 : vector<4x1xf32> to vector<1x4x1xf32>
    %655 = vector.shape_cast %651 : vector<1x256xf32> to vector<1x1x256xf32>
    %656 = vector.broadcast %654 : vector<1x4x1xf32> to vector<1x4x256xf32>
    %657 = vector.broadcast %655 : vector<1x1x256xf32> to vector<1x4x256xf32>
    %658 = arith.mulf %656, %657 : vector<1x4x256xf32>
    %659 = arith.addf %648, %658 : vector<1x4x256xf32>
    %c1_i32_270 = arith.constant 1 : i32
    %660 = tpu.dynamic_rotate %626 by %c1_i32_270 dim 1 : vector<1x256xf32>, i32 -> vector<1x256xf32>
    %cst_271 = arith.constant 0.000000e+00 : f32
    %661 = vector.broadcast %cst_271 : f32 to vector<1x256xf32>
    %662 = arith.select %15, %660, %661 : vector<1x256xi1>, vector<1x256xf32>
    %c57 = arith.constant 57 : index
    %c0_272 = arith.constant 0 : index
    %c0_273 = arith.constant 0 : index
    %663 = vector.load %arg4[%c57, %c0_272, %c0_273] : memref<90x4x1xf32, #tpu.memory_space<vmem>>, vector<1x4x1xf32>
    %664 = vector.shape_cast %663 : vector<1x4x1xf32> to vector<4x1xf32>
    %665 = vector.shape_cast %664 : vector<4x1xf32> to vector<1x4x1xf32>
    %666 = vector.shape_cast %662 : vector<1x256xf32> to vector<1x1x256xf32>
    %667 = vector.broadcast %665 : vector<1x4x1xf32> to vector<1x4x256xf32>
    %668 = vector.broadcast %666 : vector<1x1x256xf32> to vector<1x4x256xf32>
    %669 = arith.mulf %667, %668 : vector<1x4x256xf32>
    %670 = arith.addf %659, %669 : vector<1x4x256xf32>
    %c58 = arith.constant 58 : index
    %c0_274 = arith.constant 0 : index
    %c0_275 = arith.constant 0 : index
    %671 = vector.load %arg4[%c58, %c0_274, %c0_275] : memref<90x4x1xf32, #tpu.memory_space<vmem>>, vector<1x4x1xf32>
    %672 = vector.shape_cast %671 : vector<1x4x1xf32> to vector<4x1xf32>
    %673 = vector.shape_cast %672 : vector<4x1xf32> to vector<1x4x1xf32>
    %674 = vector.shape_cast %626 : vector<1x256xf32> to vector<1x1x256xf32>
    %675 = vector.broadcast %673 : vector<1x4x1xf32> to vector<1x4x256xf32>
    %676 = vector.broadcast %674 : vector<1x1x256xf32> to vector<1x4x256xf32>
    %677 = arith.mulf %675, %676 : vector<1x4x256xf32>
    %678 = arith.addf %670, %677 : vector<1x4x256xf32>
    %c255_i32_276 = arith.constant 255 : i32
    %679 = tpu.dynamic_rotate %626 by %c255_i32_276 dim 1 : vector<1x256xf32>, i32 -> vector<1x256xf32>
    %cst_277 = arith.constant 0.000000e+00 : f32
    %680 = vector.broadcast %cst_277 : f32 to vector<1x256xf32>
    %681 = arith.select %19, %679, %680 : vector<1x256xi1>, vector<1x256xf32>
    %c59 = arith.constant 59 : index
    %c0_278 = arith.constant 0 : index
    %c0_279 = arith.constant 0 : index
    %682 = vector.load %arg4[%c59, %c0_278, %c0_279] : memref<90x4x1xf32, #tpu.memory_space<vmem>>, vector<1x4x1xf32>
    %683 = vector.shape_cast %682 : vector<1x4x1xf32> to vector<4x1xf32>
    %684 = vector.shape_cast %683 : vector<4x1xf32> to vector<1x4x1xf32>
    %685 = vector.shape_cast %681 : vector<1x256xf32> to vector<1x1x256xf32>
    %686 = vector.broadcast %684 : vector<1x4x1xf32> to vector<1x4x256xf32>
    %687 = vector.broadcast %685 : vector<1x1x256xf32> to vector<1x4x256xf32>
    %688 = arith.mulf %686, %687 : vector<1x4x256xf32>
    %689 = arith.addf %678, %688 : vector<1x4x256xf32>
    %c241_i32_280 = arith.constant 241 : i32
    %690 = tpu.dynamic_rotate %626 by %c241_i32_280 dim 1 : vector<1x256xf32>, i32 -> vector<1x256xf32>
    %cst_281 = arith.constant 0.000000e+00 : f32
    %691 = vector.broadcast %cst_281 : f32 to vector<1x256xf32>
    %692 = arith.select %23, %690, %691 : vector<1x256xi1>, vector<1x256xf32>
    %c60 = arith.constant 60 : index
    %c0_282 = arith.constant 0 : index
    %c0_283 = arith.constant 0 : index
    %693 = vector.load %arg4[%c60, %c0_282, %c0_283] : memref<90x4x1xf32, #tpu.memory_space<vmem>>, vector<1x4x1xf32>
    %694 = vector.shape_cast %693 : vector<1x4x1xf32> to vector<4x1xf32>
    %695 = vector.shape_cast %694 : vector<4x1xf32> to vector<1x4x1xf32>
    %696 = vector.shape_cast %692 : vector<1x256xf32> to vector<1x1x256xf32>
    %697 = vector.broadcast %695 : vector<1x4x1xf32> to vector<1x4x256xf32>
    %698 = vector.broadcast %696 : vector<1x1x256xf32> to vector<1x4x256xf32>
    %699 = arith.mulf %697, %698 : vector<1x4x256xf32>
    %700 = arith.addf %689, %699 : vector<1x4x256xf32>
    %c240_i32_284 = arith.constant 240 : i32
    %701 = tpu.dynamic_rotate %626 by %c240_i32_284 dim 1 : vector<1x256xf32>, i32 -> vector<1x256xf32>
    %cst_285 = arith.constant 0.000000e+00 : f32
    %702 = vector.broadcast %cst_285 : f32 to vector<1x256xf32>
    %703 = arith.select %27, %701, %702 : vector<1x256xi1>, vector<1x256xf32>
    %c61 = arith.constant 61 : index
    %c0_286 = arith.constant 0 : index
    %c0_287 = arith.constant 0 : index
    %704 = vector.load %arg4[%c61, %c0_286, %c0_287] : memref<90x4x1xf32, #tpu.memory_space<vmem>>, vector<1x4x1xf32>
    %705 = vector.shape_cast %704 : vector<1x4x1xf32> to vector<4x1xf32>
    %706 = vector.shape_cast %705 : vector<4x1xf32> to vector<1x4x1xf32>
    %707 = vector.shape_cast %703 : vector<1x256xf32> to vector<1x1x256xf32>
    %708 = vector.broadcast %706 : vector<1x4x1xf32> to vector<1x4x256xf32>
    %709 = vector.broadcast %707 : vector<1x1x256xf32> to vector<1x4x256xf32>
    %710 = arith.mulf %708, %709 : vector<1x4x256xf32>
    %711 = arith.addf %700, %710 : vector<1x4x256xf32>
    %c239_i32_288 = arith.constant 239 : i32
    %712 = tpu.dynamic_rotate %626 by %c239_i32_288 dim 1 : vector<1x256xf32>, i32 -> vector<1x256xf32>
    %cst_289 = arith.constant 0.000000e+00 : f32
    %713 = vector.broadcast %cst_289 : f32 to vector<1x256xf32>
    %714 = arith.select %31, %712, %713 : vector<1x256xi1>, vector<1x256xf32>
    %c62 = arith.constant 62 : index
    %c0_290 = arith.constant 0 : index
    %c0_291 = arith.constant 0 : index
    %715 = vector.load %arg4[%c62, %c0_290, %c0_291] : memref<90x4x1xf32, #tpu.memory_space<vmem>>, vector<1x4x1xf32>
    %716 = vector.shape_cast %715 : vector<1x4x1xf32> to vector<4x1xf32>
    %717 = vector.shape_cast %716 : vector<4x1xf32> to vector<1x4x1xf32>
    %718 = vector.shape_cast %714 : vector<1x256xf32> to vector<1x1x256xf32>
    %719 = vector.broadcast %717 : vector<1x4x1xf32> to vector<1x4x256xf32>
    %720 = vector.broadcast %718 : vector<1x1x256xf32> to vector<1x4x256xf32>
    %721 = arith.mulf %719, %720 : vector<1x4x256xf32>
    %722 = arith.addf %711, %721 : vector<1x4x256xf32>
    %c3_292 = arith.constant 3 : index
    %c0_293 = arith.constant 0 : index
    %c0_294 = arith.constant 0 : index
    %c0_295 = arith.constant 0 : index
    %723 = vector.load %arg2[%c3_292, %c0_293, %c0_294, %c0_295] : memref<6x1x1x256xf32, #tpu.memory_space<vmem>>, vector<1x1x1x256xf32>
    %724 = vector.shape_cast %723 : vector<1x1x1x256xf32> to vector<1x256xf32>
    %c17_i32_296 = arith.constant 17 : i32
    %725 = tpu.dynamic_rotate %724 by %c17_i32_296 dim 1 : vector<1x256xf32>, i32 -> vector<1x256xf32>
    %cst_297 = arith.constant 0.000000e+00 : f32
    %726 = vector.broadcast %cst_297 : f32 to vector<1x256xf32>
    %727 = arith.select %3, %725, %726 : vector<1x256xi1>, vector<1x256xf32>
    %c63 = arith.constant 63 : index
    %c0_298 = arith.constant 0 : index
    %c0_299 = arith.constant 0 : index
    %728 = vector.load %arg4[%c63, %c0_298, %c0_299] : memref<90x4x1xf32, #tpu.memory_space<vmem>>, vector<1x4x1xf32>
    %729 = vector.shape_cast %728 : vector<1x4x1xf32> to vector<4x1xf32>
    %730 = vector.shape_cast %729 : vector<4x1xf32> to vector<1x4x1xf32>
    %731 = vector.shape_cast %727 : vector<1x256xf32> to vector<1x1x256xf32>
    %732 = vector.broadcast %730 : vector<1x4x1xf32> to vector<1x4x256xf32>
    %733 = vector.broadcast %731 : vector<1x1x256xf32> to vector<1x4x256xf32>
    %734 = arith.mulf %732, %733 : vector<1x4x256xf32>
    %735 = arith.addf %722, %734 : vector<1x4x256xf32>
    %c16_i32_300 = arith.constant 16 : i32
    %736 = tpu.dynamic_rotate %724 by %c16_i32_300 dim 1 : vector<1x256xf32>, i32 -> vector<1x256xf32>
    %cst_301 = arith.constant 0.000000e+00 : f32
    %737 = vector.broadcast %cst_301 : f32 to vector<1x256xf32>
    %738 = arith.select %7, %736, %737 : vector<1x256xi1>, vector<1x256xf32>
    %c64 = arith.constant 64 : index
    %c0_302 = arith.constant 0 : index
    %c0_303 = arith.constant 0 : index
    %739 = vector.load %arg4[%c64, %c0_302, %c0_303] : memref<90x4x1xf32, #tpu.memory_space<vmem>>, vector<1x4x1xf32>
    %740 = vector.shape_cast %739 : vector<1x4x1xf32> to vector<4x1xf32>
    %741 = vector.shape_cast %740 : vector<4x1xf32> to vector<1x4x1xf32>
    %742 = vector.shape_cast %738 : vector<1x256xf32> to vector<1x1x256xf32>
    %743 = vector.broadcast %741 : vector<1x4x1xf32> to vector<1x4x256xf32>
    %744 = vector.broadcast %742 : vector<1x1x256xf32> to vector<1x4x256xf32>
    %745 = arith.mulf %743, %744 : vector<1x4x256xf32>
    %746 = arith.addf %735, %745 : vector<1x4x256xf32>
    %c15_i32_304 = arith.constant 15 : i32
    %747 = tpu.dynamic_rotate %724 by %c15_i32_304 dim 1 : vector<1x256xf32>, i32 -> vector<1x256xf32>
    %cst_305 = arith.constant 0.000000e+00 : f32
    %748 = vector.broadcast %cst_305 : f32 to vector<1x256xf32>
    %749 = arith.select %11, %747, %748 : vector<1x256xi1>, vector<1x256xf32>
    %c65 = arith.constant 65 : index
    %c0_306 = arith.constant 0 : index
    %c0_307 = arith.constant 0 : index
    %750 = vector.load %arg4[%c65, %c0_306, %c0_307] : memref<90x4x1xf32, #tpu.memory_space<vmem>>, vector<1x4x1xf32>
    %751 = vector.shape_cast %750 : vector<1x4x1xf32> to vector<4x1xf32>
    %752 = vector.shape_cast %751 : vector<4x1xf32> to vector<1x4x1xf32>
    %753 = vector.shape_cast %749 : vector<1x256xf32> to vector<1x1x256xf32>
    %754 = vector.broadcast %752 : vector<1x4x1xf32> to vector<1x4x256xf32>
    %755 = vector.broadcast %753 : vector<1x1x256xf32> to vector<1x4x256xf32>
    %756 = arith.mulf %754, %755 : vector<1x4x256xf32>
    %757 = arith.addf %746, %756 : vector<1x4x256xf32>
    %c1_i32_308 = arith.constant 1 : i32
    %758 = tpu.dynamic_rotate %724 by %c1_i32_308 dim 1 : vector<1x256xf32>, i32 -> vector<1x256xf32>
    %cst_309 = arith.constant 0.000000e+00 : f32
    %759 = vector.broadcast %cst_309 : f32 to vector<1x256xf32>
    %760 = arith.select %15, %758, %759 : vector<1x256xi1>, vector<1x256xf32>
    %c66 = arith.constant 66 : index
    %c0_310 = arith.constant 0 : index
    %c0_311 = arith.constant 0 : index
    %761 = vector.load %arg4[%c66, %c0_310, %c0_311] : memref<90x4x1xf32, #tpu.memory_space<vmem>>, vector<1x4x1xf32>
    %762 = vector.shape_cast %761 : vector<1x4x1xf32> to vector<4x1xf32>
    %763 = vector.shape_cast %762 : vector<4x1xf32> to vector<1x4x1xf32>
    %764 = vector.shape_cast %760 : vector<1x256xf32> to vector<1x1x256xf32>
    %765 = vector.broadcast %763 : vector<1x4x1xf32> to vector<1x4x256xf32>
    %766 = vector.broadcast %764 : vector<1x1x256xf32> to vector<1x4x256xf32>
    %767 = arith.mulf %765, %766 : vector<1x4x256xf32>
    %768 = arith.addf %757, %767 : vector<1x4x256xf32>
    %c67 = arith.constant 67 : index
    %c0_312 = arith.constant 0 : index
    %c0_313 = arith.constant 0 : index
    %769 = vector.load %arg4[%c67, %c0_312, %c0_313] : memref<90x4x1xf32, #tpu.memory_space<vmem>>, vector<1x4x1xf32>
    %770 = vector.shape_cast %769 : vector<1x4x1xf32> to vector<4x1xf32>
    %771 = vector.shape_cast %770 : vector<4x1xf32> to vector<1x4x1xf32>
    %772 = vector.shape_cast %724 : vector<1x256xf32> to vector<1x1x256xf32>
    %773 = vector.broadcast %771 : vector<1x4x1xf32> to vector<1x4x256xf32>
    %774 = vector.broadcast %772 : vector<1x1x256xf32> to vector<1x4x256xf32>
    %775 = arith.mulf %773, %774 : vector<1x4x256xf32>
    %776 = arith.addf %768, %775 : vector<1x4x256xf32>
    %c255_i32_314 = arith.constant 255 : i32
    %777 = tpu.dynamic_rotate %724 by %c255_i32_314 dim 1 : vector<1x256xf32>, i32 -> vector<1x256xf32>
    %cst_315 = arith.constant 0.000000e+00 : f32
    %778 = vector.broadcast %cst_315 : f32 to vector<1x256xf32>
    %779 = arith.select %19, %777, %778 : vector<1x256xi1>, vector<1x256xf32>
    %c68 = arith.constant 68 : index
    %c0_316 = arith.constant 0 : index
    %c0_317 = arith.constant 0 : index
    %780 = vector.load %arg4[%c68, %c0_316, %c0_317] : memref<90x4x1xf32, #tpu.memory_space<vmem>>, vector<1x4x1xf32>
    %781 = vector.shape_cast %780 : vector<1x4x1xf32> to vector<4x1xf32>
    %782 = vector.shape_cast %781 : vector<4x1xf32> to vector<1x4x1xf32>
    %783 = vector.shape_cast %779 : vector<1x256xf32> to vector<1x1x256xf32>
    %784 = vector.broadcast %782 : vector<1x4x1xf32> to vector<1x4x256xf32>
    %785 = vector.broadcast %783 : vector<1x1x256xf32> to vector<1x4x256xf32>
    %786 = arith.mulf %784, %785 : vector<1x4x256xf32>
    %787 = arith.addf %776, %786 : vector<1x4x256xf32>
    %c241_i32_318 = arith.constant 241 : i32
    %788 = tpu.dynamic_rotate %724 by %c241_i32_318 dim 1 : vector<1x256xf32>, i32 -> vector<1x256xf32>
    %cst_319 = arith.constant 0.000000e+00 : f32
    %789 = vector.broadcast %cst_319 : f32 to vector<1x256xf32>
    %790 = arith.select %23, %788, %789 : vector<1x256xi1>, vector<1x256xf32>
    %c69 = arith.constant 69 : index
    %c0_320 = arith.constant 0 : index
    %c0_321 = arith.constant 0 : index
    %791 = vector.load %arg4[%c69, %c0_320, %c0_321] : memref<90x4x1xf32, #tpu.memory_space<vmem>>, vector<1x4x1xf32>
    %792 = vector.shape_cast %791 : vector<1x4x1xf32> to vector<4x1xf32>
    %793 = vector.shape_cast %792 : vector<4x1xf32> to vector<1x4x1xf32>
    %794 = vector.shape_cast %790 : vector<1x256xf32> to vector<1x1x256xf32>
    %795 = vector.broadcast %793 : vector<1x4x1xf32> to vector<1x4x256xf32>
    %796 = vector.broadcast %794 : vector<1x1x256xf32> to vector<1x4x256xf32>
    %797 = arith.mulf %795, %796 : vector<1x4x256xf32>
    %798 = arith.addf %787, %797 : vector<1x4x256xf32>
    %c240_i32_322 = arith.constant 240 : i32
    %799 = tpu.dynamic_rotate %724 by %c240_i32_322 dim 1 : vector<1x256xf32>, i32 -> vector<1x256xf32>
    %cst_323 = arith.constant 0.000000e+00 : f32
    %800 = vector.broadcast %cst_323 : f32 to vector<1x256xf32>
    %801 = arith.select %27, %799, %800 : vector<1x256xi1>, vector<1x256xf32>
    %c70 = arith.constant 70 : index
    %c0_324 = arith.constant 0 : index
    %c0_325 = arith.constant 0 : index
    %802 = vector.load %arg4[%c70, %c0_324, %c0_325] : memref<90x4x1xf32, #tpu.memory_space<vmem>>, vector<1x4x1xf32>
    %803 = vector.shape_cast %802 : vector<1x4x1xf32> to vector<4x1xf32>
    %804 = vector.shape_cast %803 : vector<4x1xf32> to vector<1x4x1xf32>
    %805 = vector.shape_cast %801 : vector<1x256xf32> to vector<1x1x256xf32>
    %806 = vector.broadcast %804 : vector<1x4x1xf32> to vector<1x4x256xf32>
    %807 = vector.broadcast %805 : vector<1x1x256xf32> to vector<1x4x256xf32>
    %808 = arith.mulf %806, %807 : vector<1x4x256xf32>
    %809 = arith.addf %798, %808 : vector<1x4x256xf32>
    %c239_i32_326 = arith.constant 239 : i32
    %810 = tpu.dynamic_rotate %724 by %c239_i32_326 dim 1 : vector<1x256xf32>, i32 -> vector<1x256xf32>
    %cst_327 = arith.constant 0.000000e+00 : f32
    %811 = vector.broadcast %cst_327 : f32 to vector<1x256xf32>
    %812 = arith.select %31, %810, %811 : vector<1x256xi1>, vector<1x256xf32>
    %c71 = arith.constant 71 : index
    %c0_328 = arith.constant 0 : index
    %c0_329 = arith.constant 0 : index
    %813 = vector.load %arg4[%c71, %c0_328, %c0_329] : memref<90x4x1xf32, #tpu.memory_space<vmem>>, vector<1x4x1xf32>
    %814 = vector.shape_cast %813 : vector<1x4x1xf32> to vector<4x1xf32>
    %815 = vector.shape_cast %814 : vector<4x1xf32> to vector<1x4x1xf32>
    %816 = vector.shape_cast %812 : vector<1x256xf32> to vector<1x1x256xf32>
    %817 = vector.broadcast %815 : vector<1x4x1xf32> to vector<1x4x256xf32>
    %818 = vector.broadcast %816 : vector<1x1x256xf32> to vector<1x4x256xf32>
    %819 = arith.mulf %817, %818 : vector<1x4x256xf32>
    %820 = arith.addf %809, %819 : vector<1x4x256xf32>
    %c4_330 = arith.constant 4 : index
    %c0_331 = arith.constant 0 : index
    %c0_332 = arith.constant 0 : index
    %c0_333 = arith.constant 0 : index
    %821 = vector.load %arg2[%c4_330, %c0_331, %c0_332, %c0_333] : memref<6x1x1x256xf32, #tpu.memory_space<vmem>>, vector<1x1x1x256xf32>
    %822 = vector.shape_cast %821 : vector<1x1x1x256xf32> to vector<1x256xf32>
    %c17_i32_334 = arith.constant 17 : i32
    %823 = tpu.dynamic_rotate %822 by %c17_i32_334 dim 1 : vector<1x256xf32>, i32 -> vector<1x256xf32>
    %cst_335 = arith.constant 0.000000e+00 : f32
    %824 = vector.broadcast %cst_335 : f32 to vector<1x256xf32>
    %825 = arith.select %3, %823, %824 : vector<1x256xi1>, vector<1x256xf32>
    %c72 = arith.constant 72 : index
    %c0_336 = arith.constant 0 : index
    %c0_337 = arith.constant 0 : index
    %826 = vector.load %arg4[%c72, %c0_336, %c0_337] : memref<90x4x1xf32, #tpu.memory_space<vmem>>, vector<1x4x1xf32>
    %827 = vector.shape_cast %826 : vector<1x4x1xf32> to vector<4x1xf32>
    %828 = vector.shape_cast %827 : vector<4x1xf32> to vector<1x4x1xf32>
    %829 = vector.shape_cast %825 : vector<1x256xf32> to vector<1x1x256xf32>
    %830 = vector.broadcast %828 : vector<1x4x1xf32> to vector<1x4x256xf32>
    %831 = vector.broadcast %829 : vector<1x1x256xf32> to vector<1x4x256xf32>
    %832 = arith.mulf %830, %831 : vector<1x4x256xf32>
    %833 = arith.addf %820, %832 : vector<1x4x256xf32>
    %c16_i32_338 = arith.constant 16 : i32
    %834 = tpu.dynamic_rotate %822 by %c16_i32_338 dim 1 : vector<1x256xf32>, i32 -> vector<1x256xf32>
    %cst_339 = arith.constant 0.000000e+00 : f32
    %835 = vector.broadcast %cst_339 : f32 to vector<1x256xf32>
    %836 = arith.select %7, %834, %835 : vector<1x256xi1>, vector<1x256xf32>
    %c73 = arith.constant 73 : index
    %c0_340 = arith.constant 0 : index
    %c0_341 = arith.constant 0 : index
    %837 = vector.load %arg4[%c73, %c0_340, %c0_341] : memref<90x4x1xf32, #tpu.memory_space<vmem>>, vector<1x4x1xf32>
    %838 = vector.shape_cast %837 : vector<1x4x1xf32> to vector<4x1xf32>
    %839 = vector.shape_cast %838 : vector<4x1xf32> to vector<1x4x1xf32>
    %840 = vector.shape_cast %836 : vector<1x256xf32> to vector<1x1x256xf32>
    %841 = vector.broadcast %839 : vector<1x4x1xf32> to vector<1x4x256xf32>
    %842 = vector.broadcast %840 : vector<1x1x256xf32> to vector<1x4x256xf32>
    %843 = arith.mulf %841, %842 : vector<1x4x256xf32>
    %844 = arith.addf %833, %843 : vector<1x4x256xf32>
    %c15_i32_342 = arith.constant 15 : i32
    %845 = tpu.dynamic_rotate %822 by %c15_i32_342 dim 1 : vector<1x256xf32>, i32 -> vector<1x256xf32>
    %cst_343 = arith.constant 0.000000e+00 : f32
    %846 = vector.broadcast %cst_343 : f32 to vector<1x256xf32>
    %847 = arith.select %11, %845, %846 : vector<1x256xi1>, vector<1x256xf32>
    %c74 = arith.constant 74 : index
    %c0_344 = arith.constant 0 : index
    %c0_345 = arith.constant 0 : index
    %848 = vector.load %arg4[%c74, %c0_344, %c0_345] : memref<90x4x1xf32, #tpu.memory_space<vmem>>, vector<1x4x1xf32>
    %849 = vector.shape_cast %848 : vector<1x4x1xf32> to vector<4x1xf32>
    %850 = vector.shape_cast %849 : vector<4x1xf32> to vector<1x4x1xf32>
    %851 = vector.shape_cast %847 : vector<1x256xf32> to vector<1x1x256xf32>
    %852 = vector.broadcast %850 : vector<1x4x1xf32> to vector<1x4x256xf32>
    %853 = vector.broadcast %851 : vector<1x1x256xf32> to vector<1x4x256xf32>
    %854 = arith.mulf %852, %853 : vector<1x4x256xf32>
    %855 = arith.addf %844, %854 : vector<1x4x256xf32>
    %c1_i32_346 = arith.constant 1 : i32
    %856 = tpu.dynamic_rotate %822 by %c1_i32_346 dim 1 : vector<1x256xf32>, i32 -> vector<1x256xf32>
    %cst_347 = arith.constant 0.000000e+00 : f32
    %857 = vector.broadcast %cst_347 : f32 to vector<1x256xf32>
    %858 = arith.select %15, %856, %857 : vector<1x256xi1>, vector<1x256xf32>
    %c75 = arith.constant 75 : index
    %c0_348 = arith.constant 0 : index
    %c0_349 = arith.constant 0 : index
    %859 = vector.load %arg4[%c75, %c0_348, %c0_349] : memref<90x4x1xf32, #tpu.memory_space<vmem>>, vector<1x4x1xf32>
    %860 = vector.shape_cast %859 : vector<1x4x1xf32> to vector<4x1xf32>
    %861 = vector.shape_cast %860 : vector<4x1xf32> to vector<1x4x1xf32>
    %862 = vector.shape_cast %858 : vector<1x256xf32> to vector<1x1x256xf32>
    %863 = vector.broadcast %861 : vector<1x4x1xf32> to vector<1x4x256xf32>
    %864 = vector.broadcast %862 : vector<1x1x256xf32> to vector<1x4x256xf32>
    %865 = arith.mulf %863, %864 : vector<1x4x256xf32>
    %866 = arith.addf %855, %865 : vector<1x4x256xf32>
    %c76 = arith.constant 76 : index
    %c0_350 = arith.constant 0 : index
    %c0_351 = arith.constant 0 : index
    %867 = vector.load %arg4[%c76, %c0_350, %c0_351] : memref<90x4x1xf32, #tpu.memory_space<vmem>>, vector<1x4x1xf32>
    %868 = vector.shape_cast %867 : vector<1x4x1xf32> to vector<4x1xf32>
    %869 = vector.shape_cast %868 : vector<4x1xf32> to vector<1x4x1xf32>
    %870 = vector.shape_cast %822 : vector<1x256xf32> to vector<1x1x256xf32>
    %871 = vector.broadcast %869 : vector<1x4x1xf32> to vector<1x4x256xf32>
    %872 = vector.broadcast %870 : vector<1x1x256xf32> to vector<1x4x256xf32>
    %873 = arith.mulf %871, %872 : vector<1x4x256xf32>
    %874 = arith.addf %866, %873 : vector<1x4x256xf32>
    %c255_i32_352 = arith.constant 255 : i32
    %875 = tpu.dynamic_rotate %822 by %c255_i32_352 dim 1 : vector<1x256xf32>, i32 -> vector<1x256xf32>
    %cst_353 = arith.constant 0.000000e+00 : f32
    %876 = vector.broadcast %cst_353 : f32 to vector<1x256xf32>
    %877 = arith.select %19, %875, %876 : vector<1x256xi1>, vector<1x256xf32>
    %c77 = arith.constant 77 : index
    %c0_354 = arith.constant 0 : index
    %c0_355 = arith.constant 0 : index
    %878 = vector.load %arg4[%c77, %c0_354, %c0_355] : memref<90x4x1xf32, #tpu.memory_space<vmem>>, vector<1x4x1xf32>
    %879 = vector.shape_cast %878 : vector<1x4x1xf32> to vector<4x1xf32>
    %880 = vector.shape_cast %879 : vector<4x1xf32> to vector<1x4x1xf32>
    %881 = vector.shape_cast %877 : vector<1x256xf32> to vector<1x1x256xf32>
    %882 = vector.broadcast %880 : vector<1x4x1xf32> to vector<1x4x256xf32>
    %883 = vector.broadcast %881 : vector<1x1x256xf32> to vector<1x4x256xf32>
    %884 = arith.mulf %882, %883 : vector<1x4x256xf32>
    %885 = arith.addf %874, %884 : vector<1x4x256xf32>
    %c241_i32_356 = arith.constant 241 : i32
    %886 = tpu.dynamic_rotate %822 by %c241_i32_356 dim 1 : vector<1x256xf32>, i32 -> vector<1x256xf32>
    %cst_357 = arith.constant 0.000000e+00 : f32
    %887 = vector.broadcast %cst_357 : f32 to vector<1x256xf32>
    %888 = arith.select %23, %886, %887 : vector<1x256xi1>, vector<1x256xf32>
    %c78 = arith.constant 78 : index
    %c0_358 = arith.constant 0 : index
    %c0_359 = arith.constant 0 : index
    %889 = vector.load %arg4[%c78, %c0_358, %c0_359] : memref<90x4x1xf32, #tpu.memory_space<vmem>>, vector<1x4x1xf32>
    %890 = vector.shape_cast %889 : vector<1x4x1xf32> to vector<4x1xf32>
    %891 = vector.shape_cast %890 : vector<4x1xf32> to vector<1x4x1xf32>
    %892 = vector.shape_cast %888 : vector<1x256xf32> to vector<1x1x256xf32>
    %893 = vector.broadcast %891 : vector<1x4x1xf32> to vector<1x4x256xf32>
    %894 = vector.broadcast %892 : vector<1x1x256xf32> to vector<1x4x256xf32>
    %895 = arith.mulf %893, %894 : vector<1x4x256xf32>
    %896 = arith.addf %885, %895 : vector<1x4x256xf32>
    %c240_i32_360 = arith.constant 240 : i32
    %897 = tpu.dynamic_rotate %822 by %c240_i32_360 dim 1 : vector<1x256xf32>, i32 -> vector<1x256xf32>
    %cst_361 = arith.constant 0.000000e+00 : f32
    %898 = vector.broadcast %cst_361 : f32 to vector<1x256xf32>
    %899 = arith.select %27, %897, %898 : vector<1x256xi1>, vector<1x256xf32>
    %c79 = arith.constant 79 : index
    %c0_362 = arith.constant 0 : index
    %c0_363 = arith.constant 0 : index
    %900 = vector.load %arg4[%c79, %c0_362, %c0_363] : memref<90x4x1xf32, #tpu.memory_space<vmem>>, vector<1x4x1xf32>
    %901 = vector.shape_cast %900 : vector<1x4x1xf32> to vector<4x1xf32>
    %902 = vector.shape_cast %901 : vector<4x1xf32> to vector<1x4x1xf32>
    %903 = vector.shape_cast %899 : vector<1x256xf32> to vector<1x1x256xf32>
    %904 = vector.broadcast %902 : vector<1x4x1xf32> to vector<1x4x256xf32>
    %905 = vector.broadcast %903 : vector<1x1x256xf32> to vector<1x4x256xf32>
    %906 = arith.mulf %904, %905 : vector<1x4x256xf32>
    %907 = arith.addf %896, %906 : vector<1x4x256xf32>
    %c239_i32_364 = arith.constant 239 : i32
    %908 = tpu.dynamic_rotate %822 by %c239_i32_364 dim 1 : vector<1x256xf32>, i32 -> vector<1x256xf32>
    %cst_365 = arith.constant 0.000000e+00 : f32
    %909 = vector.broadcast %cst_365 : f32 to vector<1x256xf32>
    %910 = arith.select %31, %908, %909 : vector<1x256xi1>, vector<1x256xf32>
    %c80 = arith.constant 80 : index
    %c0_366 = arith.constant 0 : index
    %c0_367 = arith.constant 0 : index
    %911 = vector.load %arg4[%c80, %c0_366, %c0_367] : memref<90x4x1xf32, #tpu.memory_space<vmem>>, vector<1x4x1xf32>
    %912 = vector.shape_cast %911 : vector<1x4x1xf32> to vector<4x1xf32>
    %913 = vector.shape_cast %912 : vector<4x1xf32> to vector<1x4x1xf32>
    %914 = vector.shape_cast %910 : vector<1x256xf32> to vector<1x1x256xf32>
    %915 = vector.broadcast %913 : vector<1x4x1xf32> to vector<1x4x256xf32>
    %916 = vector.broadcast %914 : vector<1x1x256xf32> to vector<1x4x256xf32>
    %917 = arith.mulf %915, %916 : vector<1x4x256xf32>
    %918 = arith.addf %907, %917 : vector<1x4x256xf32>
    %c5_368 = arith.constant 5 : index
    %c0_369 = arith.constant 0 : index
    %c0_370 = arith.constant 0 : index
    %c0_371 = arith.constant 0 : index
    %919 = vector.load %arg2[%c5_368, %c0_369, %c0_370, %c0_371] : memref<6x1x1x256xf32, #tpu.memory_space<vmem>>, vector<1x1x1x256xf32>
    %920 = vector.shape_cast %919 : vector<1x1x1x256xf32> to vector<1x256xf32>
    %c17_i32_372 = arith.constant 17 : i32
    %921 = tpu.dynamic_rotate %920 by %c17_i32_372 dim 1 : vector<1x256xf32>, i32 -> vector<1x256xf32>
    %cst_373 = arith.constant 0.000000e+00 : f32
    %922 = vector.broadcast %cst_373 : f32 to vector<1x256xf32>
    %923 = arith.select %3, %921, %922 : vector<1x256xi1>, vector<1x256xf32>
    %c81 = arith.constant 81 : index
    %c0_374 = arith.constant 0 : index
    %c0_375 = arith.constant 0 : index
    %924 = vector.load %arg4[%c81, %c0_374, %c0_375] : memref<90x4x1xf32, #tpu.memory_space<vmem>>, vector<1x4x1xf32>
    %925 = vector.shape_cast %924 : vector<1x4x1xf32> to vector<4x1xf32>
    %926 = vector.shape_cast %925 : vector<4x1xf32> to vector<1x4x1xf32>
    %927 = vector.shape_cast %923 : vector<1x256xf32> to vector<1x1x256xf32>
    %928 = vector.broadcast %926 : vector<1x4x1xf32> to vector<1x4x256xf32>
    %929 = vector.broadcast %927 : vector<1x1x256xf32> to vector<1x4x256xf32>
    %930 = arith.mulf %928, %929 : vector<1x4x256xf32>
    %931 = arith.addf %918, %930 : vector<1x4x256xf32>
    %c16_i32_376 = arith.constant 16 : i32
    %932 = tpu.dynamic_rotate %920 by %c16_i32_376 dim 1 : vector<1x256xf32>, i32 -> vector<1x256xf32>
    %cst_377 = arith.constant 0.000000e+00 : f32
    %933 = vector.broadcast %cst_377 : f32 to vector<1x256xf32>
    %934 = arith.select %7, %932, %933 : vector<1x256xi1>, vector<1x256xf32>
    %c82 = arith.constant 82 : index
    %c0_378 = arith.constant 0 : index
    %c0_379 = arith.constant 0 : index
    %935 = vector.load %arg4[%c82, %c0_378, %c0_379] : memref<90x4x1xf32, #tpu.memory_space<vmem>>, vector<1x4x1xf32>
    %936 = vector.shape_cast %935 : vector<1x4x1xf32> to vector<4x1xf32>
    %937 = vector.shape_cast %936 : vector<4x1xf32> to vector<1x4x1xf32>
    %938 = vector.shape_cast %934 : vector<1x256xf32> to vector<1x1x256xf32>
    %939 = vector.broadcast %937 : vector<1x4x1xf32> to vector<1x4x256xf32>
    %940 = vector.broadcast %938 : vector<1x1x256xf32> to vector<1x4x256xf32>
    %941 = arith.mulf %939, %940 : vector<1x4x256xf32>
    %942 = arith.addf %931, %941 : vector<1x4x256xf32>
    %c15_i32_380 = arith.constant 15 : i32
    %943 = tpu.dynamic_rotate %920 by %c15_i32_380 dim 1 : vector<1x256xf32>, i32 -> vector<1x256xf32>
    %cst_381 = arith.constant 0.000000e+00 : f32
    %944 = vector.broadcast %cst_381 : f32 to vector<1x256xf32>
    %945 = arith.select %11, %943, %944 : vector<1x256xi1>, vector<1x256xf32>
    %c83 = arith.constant 83 : index
    %c0_382 = arith.constant 0 : index
    %c0_383 = arith.constant 0 : index
    %946 = vector.load %arg4[%c83, %c0_382, %c0_383] : memref<90x4x1xf32, #tpu.memory_space<vmem>>, vector<1x4x1xf32>
    %947 = vector.shape_cast %946 : vector<1x4x1xf32> to vector<4x1xf32>
    %948 = vector.shape_cast %947 : vector<4x1xf32> to vector<1x4x1xf32>
    %949 = vector.shape_cast %945 : vector<1x256xf32> to vector<1x1x256xf32>
    %950 = vector.broadcast %948 : vector<1x4x1xf32> to vector<1x4x256xf32>
    %951 = vector.broadcast %949 : vector<1x1x256xf32> to vector<1x4x256xf32>
    %952 = arith.mulf %950, %951 : vector<1x4x256xf32>
    %953 = arith.addf %942, %952 : vector<1x4x256xf32>
    %c1_i32_384 = arith.constant 1 : i32
    %954 = tpu.dynamic_rotate %920 by %c1_i32_384 dim 1 : vector<1x256xf32>, i32 -> vector<1x256xf32>
    %cst_385 = arith.constant 0.000000e+00 : f32
    %955 = vector.broadcast %cst_385 : f32 to vector<1x256xf32>
    %956 = arith.select %15, %954, %955 : vector<1x256xi1>, vector<1x256xf32>
    %c84 = arith.constant 84 : index
    %c0_386 = arith.constant 0 : index
    %c0_387 = arith.constant 0 : index
    %957 = vector.load %arg4[%c84, %c0_386, %c0_387] : memref<90x4x1xf32, #tpu.memory_space<vmem>>, vector<1x4x1xf32>
    %958 = vector.shape_cast %957 : vector<1x4x1xf32> to vector<4x1xf32>
    %959 = vector.shape_cast %958 : vector<4x1xf32> to vector<1x4x1xf32>
    %960 = vector.shape_cast %956 : vector<1x256xf32> to vector<1x1x256xf32>
    %961 = vector.broadcast %959 : vector<1x4x1xf32> to vector<1x4x256xf32>
    %962 = vector.broadcast %960 : vector<1x1x256xf32> to vector<1x4x256xf32>
    %963 = arith.mulf %961, %962 : vector<1x4x256xf32>
    %964 = arith.addf %953, %963 : vector<1x4x256xf32>
    %c85 = arith.constant 85 : index
    %c0_388 = arith.constant 0 : index
    %c0_389 = arith.constant 0 : index
    %965 = vector.load %arg4[%c85, %c0_388, %c0_389] : memref<90x4x1xf32, #tpu.memory_space<vmem>>, vector<1x4x1xf32>
    %966 = vector.shape_cast %965 : vector<1x4x1xf32> to vector<4x1xf32>
    %967 = vector.shape_cast %966 : vector<4x1xf32> to vector<1x4x1xf32>
    %968 = vector.shape_cast %920 : vector<1x256xf32> to vector<1x1x256xf32>
    %969 = vector.broadcast %967 : vector<1x4x1xf32> to vector<1x4x256xf32>
    %970 = vector.broadcast %968 : vector<1x1x256xf32> to vector<1x4x256xf32>
    %971 = arith.mulf %969, %970 : vector<1x4x256xf32>
    %972 = arith.addf %964, %971 : vector<1x4x256xf32>
    %c255_i32_390 = arith.constant 255 : i32
    %973 = tpu.dynamic_rotate %920 by %c255_i32_390 dim 1 : vector<1x256xf32>, i32 -> vector<1x256xf32>
    %cst_391 = arith.constant 0.000000e+00 : f32
    %974 = vector.broadcast %cst_391 : f32 to vector<1x256xf32>
    %975 = arith.select %19, %973, %974 : vector<1x256xi1>, vector<1x256xf32>
    %c86 = arith.constant 86 : index
    %c0_392 = arith.constant 0 : index
    %c0_393 = arith.constant 0 : index
    %976 = vector.load %arg4[%c86, %c0_392, %c0_393] : memref<90x4x1xf32, #tpu.memory_space<vmem>>, vector<1x4x1xf32>
    %977 = vector.shape_cast %976 : vector<1x4x1xf32> to vector<4x1xf32>
    %978 = vector.shape_cast %977 : vector<4x1xf32> to vector<1x4x1xf32>
    %979 = vector.shape_cast %975 : vector<1x256xf32> to vector<1x1x256xf32>
    %980 = vector.broadcast %978 : vector<1x4x1xf32> to vector<1x4x256xf32>
    %981 = vector.broadcast %979 : vector<1x1x256xf32> to vector<1x4x256xf32>
    %982 = arith.mulf %980, %981 : vector<1x4x256xf32>
    %983 = arith.addf %972, %982 : vector<1x4x256xf32>
    %c241_i32_394 = arith.constant 241 : i32
    %984 = tpu.dynamic_rotate %920 by %c241_i32_394 dim 1 : vector<1x256xf32>, i32 -> vector<1x256xf32>
    %cst_395 = arith.constant 0.000000e+00 : f32
    %985 = vector.broadcast %cst_395 : f32 to vector<1x256xf32>
    %986 = arith.select %23, %984, %985 : vector<1x256xi1>, vector<1x256xf32>
    %c87 = arith.constant 87 : index
    %c0_396 = arith.constant 0 : index
    %c0_397 = arith.constant 0 : index
    %987 = vector.load %arg4[%c87, %c0_396, %c0_397] : memref<90x4x1xf32, #tpu.memory_space<vmem>>, vector<1x4x1xf32>
    %988 = vector.shape_cast %987 : vector<1x4x1xf32> to vector<4x1xf32>
    %989 = vector.shape_cast %988 : vector<4x1xf32> to vector<1x4x1xf32>
    %990 = vector.shape_cast %986 : vector<1x256xf32> to vector<1x1x256xf32>
    %991 = vector.broadcast %989 : vector<1x4x1xf32> to vector<1x4x256xf32>
    %992 = vector.broadcast %990 : vector<1x1x256xf32> to vector<1x4x256xf32>
    %993 = arith.mulf %991, %992 : vector<1x4x256xf32>
    %994 = arith.addf %983, %993 : vector<1x4x256xf32>
    %c240_i32_398 = arith.constant 240 : i32
    %995 = tpu.dynamic_rotate %920 by %c240_i32_398 dim 1 : vector<1x256xf32>, i32 -> vector<1x256xf32>
    %cst_399 = arith.constant 0.000000e+00 : f32
    %996 = vector.broadcast %cst_399 : f32 to vector<1x256xf32>
    %997 = arith.select %27, %995, %996 : vector<1x256xi1>, vector<1x256xf32>
    %c88 = arith.constant 88 : index
    %c0_400 = arith.constant 0 : index
    %c0_401 = arith.constant 0 : index
    %998 = vector.load %arg4[%c88, %c0_400, %c0_401] : memref<90x4x1xf32, #tpu.memory_space<vmem>>, vector<1x4x1xf32>
    %999 = vector.shape_cast %998 : vector<1x4x1xf32> to vector<4x1xf32>
    %1000 = vector.shape_cast %999 : vector<4x1xf32> to vector<1x4x1xf32>
    %1001 = vector.shape_cast %997 : vector<1x256xf32> to vector<1x1x256xf32>
    %1002 = vector.broadcast %1000 : vector<1x4x1xf32> to vector<1x4x256xf32>
    %1003 = vector.broadcast %1001 : vector<1x1x256xf32> to vector<1x4x256xf32>
    %1004 = arith.mulf %1002, %1003 : vector<1x4x256xf32>
    %1005 = arith.addf %994, %1004 : vector<1x4x256xf32>
    %c239_i32_402 = arith.constant 239 : i32
    %1006 = tpu.dynamic_rotate %920 by %c239_i32_402 dim 1 : vector<1x256xf32>, i32 -> vector<1x256xf32>
    %cst_403 = arith.constant 0.000000e+00 : f32
    %1007 = vector.broadcast %cst_403 : f32 to vector<1x256xf32>
    %1008 = arith.select %31, %1006, %1007 : vector<1x256xi1>, vector<1x256xf32>
    %c89 = arith.constant 89 : index
    %c0_404 = arith.constant 0 : index
    %c0_405 = arith.constant 0 : index
    %1009 = vector.load %arg4[%c89, %c0_404, %c0_405] : memref<90x4x1xf32, #tpu.memory_space<vmem>>, vector<1x4x1xf32>
    %1010 = vector.shape_cast %1009 : vector<1x4x1xf32> to vector<4x1xf32>
    %1011 = vector.shape_cast %1010 : vector<4x1xf32> to vector<1x4x1xf32>
    %1012 = vector.shape_cast %1008 : vector<1x256xf32> to vector<1x1x256xf32>
    %1013 = vector.broadcast %1011 : vector<1x4x1xf32> to vector<1x4x256xf32>
    %1014 = vector.broadcast %1012 : vector<1x1x256xf32> to vector<1x4x256xf32>
    %1015 = arith.mulf %1013, %1014 : vector<1x4x256xf32>
    %1016 = arith.addf %1005, %1015 : vector<1x4x256xf32>
    %cst_406 = arith.constant dense<0.000000e+00> : vector<1x4xf32>
    %1017 = vector.multi_reduction <add>, %1016, %cst_406 [2] : vector<1x4x256xf32> to vector<1x4xf32>
    %1018 = vector.shape_cast %1017 : vector<1x4xf32> to vector<1x4x1xf32>
    %cst_407 = arith.constant 3.906250e-03 : f32
    %1019 = vector.broadcast %cst_407 : f32 to vector<1x4x1xf32>
    %1020 = arith.mulf %1018, %1019 : vector<1x4x1xf32>
    %1021 = vector.broadcast %1020 : vector<1x4x1xf32> to vector<1x4x256xf32>
    %1022 = arith.subf %1016, %1021 : vector<1x4x256xf32>
    %1023 = arith.mulf %1022, %1022 : vector<1x4x256xf32>
    %cst_408 = arith.constant dense<0.000000e+00> : vector<1x4xf32>
    %1024 = vector.multi_reduction <add>, %1023, %cst_408 [2] : vector<1x4x256xf32> to vector<1x4xf32>
    %1025 = vector.shape_cast %1024 : vector<1x4xf32> to vector<1x4x1xf32>
    %cst_409 = arith.constant 3.906250e-03 : f32
    %1026 = vector.broadcast %cst_409 : f32 to vector<1x4x1xf32>
    %1027 = arith.mulf %1025, %1026 : vector<1x4x1xf32>
    %cst_410 = arith.constant 9.99999974E-6 : f32
    %1028 = vector.broadcast %cst_410 : f32 to vector<1x4x1xf32>
    %1029 = arith.addf %1027, %1028 : vector<1x4x1xf32>
    %1030 = math.rsqrt %1029 : vector<1x4x1xf32>
    %c0_411 = arith.constant 0 : index
    %c0_412 = arith.constant 0 : index
    %1031 = vector.load %arg6[%c0_411, %c0_412] : memref<4x1xf32, #tpu.memory_space<vmem>>, vector<4x1xf32>
    %1032 = vector.shape_cast %1031 : vector<4x1xf32> to vector<1x4x1xf32>
    %1033 = arith.mulf %1030, %1032 : vector<1x4x1xf32>
    %1034 = vector.broadcast %1033 : vector<1x4x1xf32> to vector<1x4x256xf32>
    %1035 = arith.mulf %1022, %1034 : vector<1x4x256xf32>
    %c0_413 = arith.constant 0 : index
    %c0_414 = arith.constant 0 : index
    %1036 = vector.load %arg7[%c0_413, %c0_414] : memref<4x1xf32, #tpu.memory_space<vmem>>, vector<4x1xf32>
    %1037 = vector.shape_cast %1036 : vector<4x1xf32> to vector<1x4x1xf32>
    %1038 = vector.broadcast %1037 : vector<1x4x1xf32> to vector<1x4x256xf32>
    %1039 = arith.addf %1035, %1038 : vector<1x4x256xf32>
    %cst_415 = arith.constant 0.000000e+00 : f32
    %1040 = vector.broadcast %cst_415 : f32 to vector<1x4x256xf32>
    %1041 = arith.cmpf ogt, %1039, %1040 : vector<1x4x256xf32>
    %cst_416 = arith.constant 0.000000e+00 : f32
    %1042 = vector.broadcast %cst_416 : f32 to vector<1x4x256xf32>
    %1043 = arith.minimumf %1039, %1042 : vector<1x4x256xf32>
    %1044 = math.exp %1043 : vector<1x4x256xf32>
    %cst_417 = arith.constant 1.000000e+00 : f32
    %1045 = vector.broadcast %cst_417 : f32 to vector<1x4x256xf32>
    %1046 = arith.subf %1044, %1045 : vector<1x4x256xf32>
    %1047 = arith.select %1041, %1039, %1046 : vector<1x4x256xi1>, vector<1x4x256xf32>
    %c0_418 = arith.constant 0 : index
    %c0_419 = arith.constant 0 : index
    %c0_420 = arith.constant 0 : index
    %1048 = vector.load %arg8[%c0_418, %c0_419, %c0_420] : memref<1x4x256xf32, #tpu.memory_space<vmem>>, vector<1x4x256xf32>
    tpu.vector_store %arg8[%c0_418, %c0_419, %c0_420], %1047 {strides = array<i32>} : memref<1x4x256xf32, #tpu.memory_space<vmem>>, vector<1x4x256xf32>,
    return
  }
  func.func @transform_0(%arg0: i32) -> (i32, i32, i32, i32) {
    %c0_i32 = arith.constant 0 : i32
    %c0_i32_0 = arith.constant 0 : i32
    %c0_i32_1 = arith.constant 0 : i32
    %c0_i32_2 = arith.constant 0 : i32
    return %c0_i32, %arg0, %c0_i32_0, %c0_i32_1 : i32, i32, i32, i32
  }
  func.func @transform_1(%arg0: i32) -> (i32, i32, i32, i32) {
    %c0_i32 = arith.constant 0 : i32
    %c0_i32_0 = arith.constant 0 : i32
    %c0_i32_1 = arith.constant 0 : i32
    %c0_i32_2 = arith.constant 0 : i32
    return %c0_i32, %arg0, %c0_i32_0, %c0_i32_1 : i32, i32, i32, i32
  }
  func.func @transform_2(%arg0: i32) -> (i32, i32, i32) {
    %c0_i32 = arith.constant 0 : i32
    %c0_i32_0 = arith.constant 0 : i32
    %c0_i32_1 = arith.constant 0 : i32
    %c0_i32_2 = arith.constant 0 : i32
    return %c0_i32, %c0_i32_0, %c0_i32_1 : i32, i32, i32
  }
  func.func @transform_3(%arg0: i32) -> (i32, i32, i32) {
    %c0_i32 = arith.constant 0 : i32
    %c0_i32_0 = arith.constant 0 : i32
    %c0_i32_1 = arith.constant 0 : i32
    %c0_i32_2 = arith.constant 0 : i32
    return %c0_i32, %c0_i32_0, %c0_i32_1 : i32, i32, i32
  }
  func.func @transform_4(%arg0: i32) -> (i32, i32) {
    %c0_i32 = arith.constant 0 : i32
    %c0_i32_0 = arith.constant 0 : i32
    %c0_i32_1 = arith.constant 0 : i32
    return %c0_i32, %c0_i32_0 : i32, i32
  }
  func.func @transform_5(%arg0: i32) -> (i32, i32) {
    %c0_i32 = arith.constant 0 : i32
    %c0_i32_0 = arith.constant 0 : i32
    %c0_i32_1 = arith.constant 0 : i32
    return %c0_i32, %c0_i32_0 : i32, i32
  }
  func.func @transform_6(%arg0: i32) -> (i32, i32) {
    %c0_i32 = arith.constant 0 : i32
    %c0_i32_0 = arith.constant 0 : i32
    %c0_i32_1 = arith.constant 0 : i32
    return %c0_i32, %c0_i32_0 : i32, i32
  }
  func.func @transform_7(%arg0: i32) -> (i32, i32, i32) {
    %c0_i32 = arith.constant 0 : i32
    %c0_i32_0 = arith.constant 0 : i32
    %c0_i32_1 = arith.constant 0 : i32
    return %arg0, %c0_i32, %c0_i32_0 : i32, i32, i32
  }
}

</mosaic_0001>

<llo_original>
// kernel: tpu_custom_call.1
$region0: #{tpu_custom_call.1}
  #allocation0 [shape = 'u32[]', space=smem, size = 0x4, offset = 0x4, fixed_abs, tag = 'smem constant byte address 0x4 - core index']
  #allocation1 [shape = 'u32[144,128]{1,0:T(1,128)}', space=vmem, size = 0x12000, scoped, tag = 'internal scratch']
  %s0 = inlined_call_operand.vmem [shape: f32[4,2,1,256], index: 0, kind: input, shape index: {}]
  %s1 = inlined_call_operand.vmem [shape: f32[6,2,1,256], index: 1, kind: input, shape index: {}]
  %s2 = inlined_call_operand.vmem [shape: f32[9,1,256], index: 2, kind: input, shape index: {}]
  %s3 = inlined_call_operand.vmem [shape: f32[90,4,1], index: 3, kind: input, shape index: {}]
  %s4 = inlined_call_operand.vmem [shape: f32[4,1], index: 4, kind: input, shape index: {}]
  %s5 = inlined_call_operand.vmem [shape: f32[4,1], index: 5, kind: input, shape index: {}]
  %s6 = inlined_call_operand.vmem [shape: f32[4,1], index: 6, kind: input, shape index: {}]
  %s7 = inlined_call_operand.hbm [shape: f32[2,4,256], index: 7, kind: output, shape index: {}]
  %s8 = sld [smem:[#allocation0]]
  $region143: #{tpu_custom_call.1} parent=0
    _
  %s10 = ssub.s32 1, %s8
  %s11 = scalar_select 0, %s10, %s8
  $region1: #{tpu_custom_call.1} parent=0
    #allocation2 [shape = 'u8[8192]{0}', space=vmem, size = 0x2000, scoped, tag = 'input window, operand 0']
    #allocation3 [shape = 'u8[12288]{0}', space=vmem, size = 0x3000, scoped, tag = 'input window, operand 1']
    #allocation4 [shape = 'u8[8192]{0}', space=vmem, size = 0x2000, scoped, tag = 'output window, operand 0']
    #allocation5 [shape = 's32[2]{0}', space=sflag, size = 0x8, scoped, tag = 'scoped memory for tpu_custom_call.1']
    %12 = vsyncpa [#allocation5], 0
    %s13 = scalar_lea.sflag [#allocation5], 1
    %14 = vsyncpa %s13, 0
    loop: start=0, step=1, limit=4
    $region2: #{tpu_custom_call.1} parent=1 // loop_pre_header
      _
    $region3: #{tpu_custom_call.1} parent=1 // loop_header
      %s16 = sphi 0, %s20
      %p17 = scmp.ge.s32.totalorder %s16, 4
      %s26 = sphi 0, %s28
      %s29 = sphi 0, %s26
      %s30 = sphi 0, %s29
      %s46 = sphi 0, %s30
      %s52 = sphi 0, %s54
      %s55 = sphi 0, %s52
      %s56 = sphi 0, %s55
      %s72 = sphi 0, %s56
      %s76 = sphi 0, %s76
      %s78 = sphi 0, %s76
      %s79 = sphi 0, %s78
      %s93 = sphi 0, %s79
      %s97 = sphi 0, %s97
      %s99 = sphi 0, %s97
      %s100 = sphi 0, %s99
      %s114 = sphi 0, %s100
      %s118 = sphi 0, %s118
      %s120 = sphi 0, %s118
      %s121 = sphi 0, %s120
      %s135 = sphi 0, %s121
      %s139 = sphi 0, %s139
      %s141 = sphi 0, %s139
      %s142 = sphi 0, %s141
      %s156 = sphi 0, %s142
      %s160 = sphi 0, %s160
      %s162 = sphi 0, %s160
      %s163 = sphi 0, %s162
      %s177 = sphi 0, %s163
      %s183 = sphi 0, %s185
      %s186 = sphi 0, %s183
      %s187 = sphi 0, %s186
      %s203 = sphi 0, %s187
    $region4: #{tpu_custom_call.1} parent=1 // loop_header_branch
      %19 = sbr.rel (%p17) target = $region8
    $region5: #{tpu_custom_call.1} parent=1 // loop_body
      %s21 = ssub.s32 %s16, 1
      %s22 = ssub.s32 %s16, 2
      %s23 = sadd.s32 %s16, 1
      %s24 = ssub.s32 %s16, %s23
      %p25 = scmp.eq.s32.totalorder %s24, 0
      %s27 = sadd.s32 %s26, 1
      %s28 = scalar_select %p25, %s26, %s27
      %p31 = pneg %p25
      %p32 = scmp.eq.s32.totalorder %s16, 1
      %p33 = por %p31, %p32
      %p34 = scmp.ne.s32.totalorder %s26, %s29
      %p35 = scmp.eq.s32.totalorder %s16, 0
      %p36 = por %p34, %p35
      %p37 = scmp.ne.s32.totalorder %s26, %s29
      %p38 = scmp.eq.s32.totalorder %s21, 1
      %p39 = por %p37, %p38
      %p40 = scmp.ne.s32.totalorder %s29, %s30
      %p41 = scmp.eq.s32.totalorder %s21, 0
      %p42 = por %p40, %p41
      %p43 = scmp.ne.s32.totalorder %s29, %s30
      %p44 = scmp.eq.s32.totalorder %s22, 1
      %p45 = por %p43, %p44
      %p47 = scmp.ne.s32.totalorder %s30, %s46
      %p48 = scmp.eq.s32.totalorder %s22, 0
      %p49 = por %p47, %p48
      %s50 = ssub.s32 %s16, %s23
      %p51 = scmp.eq.s32.totalorder %s50, 0
      %s53 = sadd.s32 %s52, 1
      %s54 = scalar_select %p51, %s52, %s53
      %p57 = pneg %p51
      %p58 = scmp.eq.s32.totalorder %s16, 1
      %p59 = por %p57, %p58
      %p60 = scmp.ne.s32.totalorder %s52, %s55
      %p61 = scmp.eq.s32.totalorder %s16, 0
      %p62 = por %p60, %p61
      %p63 = scmp.ne.s32.totalorder %s52, %s55
      %p64 = scmp.eq.s32.totalorder %s21, 1
      %p65 = por %p63, %p64
      %p66 = scmp.ne.s32.totalorder %s55, %s56
      %p67 = scmp.eq.s32.totalorder %s21, 0
      %p68 = por %p66, %p67
      %p69 = scmp.ne.s32.totalorder %s55, %s56
      %p70 = scmp.eq.s32.totalorder %s22, 1
      %p71 = por %p69, %p70
      %p73 = scmp.ne.s32.totalorder %s56, %s72
      %p74 = scmp.eq.s32.totalorder %s22, 0
      %p75 = por %p73, %p74
      %s77 = sadd.s32 %s76, 1
      %p80 = scmp.eq.s32.totalorder %s16, 1
      %p81 = scmp.ne.s32.totalorder %s76, %s78
      %p82 = scmp.eq.s32.totalorder %s16, 0
      %p83 = por %p81, %p82
      %p84 = scmp.ne.s32.totalorder %s76, %s78
      %p85 = scmp.eq.s32.totalorder %s21, 1
      %p86 = por %p84, %p85
      %p87 = scmp.ne.s32.totalorder %s78, %s79
      %p88 = scmp.eq.s32.totalorder %s21, 0
      %p89 = por %p87, %p88
      %p90 = scmp.ne.s32.totalorder %s78, %s79
      %p91 = scmp.eq.s32.totalorder %s22, 1
      %p92 = por %p90, %p91
      %p94 = scmp.ne.s32.totalorder %s79, %s93
      %p95 = scmp.eq.s32.totalorder %s22, 0
      %p96 = por %p94, %p95
      %s98 = sadd.s32 %s97, 1
      %p101 = scmp.eq.s32.totalorder %s16, 1
      %p102 = scmp.ne.s32.totalorder %s97, %s99
      %p103 = scmp.eq.s32.totalorder %s16, 0
      %p104 = por %p102, %p103
      %p105 = scmp.ne.s32.totalorder %s97, %s99
      %p106 = scmp.eq.s32.totalorder %s21, 1
      %p107 = por %p105, %p106
      %p108 = scmp.ne.s32.totalorder %s99, %s100
      %p109 = scmp.eq.s32.totalorder %s21, 0
      %p110 = por %p108, %p109
      %p111 = scmp.ne.s32.totalorder %s99, %s100
      %p112 = scmp.eq.s32.totalorder %s22, 1
      %p113 = por %p111, %p112
      %p115 = scmp.ne.s32.totalorder %s100, %s114
      %p116 = scmp.eq.s32.totalorder %s22, 0
      %p117 = por %p115, %p116
      %s119 = sadd.s32 %s118, 1
      %p122 = scmp.eq.s32.totalorder %s16, 1
      %p123 = scmp.ne.s32.totalorder %s118, %s120
      %p124 = scmp.eq.s32.totalorder %s16, 0
      %p125 = por %p123, %p124
      %p126 = scmp.ne.s32.totalorder %s118, %s120
      %p127 = scmp.eq.s32.totalorder %s21, 1
      %p128 = por %p126, %p127
      %p129 = scmp.ne.s32.totalorder %s120, %s121
      %p130 = scmp.eq.s32.totalorder %s21, 0
      %p131 = por %p129, %p130
      %p132 = scmp.ne.s32.totalorder %s120, %s121
      %p133 = scmp.eq.s32.totalorder %s22, 1
      %p134 = por %p132, %p133
      %p136 = scmp.ne.s32.totalorder %s121, %s135
      %p137 = scmp.eq.s32.totalorder %s22, 0
      %p138 = por %p136, %p137
      %s140 = sadd.s32 %s139, 1
      %p143 = scmp.eq.s32.totalorder %s16, 1
      %p144 = scmp.ne.s32.totalorder %s139, %s141
      %p145 = scmp.eq.s32.totalorder %s16, 0
      %p146 = por %p144, %p145
      %p147 = scmp.ne.s32.totalorder %s139, %s141
      %p148 = scmp.eq.s32.totalorder %s21, 1
      %p149 = por %p147, %p148
      %p150 = scmp.ne.s32.totalorder %s141, %s142
      %p151 = scmp.eq.s32.totalorder %s21, 0
      %p152 = por %p150, %p151
      %p153 = scmp.ne.s32.totalorder %s141, %s142
      %p154 = scmp.eq.s32.totalorder %s22, 1
      %p155 = por %p153, %p154
      %p157 = scmp.ne.s32.totalorder %s142, %s156
      %p158 = scmp.eq.s32.totalorder %s22, 0
      %p159 = por %p157, %p158
      %s161 = sadd.s32 %s160, 1
      %p164 = scmp.eq.s32.totalorder %s16, 1
      %p165 = scmp.ne.s32.totalorder %s160, %s162
      %p166 = scmp.eq.s32.totalorder %s16, 0
      %p167 = por %p165, %p166
      %p168 = scmp.ne.s32.totalorder %s160, %s162
      %p169 = scmp.eq.s32.totalorder %s21, 1
      %p170 = por %p168, %p169
      %p171 = scmp.ne.s32.totalorder %s162, %s163
      %p172 = scmp.eq.s32.totalorder %s21, 0
      %p173 = por %p171, %p172
      %p174 = scmp.ne.s32.totalorder %s162, %s163
      %p175 = scmp.eq.s32.totalorder %s22, 1
      %p176 = por %p174, %p175
      %p178 = scmp.ne.s32.totalorder %s163, %s177
      %p179 = scmp.eq.s32.totalorder %s22, 0
      %p180 = por %p178, %p179
      %s181 = ssub.s32 %s16, %s23
      %p182 = scmp.eq.s32.totalorder %s181, 0
      %s184 = sadd.s32 %s183, 1
      %s185 = scalar_select %p182, %s183, %s184
      %p188 = pneg %p182
      %p189 = scmp.eq.s32.totalorder %s16, 1
      %p190 = por %p188, %p189
      %p191 = scmp.ne.s32.totalorder %s183, %s186
      %p192 = scmp.eq.s32.totalorder %s16, 0
      %p193 = por %p191, %p192
      %p194 = scmp.ne.s32.totalorder %s183, %s186
      %p195 = scmp.eq.s32.totalorder %s21, 1
      %p196 = por %p194, %p195
      %p197 = scmp.ne.s32.totalorder %s186, %s187
      %p198 = scmp.eq.s32.totalorder %s21, 0
      %p199 = por %p197, %p198
      %p200 = scmp.ne.s32.totalorder %s186, %s187
      %p201 = scmp.eq.s32.totalorder %s22, 1
      %p202 = por %p200, %p201
      %p204 = scmp.ne.s32.totalorder %s187, %s203
      %p205 = scmp.eq.s32.totalorder %s22, 0
      %p206 = por %p204, %p205
      %p207 = scmp.le.s32.totalorder 1, %s16
      %p208 = scmp.lt.s32.totalorder %s16, 3
      %p209 = pnand %p207, %p208
      %p210 = pneg %p209
      // Predicated region
      $region9: #{tpu_custom_call.1} parent=5 // pred_check
        _
      $region10: #{tpu_custom_call.1} parent=5 // pred_check_branch
        %212 = sbr.rel (%p209) target = $region12
      $region11: #{tpu_custom_call.1} parent=5 // pred_region
        %s213 = ssub.s32 %s16, 1
        // Predicated region
        $region13: #{tpu_custom_call.1} parent=11 // pred_check
          %p214 = pneg %p89
        $region14: #{tpu_custom_call.1} parent=11 // pred_check_branch
          %216 = sbr.rel (%p214) target = $region16
        $region15: #{tpu_custom_call.1} parent=11 // pred_region
          _
        $region16: #{tpu_custom_call.1} parent=11 // pred_fallthru
          _
        // Predicated region
        $region17: #{tpu_custom_call.1} parent=11 // pred_check
          %p217 = pneg %p110
        $region18: #{tpu_custom_call.1} parent=11 // pred_check_branch
          %219 = sbr.rel (%p217) target = $region20
        $region19: #{tpu_custom_call.1} parent=11 // pred_region
          _
        $region20: #{tpu_custom_call.1} parent=11 // pred_fallthru
          _
        // Predicated region
        $region21: #{tpu_custom_call.1} parent=11 // pred_check
          %p220 = pneg %p131
        $region22: #{tpu_custom_call.1} parent=11 // pred_check_branch
          %222 = sbr.rel (%p220) target = $region24
        $region23: #{tpu_custom_call.1} parent=11 // pred_region
          _
        $region24: #{tpu_custom_call.1} parent=11 // pred_fallthru
          _
        // Predicated region
        $region25: #{tpu_custom_call.1} parent=11 // pred_check
          %p223 = pneg %p152
        $region26: #{tpu_custom_call.1} parent=11 // pred_check_branch
          %225 = sbr.rel (%p223) target = $region28
        $region27: #{tpu_custom_call.1} parent=11 // pred_region
          _
        $region28: #{tpu_custom_call.1} parent=11 // pred_fallthru
          _
        // Predicated region
        $region29: #{tpu_custom_call.1} parent=11 // pred_check
          %p226 = pneg %p173
        $region30: #{tpu_custom_call.1} parent=11 // pred_check_branch
          %228 = sbr.rel (%p226) target = $region32
        $region31: #{tpu_custom_call.1} parent=11 // pred_region
          _
        $region32: #{tpu_custom_call.1} parent=11 // pred_fallthru
          _
      $region12: #{tpu_custom_call.1} parent=5 // pred_fallthru
        _
      %p229 = scmp.lt.s32.totalorder %s16, 2
      // Predicated region
      $region33: #{tpu_custom_call.1} parent=5 // pred_check
        %p230 = pneg %p229
      $region34: #{tpu_custom_call.1} parent=5 // pred_check_branch
        %232 = sbr.rel (%p230) target = $region36
      $region35: #{tpu_custom_call.1} parent=5 // pred_region
        // Predicated region
        $region37: #{tpu_custom_call.1} parent=35 // pred_check
          %p233 = pneg %p36
        $region38: #{tpu_custom_call.1} parent=35 // pred_check_branch
          %235 = sbr.rel (%p233) target = $region40
        $region39: #{tpu_custom_call.1} parent=35 // pred_region
          %s236 = sand.u32 %s26, 1
          %s237 = sand.u32 %s26, 1
          %s238 = smul.addr %s237, 8
          %s239 = scalar_lea.vmem [#allocation2], %s238
          %s240 = smul.addr %s16, 2
          %s241 = scalar_lea.vmem %s0, %s240
          // Predicated region
          $region41: #{tpu_custom_call.1} parent=39 // pred_check
            _
          $region42: #{tpu_custom_call.1} parent=39 // pred_check_branch
            %243 = sbr.rel (0) target = $region44
          $region43: #{tpu_custom_call.1} parent=39 // pred_region
            // Predicated region
            $region45: #{tpu_custom_call.1} parent=43 // pred_check
              _
            $region46: #{tpu_custom_call.1} parent=43 // pred_check_branch
              %245 = sbr.rel target = $region48
            $region47: #{tpu_custom_call.1} parent=43 // pred_region
              // Predicated region
              $region60: #{tpu_custom_call.1} parent=47 // pred_check
                _
              $region61: #{tpu_custom_call.1} parent=47 // pred_check_branch
                %266 = sbr.rel (0) target = $region63
              $region62: #{tpu_custom_call.1} parent=47 // pred_region
                loop: start=0, step=1, limit=1
                $region64: #{tpu_custom_call.1} parent=62 // loop_pre_header
                  _
                $region65: #{tpu_custom_call.1} parent=62 // loop_header
                  %s268 = sphi 0, %s272
                  %p269 = scmp.ge.s32.totalorder %s268, 1
                  %s273 = sphi %s241, %s241
                  %s274 = sphi %s239, %s239
                $region66: #{tpu_custom_call.1} parent=62 // loop_header_branch
                  %271 = sbr.rel (%p269) target = $region70
                $region67: #{tpu_custom_call.1} parent=62 // loop_body
                  _
                $region68: #{tpu_custom_call.1} parent=62 // loop_footer
                  %s272 = sadd.s32 1, %s268
                $region69: #{tpu_custom_call.1} parent=62 // loop_footer_branch
                  %267 = sbr.rel target = $region65
                $region70: #{tpu_custom_call.1} parent=62 // loop_exit
                  _
                loop: start=0, step=1, limit=1
                $region71: #{tpu_custom_call.1} parent=62 // loop_pre_header
                  _
                $region72: #{tpu_custom_call.1} parent=62 // loop_header
                  %s277 = sphi 0, %s281
                  %p278 = scmp.ge.s32.totalorder %s277, 1
                  %s282 = sphi %s241, %s241
                  %s283 = sphi %s239, %s239
                $region73: #{tpu_custom_call.1} parent=62 // loop_header_branch
                  %280 = sbr.rel (%p278) target = $region77
                $region74: #{tpu_custom_call.1} parent=62 // loop_body
                  %v284 = vld [vmem:[%s282] sm:$0x3]
                  %285 = vst [vmem:[%s283] sm:$0x3] %v284
                  %v286 = vld [vmem:[%s282 + $0x4] sm:$0x3]
                  %287 = vst [vmem:[%s283 + $0x2] sm:$0x3] %v286
                  %v288 = vld [vmem:[%s282 + $0x8] sm:$0x3]
                  %289 = vst [vmem:[%s283 + $0x4] sm:$0x3] %v288
                  %v290 = vld [vmem:[%s282 + $0xc] sm:$0x3]
                  %291 = vst [vmem:[%s283 + $0x6] sm:$0x3] %v290
                $region75: #{tpu_custom_call.1} parent=62 // loop_footer
                  %s281 = sadd.s32 1, %s277
                $region76: #{tpu_custom_call.1} parent=62 // loop_footer_branch
                  %276 = sbr.rel target = $region72
                $region77: #{tpu_custom_call.1} parent=62 // loop_exit
                  _
              $region63: #{tpu_custom_call.1} parent=47 // pred_fallthru
                _
            $region48: #{tpu_custom_call.1} parent=43 // pred_fallthru
              _
            // Predicated region
            $region49: #{tpu_custom_call.1} parent=43 // pred_check
              _
            $region50: #{tpu_custom_call.1} parent=43 // pred_check_branch
              %247 = sbr.rel (0) target = $region52
            $region51: #{tpu_custom_call.1} parent=43 // pred_region
              loop: start=0, step=1, limit=1
              $region53: #{tpu_custom_call.1} parent=51 // loop_pre_header
                _
              $region54: #{tpu_custom_call.1} parent=51 // loop_header
                %s250 = sphi 0, %s254
                %p251 = scmp.ge.s32.totalorder %s250, 1
                %s255 = sphi %s241, %s241
                %s256 = sphi %s239, %s239
              $region55: #{tpu_custom_call.1} parent=51 // loop_header_branch
                %253 = sbr.rel (%p251) target = $region59
              $region56: #{tpu_custom_call.1} parent=51 // loop_body
                %v257 = vld [vmem:[%s255] sm:$0x3]
                %258 = vst [vmem:[%s256] sm:$0x3] %v257
                %v259 = vld [vmem:[%s255 + $0x4] sm:$0x3]
                %260 = vst [vmem:[%s256 + $0x2] sm:$0x3] %v259
                %v261 = vld [vmem:[%s255 + $0x8] sm:$0x3]
                %262 = vst [vmem:[%s256 + $0x4] sm:$0x3] %v261
                %v263 = vld [vmem:[%s255 + $0xc] sm:$0x3]
                %264 = vst [vmem:[%s256 + $0x6] sm:$0x3] %v263
              $region57: #{tpu_custom_call.1} parent=51 // loop_footer
                %s254 = sadd.s32 1, %s250
              $region58: #{tpu_custom_call.1} parent=51 // loop_footer_branch
                %249 = sbr.rel target = $region54
              $region59: #{tpu_custom_call.1} parent=51 // loop_exit
                _
            $region52: #{tpu_custom_call.1} parent=43 // pred_fallthru
              _
          $region44: #{tpu_custom_call.1} parent=39 // pred_fallthru
            _
          %292 = vnop
        $region40: #{tpu_custom_call.1} parent=35 // pred_fallthru
          _
        // Predicated region
        $region78: #{tpu_custom_call.1} parent=35 // pred_check
          %p293 = pneg %p62
        $region79: #{tpu_custom_call.1} parent=35 // pred_check_branch
          %295 = sbr.rel (%p293) target = $region81
        $region80: #{tpu_custom_call.1} parent=35 // pred_region
          %s296 = sand.u32 %s52, 1
          %s297 = sand.u32 %s52, 1
          %s298 = smul.addr %s297, 12
          %s299 = scalar_lea.vmem [#allocation3], %s298
          %s300 = smul.addr %s16, 2
          %s301 = scalar_lea.vmem %s1, %s300
          // Predicated region
          $region82: #{tpu_custom_call.1} parent=80 // pred_check
            _
          $region83: #{tpu_custom_call.1} parent=80 // pred_check_branch
            %303 = sbr.rel (0) target = $region85
          $region84: #{tpu_custom_call.1} parent=80 // pred_region
            // Predicated region
            $region86: #{tpu_custom_call.1} parent=84 // pred_check
              _
            $region87: #{tpu_custom_call.1} parent=84 // pred_check_branch
              %305 = sbr.rel target = $region89
            $region88: #{tpu_custom_call.1} parent=84 // pred_region
              // Predicated region
              $region101: #{tpu_custom_call.1} parent=88 // pred_check
                _
              $region102: #{tpu_custom_call.1} parent=88 // pred_check_branch
                %330 = sbr.rel (0) target = $region104
              $region103: #{tpu_custom_call.1} parent=88 // pred_region
                loop: start=0, step=1, limit=1
                $region105: #{tpu_custom_call.1} parent=103 // loop_pre_header
                  _
                $region106: #{tpu_custom_call.1} parent=103 // loop_header
                  %s332 = sphi 0, %s336
                  %p333 = scmp.ge.s32.totalorder %s332, 1
                  %s337 = sphi %s301, %s301
                  %s338 = sphi %s299, %s299
                $region107: #{tpu_custom_call.1} parent=103 // loop_header_branch
                  %335 = sbr.rel (%p333) target = $region111
                $region108: #{tpu_custom_call.1} parent=103 // loop_body
                  _
                $region109: #{tpu_custom_call.1} parent=103 // loop_footer
                  %s336 = sadd.s32 1, %s332
                $region110: #{tpu_custom_call.1} parent=103 // loop_footer_branch
                  %331 = sbr.rel target = $region106
                $region111: #{tpu_custom_call.1} parent=103 // loop_exit
                  _
                loop: start=0, step=1, limit=1
                $region112: #{tpu_custom_call.1} parent=103 // loop_pre_header
                  _
                $region113: #{tpu_custom_call.1} parent=103 // loop_header
                  %s341 = sphi 0, %s345
                  %p342 = scmp.ge.s32.totalorder %s341, 1
                  %s346 = sphi %s301, %s301
                  %s347 = sphi %s299, %s299
                $region114: #{tpu_custom_call.1} parent=103 // loop_header_branch
                  %344 = sbr.rel (%p342) target = $region118
                $region115: #{tpu_custom_call.1} parent=103 // loop_body
                  %v348 = vld [vmem:[%s346] sm:$0x3]
                  %349 = vst [vmem:[%s347] sm:$0x3] %v348
                  %v350 = vld [vmem:[%s346 + $0x4] sm:$0x3]
                  %351 = vst [vmem:[%s347 + $0x2] sm:$0x3] %v350
                  %v352 = vld [vmem:[%s346 + $0x8] sm:$0x3]
                  %353 = vst [vmem:[%s347 + $0x4] sm:$0x3] %v352
                  %v354 = vld [vmem:[%s346 + $0xc] sm:$0x3]
                  %355 = vst [vmem:[%s347 + $0x6] sm:$0x3] %v354
                  %v356 = vld [vmem:[%s346 + $0x10] sm:$0x3]
                  %357 = vst [vmem:[%s347 + $0x8] sm:$0x3] %v356
                  %v358 = vld [vmem:[%s346 + $0x14] sm:$0x3]
                  %359 = vst [vmem:[%s347 + $0xa] sm:$0x3] %v358
                $region116: #{tpu_custom_call.1} parent=103 // loop_footer
                  %s345 = sadd.s32 1, %s341
                $region117: #{tpu_custom_call.1} parent=103 // loop_footer_branch
                  %340 = sbr.rel target = $region113
                $region118: #{tpu_custom_call.1} parent=103 // loop_exit
                  _
              $region104: #{tpu_custom_call.1} parent=88 // pred_fallthru
                _
            $region89: #{tpu_custom_call.1} parent=84 // pred_fallthru
              _
            // Predicated region
            $region90: #{tpu_custom_call.1} parent=84 // pred_check
              _
            $region91: #{tpu_custom_call.1} parent=84 // pred_check_branch
              %307 = sbr.rel (0) target = $region93
            $region92: #{tpu_custom_call.1} parent=84 // pred_region
              loop: start=0, step=1, limit=1
              $region94: #{tpu_custom_call.1} parent=92 // loop_pre_header
                _
              $region95: #{tpu_custom_call.1} parent=92 // loop_header
                %s310 = sphi 0, %s314
                %p311 = scmp.ge.s32.totalorder %s310, 1
                %s315 = sphi %s301, %s301
                %s316 = sphi %s299, %s299
              $region96: #{tpu_custom_call.1} parent=92 // loop_header_branch
                %313 = sbr.rel (%p311) target = $region100
              $region97: #{tpu_custom_call.1} parent=92 // loop_body
                %v317 = vld [vmem:[%s315] sm:$0x3]
                %318 = vst [vmem:[%s316] sm:$0x3] %v317
                %v319 = vld [vmem:[%s315 + $0x4] sm:$0x3]
                %320 = vst [vmem:[%s316 + $0x2] sm:$0x3] %v319
                %v321 = vld [vmem:[%s315 + $0x8] sm:$0x3]
                %322 = vst [vmem:[%s316 + $0x4] sm:$0x3] %v321
                %v323 = vld [vmem:[%s315 + $0xc] sm:$0x3]
                %324 = vst [vmem:[%s316 + $0x6] sm:$0x3] %v323
                %v325 = vld [vmem:[%s315 + $0x10] sm:$0x3]
                %326 = vst [vmem:[%s316 + $0x8] sm:$0x3] %v325
                %v327 = vld [vmem:[%s315 + $0x14] sm:$0x3]
                %328 = vst [vmem:[%s316 + $0xa] sm:$0x3] %v327
              $region98: #{tpu_custom_call.1} parent=92 // loop_footer
                %s314 = sadd.s32 1, %s310
              $region99: #{tpu_custom_call.1} parent=92 // loop_footer_branch
                %309 = sbr.rel target = $region95
              $region100: #{tpu_custom_call.1} parent=92 // loop_exit
                _
            $region93: #{tpu_custom_call.1} parent=84 // pred_fallthru
              _
          $region85: #{tpu_custom_call.1} parent=80 // pred_fallthru
            _
          %360 = vnop
        $region81: #{tpu_custom_call.1} parent=35 // pred_fallthru
          _
      $region36: #{tpu_custom_call.1} parent=5 // pred_fallthru
        _
      %p361 = scmp.le.s32.totalorder 1, %s16
      %p362 = scmp.lt.s32.totalorder %s16, 3
      %p363 = pnand %p361, %p362
      %p364 = pneg %p363
      // Predicated region
      $region119: #{tpu_custom_call.1} parent=5 // pred_check
        _
      $region120: #{tpu_custom_call.1} parent=5 // pred_check_branch
        %366 = sbr.rel (%p363) target = $region122
      $region121: #{tpu_custom_call.1} parent=5 // pred_region
        %s367 = ssub.s32 %s16, 1
        %s368 = sand.u32 %s29, 1
        %s369 = sand.u32 %s29, 1
        %s370 = smul.addr %s369, 8
        %s371 = scalar_lea.vmem [#allocation2], %s370
        // Predicated region
        $region123: #{tpu_custom_call.1} parent=121 // pred_check
          %p372 = pneg %p42
        $region124: #{tpu_custom_call.1} parent=121 // pred_check_branch
          %374 = sbr.rel (%p372) target = $region126
        $region125: #{tpu_custom_call.1} parent=121 // pred_region
          _
        $region126: #{tpu_custom_call.1} parent=121 // pred_fallthru
          _
        %s375 = sand.u32 %s55, 1
        %s376 = sand.u32 %s55, 1
        %s377 = smul.addr %s376, 12
        %s378 = scalar_lea.vmem [#allocation3], %s377
        // Predicated region
        $region127: #{tpu_custom_call.1} parent=121 // pred_check
          %p379 = pneg %p68
        $region128: #{tpu_custom_call.1} parent=121 // pred_check_branch
          %381 = sbr.rel (%p379) target = $region130
        $region129: #{tpu_custom_call.1} parent=121 // pred_region
          _
        $region130: #{tpu_custom_call.1} parent=121 // pred_fallthru
          _
        %s382 = sand.u32 %s29, 1
        %s383 = sand.u32 %s29, 1
        %s384 = smul.addr %s383, 8
        %s385 = scalar_lea.vmem [#allocation2], %s384
        %p386 = pneg %p42
        %p387 = pneg %p39
        %s388 = sand.u32 %s55, 1
        %s389 = sand.u32 %s55, 1
        %s390 = smul.addr %s389, 12
        %s391 = scalar_lea.vmem [#allocation3], %s390
        %p392 = pneg %p68
        %p393 = pneg %p65
        %p394 = pneg %p89
        %p395 = pneg %p86
        %p396 = pneg %p110
        %p397 = pneg %p107
        %p398 = pneg %p131
        %p399 = pneg %p128
        %p400 = pneg %p152
        %p401 = pneg %p149
        %p402 = pneg %p173
        %p403 = pneg %p170
        %p404 = pneg %p199
        %p405 = pneg %p196
        %s406 = sand.u32 %s186, 1
        %s407 = scalar_lea.sflag [#allocation5], %s406
        %s408 = sand.u32 %s186, 1
        %s409 = smul.addr %s408, 8
        %s410 = scalar_lea.vmem [#allocation4], %s409
        %v411 = vld [vmem:[%s2] sm:$0x3]
        %vm412 = vcmp.gt.f32.partialorder %v411, 0.5
        %s413 = scalar_lea.vmem %s2, 2
        %v414 = vld [vmem:[%s413] sm:$0x3]
        %vm415 = vcmp.gt.f32.partialorder %v414, 0.5
        %s416 = scalar_lea.vmem %s2, 4
        %v417 = vld [vmem:[%s416] sm:$0x3]
        %vm418 = vcmp.gt.f32.partialorder %v417, 0.5
        %s419 = scalar_lea.vmem %s2, 6
        %v420 = vld [vmem:[%s419] sm:$0x3]
        %vm421 = vcmp.gt.f32.partialorder %v420, 0.5
        %s422 = scalar_lea.vmem %s2, 10
        %v423 = vld [vmem:[%s422] sm:$0x3]
        %vm424 = vcmp.gt.f32.partialorder %v423, 0.5
        %s425 = scalar_lea.vmem %s2, 12
        %v426 = vld [vmem:[%s425] sm:$0x3]
        %vm427 = vcmp.gt.f32.partialorder %v426, 0.5
        %s428 = scalar_lea.vmem %s2, 14
        %v429 = vld [vmem:[%s428] sm:$0x3]
        %vm430 = vcmp.gt.f32.partialorder %v429, 0.5
        %s431 = scalar_lea.vmem %s2, 16
        %v432 = vld [vmem:[%s431] sm:$0x3]
        %vm433 = vcmp.gt.f32.partialorder %v432, 0.5
        %v434 = vld [vmem:[%s4] sm:$0xf]
        %436 = vset.pattern.permute.xlu0 0
        %437 = vperm.xlu0 %436, %v434
        %v438 = vpop.permute.xlu0 %437
        %v440 = vadd.f32 %v438, 0.0
        %v441 = vld [vmem:[%s371] sm:$0x3]
        %v443 = vlaneseq
        %v444 = vshrl.u32 %v443, 7
        %v445 = vsub.s32 0, %v444
        %v446 = vrot.slane %v441, %v445
        %v447 = vlaneseq
        %v448 = vshrl.u32 %v447, 7
        %v449 = vsub.s32 1, %v448
        %v450 = vrot.slane %v441, %v449
        %453 = vrot.lane.b32.xlu0 %v446, 17
        %v454 = vpop.permute.xlu0 %453
        %455 = vrot.lane.b32.xlu0 %v450, 17
        %v456 = vpop.permute.xlu0 %455
        %v457 = vlaneseq
        %v458 = vand.u32 %v457, 127
        %vm459 = vcmp.lt.s32.totalorder %v458, 17
        %v460 = vsel %vm459, %v454, %v456
        %v461 = vsel %vm459, %v456, %v454
        %v464 = vcombine.low %v461, %v460
        %v466 = vunpack.c.l.s4 1966171168
        %v467 = vunpack.c.0.s8 %v466
        %v468 = vlaneseq
        %v469 = vshrl.u32 %v468, 7
        %v470 = vsub.s32 %v467, %v469
        %v471 = vrot.slane %v464, %v470
        %v473 = vunpack.c.l.s4 1966171168
        %v474 = vunpack.c.0.s8 %v473
        %v475 = vlaneseq
        %v476 = vshrl.u32 %v475, 7
        %v477 = vsub.s32 %v474, %v476
        %v478 = vrot.slane %v471, %v477
        %v480 = vsel %vm412, %v478, 0.0
        %v481 = vld [vmem:[%s3] sm:$0xf]
        %483 = vset.pattern.permute.xlu0 0
        %484 = vperm.xlu0 %483, %v481
        %v485 = vpop.permute.xlu0 %484
        %v488 = vlaneseq
        %v489 = vshrl.u32 %v488, 7
        %v490 = vsub.s32 0, %v489
        %v491 = vrot.slane %v480, %v490
        %v492 = vlaneseq
        %v493 = vshrl.u32 %v492, 7
        %v494 = vsub.s32 1, %v493
        %v495 = vrot.slane %v480, %v494
        %v498 = vmul.f32 %v485, %v491
        %v499 = vmul.f32 %v485, %v495
        %v500 = vadd.f32 %v440, %v498
        %v501 = vadd.f32 %v440, %v499
        %502 = vrot.lane.b32.xlu0 %v446, 16
        %v503 = vpop.permute.xlu0 %502
        %504 = vrot.lane.b32.xlu0 %v450, 16
        %v505 = vpop.permute.xlu0 %504
        %vm506 = vcmp.lt.s32.totalorder %v458, 16
        %v507 = vsel %vm506, %v503, %v505
        %v508 = vsel %vm506, %v505, %v503
        %v511 = vcombine.low %v508, %v507
        %v513 = vunpack.c.l.s4 1966171168
        %v514 = vunpack.c.0.s8 %v513
        %v515 = vlaneseq
        %v516 = vshrl.u32 %v515, 7
        %v517 = vsub.s32 %v514, %v516
        %v518 = vrot.slane %v511, %v517
        %v520 = vunpack.c.l.s4 1966171168
        %v521 = vunpack.c.0.s8 %v520
        %v522 = vlaneseq
        %v523 = vshrl.u32 %v522, 7
        %v524 = vsub.s32 %v521, %v523
        %v525 = vrot.slane %v518, %v524
        %v527 = vsel %vm415, %v525, 0.0
        %s528 = scalar_lea.vmem %s3, 4
        %v529 = vld [vmem:[%s528] sm:$0xf]
        %531 = vset.pattern.permute.xlu0 0
        %532 = vperm.xlu0 %531, %v529
        %v533 = vpop.permute.xlu0 %532
        %v536 = vlaneseq
        %v537 = vshrl.u32 %v536, 7
        %v538 = vsub.s32 0, %v537
        %v539 = vrot.slane %v527, %v538
        %v540 = vlaneseq
        %v541 = vshrl.u32 %v540, 7
        %v542 = vsub.s32 1, %v541
        %v543 = vrot.slane %v527, %v542
        %v546 = vmul.f32 %v533, %v539
        %v547 = vmul.f32 %v533, %v543
        %v548 = vadd.f32 %v500, %v546
        %v549 = vadd.f32 %v501, %v547
        %550 = vrot.lane.b32.xlu0 %v446, 15
        %v551 = vpop.permute.xlu0 %550
        %552 = vrot.lane.b32.xlu0 %v450, 15
        %v553 = vpop.permute.xlu0 %552
        %vm554 = vcmp.lt.s32.totalorder %v458, 15
        %v555 = vsel %vm554, %v551, %v553
        %v556 = vsel %vm554, %v553, %v551
        %v559 = vcombine.low %v556, %v555
        %v561 = vunpack.c.l.s4 1966171168
        %v562 = vunpack.c.0.s8 %v561
        %v563 = vlaneseq
        %v564 = vshrl.u32 %v563, 7
        %v565 = vsub.s32 %v562, %v564
        %v566 = vrot.slane %v559, %v565
        %v568 = vunpack.c.l.s4 1966171168
        %v569 = vunpack.c.0.s8 %v568
        %v570 = vlaneseq
        %v571 = vshrl.u32 %v570, 7
        %v572 = vsub.s32 %v569, %v571
        %v573 = vrot.slane %v566, %v572
        %v575 = vsel %vm418, %v573, 0.0
        %s576 = scalar_lea.vmem %s3, 8
        %v577 = vld [vmem:[%s576] sm:$0xf]
        %579 = vset.pattern.permute.xlu0 0
        %580 = vperm.xlu0 %579, %v577
        %v581 = vpop.permute.xlu0 %580
        %v584 = vlaneseq
        %v585 = vshrl.u32 %v584, 7
        %v586 = vsub.s32 0, %v585
        %v587 = vrot.slane %v575, %v586
        %v588 = vlaneseq
        %v589 = vshrl.u32 %v588, 7
        %v590 = vsub.s32 1, %v589
        %v591 = vrot.slane %v575, %v590
        %v594 = vmul.f32 %v581, %v587
        %v595 = vmul.f32 %v581, %v591
        %v596 = vadd.f32 %v548, %v594
        %v597 = vadd.f32 %v549, %v595
        %598 = vrot.lane.b32.xlu0 %v446, 1
        %v599 = vpop.permute.xlu0 %598
        %600 = vrot.lane.b32.xlu0 %v450, 1
        %v601 = vpop.permute.xlu0 %600
        %vm602 = vcmp.lt.s32.totalorder %v458, 1
        %v603 = vsel %vm602, %v599, %v601
        %v604 = vsel %vm602, %v601, %v599
        %v607 = vcombine.low %v604, %v603
        %v609 = vunpack.c.l.s4 1966171168
        %v610 = vunpack.c.0.s8 %v609
        %v611 = vlaneseq
        %v612 = vshrl.u32 %v611, 7
        %v613 = vsub.s32 %v610, %v612
        %v614 = vrot.slane %v607, %v613
        %v616 = vunpack.c.l.s4 1966171168
        %v617 = vunpack.c.0.s8 %v616
        %v618 = vlaneseq
        %v619 = vshrl.u32 %v618, 7
        %v620 = vsub.s32 %v617, %v619
        %v621 = vrot.slane %v614, %v620
        %v623 = vsel %vm421, %v621, 0.0
        %s624 = scalar_lea.vmem %s3, 12
        %v625 = vld [vmem:[%s624] sm:$0xf]
        %627 = vset.pattern.permute.xlu0 0
        %628 = vperm.xlu0 %627, %v625
        %v629 = vpop.permute.xlu0 %628
        %v632 = vlaneseq
        %v633 = vshrl.u32 %v632, 7
        %v634 = vsub.s32 0, %v633
        %v635 = vrot.slane %v623, %v634
        %v636 = vlaneseq
        %v637 = vshrl.u32 %v636, 7
        %v638 = vsub.s32 1, %v637
        %v639 = vrot.slane %v623, %v638
        %v642 = vmul.f32 %v629, %v635
        %v643 = vmul.f32 %v629, %v639
        %v644 = vadd.f32 %v596, %v642
        %v645 = vadd.f32 %v597, %v643
        %s646 = scalar_lea.vmem %s3, 16
        %v647 = vld [vmem:[%s646] sm:$0xf]
        %649 = vset.pattern.permute.xlu0 0
        %650 = vperm.xlu0 %649, %v647
        %v651 = vpop.permute.xlu0 %650
        %v653 = vmul.f32 %v651, %v446
        %v654 = vmul.f32 %v651, %v450
        %v655 = vadd.f32 %v644, %v653
        %v656 = vadd.f32 %v645, %v654
        %657 = vrot.lane.b32.xlu0 %v446, 127
        %v658 = vpop.permute.xlu0 %657
        %659 = vrot.lane.b32.xlu0 %v450, 127
        %v660 = vpop.permute.xlu0 %659
        %vm661 = vcmp.lt.s32.totalorder %v458, 127
        %v662 = vsel %vm661, %v658, %v660
        %v663 = vsel %vm661, %v660, %v658
        %v666 = vcombine.low %v662, %v663
        %v668 = vunpack.c.l.s4 1966171168
        %v669 = vunpack.c.0.s8 %v668
        %v670 = vlaneseq
        %v671 = vshrl.u32 %v670, 7
        %v672 = vsub.s32 %v669, %v671
        %v673 = vrot.slane %v666, %v672
        %v675 = vunpack.c.l.s4 1966171168
        %v676 = vunpack.c.0.s8 %v675
        %v677 = vlaneseq
        %v678 = vshrl.u32 %v677, 7
        %v679 = vsub.s32 %v676, %v678
        %v680 = vrot.slane %v673, %v679
        %v682 = vsel %vm424, %v680, 0.0
        %s683 = scalar_lea.vmem %s3, 20
        %v684 = vld [vmem:[%s683] sm:$0xf]
        %686 = vset.pattern.permute.xlu0 0
        %687 = vperm.xlu0 %686, %v684
        %v688 = vpop.permute.xlu0 %687
        %v691 = vlaneseq
        %v692 = vshrl.u32 %v691, 7
        %v693 = vsub.s32 0, %v692
        %v694 = vrot.slane %v682, %v693
        %v695 = vlaneseq
        %v696 = vshrl.u32 %v695, 7
        %v697 = vsub.s32 1, %v696
        %v698 = vrot.slane %v682, %v697
        %v701 = vmul.f32 %v688, %v694
        %v702 = vmul.f32 %v688, %v698
        %v703 = vadd.f32 %v655, %v701
        %v704 = vadd.f32 %v656, %v702
        %705 = vrot.lane.b32.xlu0 %v446, 113
        %v706 = vpop.permute.xlu0 %705
        %707 = vrot.lane.b32.xlu0 %v450, 113
        %v708 = vpop.permute.xlu0 %707
        %vm709 = vcmp.lt.s32.totalorder %v458, 113
        %v710 = vsel %vm709, %v706, %v708
        %v711 = vsel %vm709, %v708, %v706
        %v714 = vcombine.low %v710, %v711
        %v716 = vunpack.c.l.s4 1966171168
        %v717 = vunpack.c.0.s8 %v716
        %v718 = vlaneseq
        %v719 = vshrl.u32 %v718, 7
        %v720 = vsub.s32 %v717, %v719
        %v721 = vrot.slane %v714, %v720
        %v723 = vunpack.c.l.s4 1966171168
        %v724 = vunpack.c.0.s8 %v723
        %v725 = vlaneseq
        %v726 = vshrl.u32 %v725, 7
        %v727 = vsub.s32 %v724, %v726
        %v728 = vrot.slane %v721, %v727
        %v730 = vsel %vm427, %v728, 0.0
        %s731 = scalar_lea.vmem %s3, 24
        %v732 = vld [vmem:[%s731] sm:$0xf]
        %734 = vset.pattern.permute.xlu0 0
        %735 = vperm.xlu0 %734, %v732
        %v736 = vpop.permute.xlu0 %735
        %v739 = vlaneseq
        %v740 = vshrl.u32 %v739, 7
        %v741 = vsub.s32 0, %v740
        %v742 = vrot.slane %v730, %v741
        %v743 = vlaneseq
        %v744 = vshrl.u32 %v743, 7
        %v745 = vsub.s32 1, %v744
        %v746 = vrot.slane %v730, %v745
        %v749 = vmul.f32 %v736, %v742
        %v750 = vmul.f32 %v736, %v746
        %v751 = vadd.f32 %v703, %v749
        %v752 = vadd.f32 %v704, %v750
        %753 = vrot.lane.b32.xlu0 %v446, 112
        %v754 = vpop.permute.xlu0 %753
        %755 = vrot.lane.b32.xlu0 %v450, 112
        %v756 = vpop.permute.xlu0 %755
        %vm757 = vcmp.lt.s32.totalorder %v458, 112
        %v758 = vsel %vm757, %v754, %v756
        %v759 = vsel %vm757, %v756, %v754
        %v762 = vcombine.low %v758, %v759
        %v764 = vunpack.c.l.s4 1966171168
        %v765 = vunpack.c.0.s8 %v764
        %v766 = vlaneseq
        %v767 = vshrl.u32 %v766, 7
        %v768 = vsub.s32 %v765, %v767
        %v769 = vrot.slane %v762, %v768
        %v771 = vunpack.c.l.s4 1966171168
        %v772 = vunpack.c.0.s8 %v771
        %v773 = vlaneseq
        %v774 = vshrl.u32 %v773, 7
        %v775 = vsub.s32 %v772, %v774
        %v776 = vrot.slane %v769, %v775
        %v778 = vsel %vm430, %v776, 0.0
        %s779 = scalar_lea.vmem %s3, 28
        %v780 = vld [vmem:[%s779] sm:$0xf]
        %782 = vset.pattern.permute.xlu0 0
        %783 = vperm.xlu0 %782, %v780
        %v784 = vpop.permute.xlu0 %783
        %v787 = vlaneseq
        %v788 = vshrl.u32 %v787, 7
        %v789 = vsub.s32 0, %v788
        %v790 = vrot.slane %v778, %v789
        %v791 = vlaneseq
        %v792 = vshrl.u32 %v791, 7
        %v793 = vsub.s32 1, %v792
        %v794 = vrot.slane %v778, %v793
        %v797 = vmul.f32 %v784, %v790
        %v798 = vmul.f32 %v784, %v794
        %v799 = vadd.f32 %v751, %v797
        %v800 = vadd.f32 %v752, %v798
        %801 = vrot.lane.b32.xlu0 %v446, 111
        %v802 = vpop.permute.xlu0 %801
        %803 = vrot.lane.b32.xlu0 %v450, 111
        %v804 = vpop.permute.xlu0 %803
        %vm805 = vcmp.lt.s32.totalorder %v458, 111
        %v806 = vsel %vm805, %v802, %v804
        %v807 = vsel %vm805, %v804, %v802
        %v810 = vcombine.low %v806, %v807
        %v812 = vunpack.c.l.s4 1966171168
        %v813 = vunpack.c.0.s8 %v812
        %v814 = vlaneseq
        %v815 = vshrl.u32 %v814, 7
        %v816 = vsub.s32 %v813, %v815
        %v817 = vrot.slane %v810, %v816
        %v819 = vunpack.c.l.s4 1966171168
        %v820 = vunpack.c.0.s8 %v819
        %v821 = vlaneseq
        %v822 = vshrl.u32 %v821, 7
        %v823 = vsub.s32 %v820, %v822
        %v824 = vrot.slane %v817, %v823
        %v826 = vsel %vm433, %v824, 0.0
        %s827 = scalar_lea.vmem %s3, 32
        %v828 = vld [vmem:[%s827] sm:$0xf]
        %830 = vset.pattern.permute.xlu0 0
        %831 = vperm.xlu0 %830, %v828
        %v832 = vpop.permute.xlu0 %831
        %v835 = vlaneseq
        %v836 = vshrl.u32 %v835, 7
        %v837 = vsub.s32 0, %v836
        %v838 = vrot.slane %v826, %v837
        %v839 = vlaneseq
        %v840 = vshrl.u32 %v839, 7
        %v841 = vsub.s32 1, %v840
        %v842 = vrot.slane %v826, %v841
        %v845 = vmul.f32 %v832, %v838
        %v846 = vmul.f32 %v832, %v842
        %v847 = vadd.f32 %v799, %v845
        %v848 = vadd.f32 %v800, %v846
        %s849 = scalar_lea.vmem %s371, 2 [#allocation2]
        %v850 = vld [vmem:[%s849] sm:$0x3]
        %v852 = vlaneseq
        %v853 = vshrl.u32 %v852, 7
        %v854 = vsub.s32 0, %v853
        %v855 = vrot.slane %v850, %v854
        %v856 = vlaneseq
        %v857 = vshrl.u32 %v856, 7
        %v858 = vsub.s32 1, %v857
        %v859 = vrot.slane %v850, %v858
        %862 = vrot.lane.b32.xlu0 %v855, 17
        %v863 = vpop.permute.xlu0 %862
        %864 = vrot.lane.b32.xlu0 %v859, 17
        %v865 = vpop.permute.xlu0 %864
        %v866 = vsel %vm459, %v863, %v865
        %v867 = vsel %vm459, %v865, %v863
        %v870 = vcombine.low %v867, %v866
        %v872 = vunpack.c.l.s4 1966171168
        %v873 = vunpack.c.0.s8 %v872
        %v874 = vlaneseq
        %v875 = vshrl.u32 %v874, 7
        %v876 = vsub.s32 %v873, %v875
        %v877 = vrot.slane %v870, %v876
        %v879 = vunpack.c.l.s4 1966171168
        %v880 = vunpack.c.0.s8 %v879
        %v881 = vlaneseq
        %v882 = vshrl.u32 %v881, 7
        %v883 = vsub.s32 %v880, %v882
        %v884 = vrot.slane %v877, %v883
        %v886 = vsel %vm412, %v884, 0.0
        %s887 = scalar_lea.vmem %s3, 36
        %v888 = vld [vmem:[%s887] sm:$0xf]
        %890 = vset.pattern.permute.xlu0 0
        %891 = vperm.xlu0 %890, %v888
        %v892 = vpop.permute.xlu0 %891
        %v895 = vlaneseq
        %v896 = vshrl.u32 %v895, 7
        %v897 = vsub.s32 0, %v896
        %v898 = vrot.slane %v886, %v897
        %v899 = vlaneseq
        %v900 = vshrl.u32 %v899, 7
        %v901 = vsub.s32 1, %v900
        %v902 = vrot.slane %v886, %v901
        %v905 = vmul.f32 %v892, %v898
        %v906 = vmul.f32 %v892, %v902
        %v907 = vadd.f32 %v847, %v905
        %v908 = vadd.f32 %v848, %v906
        %909 = vrot.lane.b32.xlu0 %v855, 16
        %v910 = vpop.permute.xlu0 %909
        %911 = vrot.lane.b32.xlu0 %v859, 16
        %v912 = vpop.permute.xlu0 %911
        %v913 = vsel %vm506, %v910, %v912
        %v914 = vsel %vm506, %v912, %v910
        %v917 = vcombine.low %v914, %v913
        %v919 = vunpack.c.l.s4 1966171168
        %v920 = vunpack.c.0.s8 %v919
        %v921 = vlaneseq
        %v922 = vshrl.u32 %v921, 7
        %v923 = vsub.s32 %v920, %v922
        %v924 = vrot.slane %v917, %v923
        %v926 = vunpack.c.l.s4 1966171168
        %v927 = vunpack.c.0.s8 %v926
        %v928 = vlaneseq
        %v929 = vshrl.u32 %v928, 7
        %v930 = vsub.s32 %v927, %v929
        %v931 = vrot.slane %v924, %v930
        %v933 = vsel %vm415, %v931, 0.0
        %s934 = scalar_lea.vmem %s3, 40
        %v935 = vld [vmem:[%s934] sm:$0xf]
        %937 = vset.pattern.permute.xlu0 0
        %938 = vperm.xlu0 %937, %v935
        %v939 = vpop.permute.xlu0 %938
        %v942 = vlaneseq
        %v943 = vshrl.u32 %v942, 7
        %v944 = vsub.s32 0, %v943
        %v945 = vrot.slane %v933, %v944
        %v946 = vlaneseq
        %v947 = vshrl.u32 %v946, 7
        %v948 = vsub.s32 1, %v947
        %v949 = vrot.slane %v933, %v948
        %v952 = vmul.f32 %v939, %v945
        %v953 = vmul.f32 %v939, %v949
        %v954 = vadd.f32 %v907, %v952
        %v955 = vadd.f32 %v908, %v953
        %956 = vrot.lane.b32.xlu0 %v855, 15
        %v957 = vpop.permute.xlu0 %956
        %958 = vrot.lane.b32.xlu0 %v859, 15
        %v959 = vpop.permute.xlu0 %958
        %v960 = vsel %vm554, %v957, %v959
        %v961 = vsel %vm554, %v959, %v957
        %v964 = vcombine.low %v961, %v960
        %v966 = vunpack.c.l.s4 1966171168
        %v967 = vunpack.c.0.s8 %v966
        %v968 = vlaneseq
        %v969 = vshrl.u32 %v968, 7
        %v970 = vsub.s32 %v967, %v969
        %v971 = vrot.slane %v964, %v970
        %v973 = vunpack.c.l.s4 1966171168
        %v974 = vunpack.c.0.s8 %v973
        %v975 = vlaneseq
        %v976 = vshrl.u32 %v975, 7
        %v977 = vsub.s32 %v974, %v976
        %v978 = vrot.slane %v971, %v977
        %v980 = vsel %vm418, %v978, 0.0
        %s981 = scalar_lea.vmem %s3, 44
        %v982 = vld [vmem:[%s981] sm:$0xf]
        %984 = vset.pattern.permute.xlu0 0
        %985 = vperm.xlu0 %984, %v982
        %v986 = vpop.permute.xlu0 %985
        %v989 = vlaneseq
        %v990 = vshrl.u32 %v989, 7
        %v991 = vsub.s32 0, %v990
        %v992 = vrot.slane %v980, %v991
        %v993 = vlaneseq
        %v994 = vshrl.u32 %v993, 7
        %v995 = vsub.s32 1, %v994
        %v996 = vrot.slane %v980, %v995
        %v999 = vmul.f32 %v986, %v992
        %v1000 = vmul.f32 %v986, %v996
        %v1001 = vadd.f32 %v954, %v999
        %v1002 = vadd.f32 %v955, %v1000
        %1003 = vrot.lane.b32.xlu0 %v855, 1
        %v1004 = vpop.permute.xlu0 %1003
        %1005 = vrot.lane.b32.xlu0 %v859, 1
        %v1006 = vpop.permute.xlu0 %1005
        %v1007 = vsel %vm602, %v1004, %v1006
        %v1008 = vsel %vm602, %v1006, %v1004
        %v1011 = vcombine.low %v1008, %v1007
        %v1013 = vunpack.c.l.s4 1966171168
        %v1014 = vunpack.c.0.s8 %v1013
        %v1015 = vlaneseq
        %v1016 = vshrl.u32 %v1015, 7
        %v1017 = vsub.s32 %v1014, %v1016
        %v1018 = vrot.slane %v1011, %v1017
        %v1020 = vunpack.c.l.s4 1966171168
        %v1021 = vunpack.c.0.s8 %v1020
        %v1022 = vlaneseq
        %v1023 = vshrl.u32 %v1022, 7
        %v1024 = vsub.s32 %v1021, %v1023
        %v1025 = vrot.slane %v1018, %v1024
        %v1027 = vsel %vm421, %v1025, 0.0
        %s1028 = scalar_lea.vmem %s3, 48
        %v1029 = vld [vmem:[%s1028] sm:$0xf]
        %1031 = vset.pattern.permute.xlu0 0
        %1032 = vperm.xlu0 %1031, %v1029
        %v1033 = vpop.permute.xlu0 %1032
        %v1036 = vlaneseq
        %v1037 = vshrl.u32 %v1036, 7
        %v1038 = vsub.s32 0, %v1037
        %v1039 = vrot.slane %v1027, %v1038
        %v1040 = vlaneseq
        %v1041 = vshrl.u32 %v1040, 7
        %v1042 = vsub.s32 1, %v1041
        %v1043 = vrot.slane %v1027, %v1042
        %v1046 = vmul.f32 %v1033, %v1039
        %v1047 = vmul.f32 %v1033, %v1043
        %v1048 = vadd.f32 %v1001, %v1046
        %v1049 = vadd.f32 %v1002, %v1047
        %s1050 = scalar_lea.vmem %s3, 52
        %v1051 = vld [vmem:[%s1050] sm:$0xf]
        %1053 = vset.pattern.permute.xlu0 0
        %1054 = vperm.xlu0 %1053, %v1051
        %v1055 = vpop.permute.xlu0 %1054
        %v1057 = vmul.f32 %v1055, %v855
        %v1058 = vmul.f32 %v1055, %v859
        %v1059 = vadd.f32 %v1048, %v1057
        %v1060 = vadd.f32 %v1049, %v1058
        %1061 = vrot.lane.b32.xlu0 %v855, 127
        %v1062 = vpop.permute.xlu0 %1061
        %1063 = vrot.lane.b32.xlu0 %v859, 127
        %v1064 = vpop.permute.xlu0 %1063
        %v1065 = vsel %vm661, %v1062, %v1064
        %v1066 = vsel %vm661, %v1064, %v1062
        %v1069 = vcombine.low %v1065, %v1066
        %v1071 = vunpack.c.l.s4 1966171168
        %v1072 = vunpack.c.0.s8 %v1071
        %v1073 = vlaneseq
        %v1074 = vshrl.u32 %v1073, 7
        %v1075 = vsub.s32 %v1072, %v1074
        %v1076 = vrot.slane %v1069, %v1075
        %v1078 = vunpack.c.l.s4 1966171168
        %v1079 = vunpack.c.0.s8 %v1078
        %v1080 = vlaneseq
        %v1081 = vshrl.u32 %v1080, 7
        %v1082 = vsub.s32 %v1079, %v1081
        %v1083 = vrot.slane %v1076, %v1082
        %v1085 = vsel %vm424, %v1083, 0.0
        %s1086 = scalar_lea.vmem %s3, 56
        %v1087 = vld [vmem:[%s1086] sm:$0xf]
        %1089 = vset.pattern.permute.xlu0 0
        %1090 = vperm.xlu0 %1089, %v1087
        %v1091 = vpop.permute.xlu0 %1090
        %v1094 = vlaneseq
        %v1095 = vshrl.u32 %v1094, 7
        %v1096 = vsub.s32 0, %v1095
        %v1097 = vrot.slane %v1085, %v1096
        %v1098 = vlaneseq
        %v1099 = vshrl.u32 %v1098, 7
        %v1100 = vsub.s32 1, %v1099
        %v1101 = vrot.slane %v1085, %v1100
        %v1104 = vmul.f32 %v1091, %v1097
        %v1105 = vmul.f32 %v1091, %v1101
        %v1106 = vadd.f32 %v1059, %v1104
        %v1107 = vadd.f32 %v1060, %v1105
        %1108 = vrot.lane.b32.xlu0 %v855, 113
        %v1109 = vpop.permute.xlu0 %1108
        %1110 = vrot.lane.b32.xlu0 %v859, 113
        %v1111 = vpop.permute.xlu0 %1110
        %v1112 = vsel %vm709, %v1109, %v1111
        %v1113 = vsel %vm709, %v1111, %v1109
        %v1116 = vcombine.low %v1112, %v1113
        %v1118 = vunpack.c.l.s4 1966171168
        %v1119 = vunpack.c.0.s8 %v1118
        %v1120 = vlaneseq
        %v1121 = vshrl.u32 %v1120, 7
        %v1122 = vsub.s32 %v1119, %v1121
        %v1123 = vrot.slane %v1116, %v1122
        %v1125 = vunpack.c.l.s4 1966171168
        %v1126 = vunpack.c.0.s8 %v1125
        %v1127 = vlaneseq
        %v1128 = vshrl.u32 %v1127, 7
        %v1129 = vsub.s32 %v1126, %v1128
        %v1130 = vrot.slane %v1123, %v1129
        %v1132 = vsel %vm427, %v1130, 0.0
        %s1133 = scalar_lea.vmem %s3, 60
        %v1134 = vld [vmem:[%s1133] sm:$0xf]
        %1136 = vset.pattern.permute.xlu0 0
        %1137 = vperm.xlu0 %1136, %v1134
        %v1138 = vpop.permute.xlu0 %1137
        %v1141 = vlaneseq
        %v1142 = vshrl.u32 %v1141, 7
        %v1143 = vsub.s32 0, %v1142
        %v1144 = vrot.slane %v1132, %v1143
        %v1145 = vlaneseq
        %v1146 = vshrl.u32 %v1145, 7
        %v1147 = vsub.s32 1, %v1146
        %v1148 = vrot.slane %v1132, %v1147
        %v1151 = vmul.f32 %v1138, %v1144
        %v1152 = vmul.f32 %v1138, %v1148
        %v1153 = vadd.f32 %v1106, %v1151
        %v1154 = vadd.f32 %v1107, %v1152
        %1155 = vrot.lane.b32.xlu0 %v855, 112
        %v1156 = vpop.permute.xlu0 %1155
        %1157 = vrot.lane.b32.xlu0 %v859, 112
        %v1158 = vpop.permute.xlu0 %1157
        %v1159 = vsel %vm757, %v1156, %v1158
        %v1160 = vsel %vm757, %v1158, %v1156
        %v1163 = vcombine.low %v1159, %v1160
        %v1165 = vunpack.c.l.s4 1966171168
        %v1166 = vunpack.c.0.s8 %v1165
        %v1167 = vlaneseq
        %v1168 = vshrl.u32 %v1167, 7
        %v1169 = vsub.s32 %v1166, %v1168
        %v1170 = vrot.slane %v1163, %v1169
        %v1172 = vunpack.c.l.s4 1966171168
        %v1173 = vunpack.c.0.s8 %v1172
        %v1174 = vlaneseq
        %v1175 = vshrl.u32 %v1174, 7
        %v1176 = vsub.s32 %v1173, %v1175
        %v1177 = vrot.slane %v1170, %v1176
        %v1179 = vsel %vm430, %v1177, 0.0
        %s1180 = scalar_lea.vmem %s3, 64
        %v1181 = vld [vmem:[%s1180] sm:$0xf]
        %1183 = vset.pattern.permute.xlu0 0
        %1184 = vperm.xlu0 %1183, %v1181
        %v1185 = vpop.permute.xlu0 %1184
        %v1188 = vlaneseq
        %v1189 = vshrl.u32 %v1188, 7
        %v1190 = vsub.s32 0, %v1189
        %v1191 = vrot.slane %v1179, %v1190
        %v1192 = vlaneseq
        %v1193 = vshrl.u32 %v1192, 7
        %v1194 = vsub.s32 1, %v1193
        %v1195 = vrot.slane %v1179, %v1194
        %v1198 = vmul.f32 %v1185, %v1191
        %v1199 = vmul.f32 %v1185, %v1195
        %v1200 = vadd.f32 %v1153, %v1198
        %v1201 = vadd.f32 %v1154, %v1199
        %1202 = vrot.lane.b32.xlu0 %v855, 111
        %v1203 = vpop.permute.xlu0 %1202
        %1204 = vrot.lane.b32.xlu0 %v859, 111
        %v1205 = vpop.permute.xlu0 %1204
        %v1206 = vsel %vm805, %v1203, %v1205
        %v1207 = vsel %vm805, %v1205, %v1203
        %v1210 = vcombine.low %v1206, %v1207
        %v1212 = vunpack.c.l.s4 1966171168
        %v1213 = vunpack.c.0.s8 %v1212
        %v1214 = vlaneseq
        %v1215 = vshrl.u32 %v1214, 7
        %v1216 = vsub.s32 %v1213, %v1215
        %v1217 = vrot.slane %v1210, %v1216
        %v1219 = vunpack.c.l.s4 1966171168
        %v1220 = vunpack.c.0.s8 %v1219
        %v1221 = vlaneseq
        %v1222 = vshrl.u32 %v1221, 7
        %v1223 = vsub.s32 %v1220, %v1222
        %v1224 = vrot.slane %v1217, %v1223
        %v1226 = vsel %vm433, %v1224, 0.0
        %s1227 = scalar_lea.vmem %s3, 68
        %v1228 = vld [vmem:[%s1227] sm:$0xf]
        %1230 = vset.pattern.permute.xlu0 0
        %1231 = vperm.xlu0 %1230, %v1228
        %v1232 = vpop.permute.xlu0 %1231
        %v1235 = vlaneseq
        %v1236 = vshrl.u32 %v1235, 7
        %v1237 = vsub.s32 0, %v1236
        %v1238 = vrot.slane %v1226, %v1237
        %v1239 = vlaneseq
        %v1240 = vshrl.u32 %v1239, 7
        %v1241 = vsub.s32 1, %v1240
        %v1242 = vrot.slane %v1226, %v1241
        %v1245 = vmul.f32 %v1232, %v1238
        %v1246 = vmul.f32 %v1232, %v1242
        %v1247 = vadd.f32 %v1200, %v1245
        %v1248 = vadd.f32 %v1201, %v1246
        %s1249 = scalar_lea.vmem %s371, 4 [#allocation2]
        %v1250 = vld [vmem:[%s1249] sm:$0x3]
        %v1252 = vlaneseq
        %v1253 = vshrl.u32 %v1252, 7
        %v1254 = vsub.s32 0, %v1253
        %v1255 = vrot.slane %v1250, %v1254
        %v1256 = vlaneseq
        %v1257 = vshrl.u32 %v1256, 7
        %v1258 = vsub.s32 1, %v1257
        %v1259 = vrot.slane %v1250, %v1258
        %1262 = vrot.lane.b32.xlu0 %v1255, 17
        %v1263 = vpop.permute.xlu0 %1262
        %1264 = vrot.lane.b32.xlu0 %v1259, 17
        %v1265 = vpop.permute.xlu0 %1264
        %v1266 = vsel %vm459, %v1263, %v1265
        %v1267 = vsel %vm459, %v1265, %v1263
        %v1270 = vcombine.low %v1267, %v1266
        %v1272 = vunpack.c.l.s4 1966171168
        %v1273 = vunpack.c.0.s8 %v1272
        %v1274 = vlaneseq
        %v1275 = vshrl.u32 %v1274, 7
        %v1276 = vsub.s32 %v1273, %v1275
        %v1277 = vrot.slane %v1270, %v1276
        %v1279 = vunpack.c.l.s4 1966171168
        %v1280 = vunpack.c.0.s8 %v1279
        %v1281 = vlaneseq
        %v1282 = vshrl.u32 %v1281, 7
        %v1283 = vsub.s32 %v1280, %v1282
        %v1284 = vrot.slane %v1277, %v1283
        %v1286 = vsel %vm412, %v1284, 0.0
        %s1287 = scalar_lea.vmem %s3, 72
        %v1288 = vld [vmem:[%s1287] sm:$0xf]
        %1290 = vset.pattern.permute.xlu0 0
        %1291 = vperm.xlu0 %1290, %v1288
        %v1292 = vpop.permute.xlu0 %1291
        %v1295 = vlaneseq
        %v1296 = vshrl.u32 %v1295, 7
        %v1297 = vsub.s32 0, %v1296
        %v1298 = vrot.slane %v1286, %v1297
        %v1299 = vlaneseq
        %v1300 = vshrl.u32 %v1299, 7
        %v1301 = vsub.s32 1, %v1300
        %v1302 = vrot.slane %v1286, %v1301
        %v1305 = vmul.f32 %v1292, %v1298
        %v1306 = vmul.f32 %v1292, %v1302
        %v1307 = vadd.f32 %v1247, %v1305
        %v1308 = vadd.f32 %v1248, %v1306
        %1309 = vrot.lane.b32.xlu0 %v1255, 16
        %v1310 = vpop.permute.xlu0 %1309
        %1311 = vrot.lane.b32.xlu0 %v1259, 16
        %v1312 = vpop.permute.xlu0 %1311
        %v1313 = vsel %vm506, %v1310, %v1312
        %v1314 = vsel %vm506, %v1312, %v1310
        %v1317 = vcombine.low %v1314, %v1313
        %v1319 = vunpack.c.l.s4 1966171168
        %v1320 = vunpack.c.0.s8 %v1319
        %v1321 = vlaneseq
        %v1322 = vshrl.u32 %v1321, 7
        %v1323 = vsub.s32 %v1320, %v1322
        %v1324 = vrot.slane %v1317, %v1323
        %v1326 = vunpack.c.l.s4 1966171168
        %v1327 = vunpack.c.0.s8 %v1326
        %v1328 = vlaneseq
        %v1329 = vshrl.u32 %v1328, 7
        %v1330 = vsub.s32 %v1327, %v1329
        %v1331 = vrot.slane %v1324, %v1330
        %v1333 = vsel %vm415, %v1331, 0.0
        %s1334 = scalar_lea.vmem %s3, 76
        %v1335 = vld [vmem:[%s1334] sm:$0xf]
        %1337 = vset.pattern.permute.xlu0 0
        %1338 = vperm.xlu0 %1337, %v1335
        %v1339 = vpop.permute.xlu0 %1338
        %v1342 = vlaneseq
        %v1343 = vshrl.u32 %v1342, 7
        %v1344 = vsub.s32 0, %v1343
        %v1345 = vrot.slane %v1333, %v1344
        %v1346 = vlaneseq
        %v1347 = vshrl.u32 %v1346, 7
        %v1348 = vsub.s32 1, %v1347
        %v1349 = vrot.slane %v1333, %v1348
        %v1352 = vmul.f32 %v1339, %v1345
        %v1353 = vmul.f32 %v1339, %v1349
        %v1354 = vadd.f32 %v1307, %v1352
        %v1355 = vadd.f32 %v1308, %v1353
        %1356 = vrot.lane.b32.xlu0 %v1255, 15
        %v1357 = vpop.permute.xlu0 %1356
        %1358 = vrot.lane.b32.xlu0 %v1259, 15
        %v1359 = vpop.permute.xlu0 %1358
        %v1360 = vsel %vm554, %v1357, %v1359
        %v1361 = vsel %vm554, %v1359, %v1357
        %v1364 = vcombine.low %v1361, %v1360
        %v1366 = vunpack.c.l.s4 1966171168
        %v1367 = vunpack.c.0.s8 %v1366
        %v1368 = vlaneseq
        %v1369 = vshrl.u32 %v1368, 7
        %v1370 = vsub.s32 %v1367, %v1369
        %v1371 = vrot.slane %v1364, %v1370
        %v1373 = vunpack.c.l.s4 1966171168
        %v1374 = vunpack.c.0.s8 %v1373
        %v1375 = vlaneseq
        %v1376 = vshrl.u32 %v1375, 7
        %v1377 = vsub.s32 %v1374, %v1376
        %v1378 = vrot.slane %v1371, %v1377
        %v1380 = vsel %vm418, %v1378, 0.0
        %s1381 = scalar_lea.vmem %s3, 80
        %v1382 = vld [vmem:[%s1381] sm:$0xf]
        %1384 = vset.pattern.permute.xlu0 0
        %1385 = vperm.xlu0 %1384, %v1382
        %v1386 = vpop.permute.xlu0 %1385
        %v1389 = vlaneseq
        %v1390 = vshrl.u32 %v1389, 7
        %v1391 = vsub.s32 0, %v1390
        %v1392 = vrot.slane %v1380, %v1391
        %v1393 = vlaneseq
        %v1394 = vshrl.u32 %v1393, 7
        %v1395 = vsub.s32 1, %v1394
        %v1396 = vrot.slane %v1380, %v1395
        %v1399 = vmul.f32 %v1386, %v1392
        %v1400 = vmul.f32 %v1386, %v1396
        %v1401 = vadd.f32 %v1354, %v1399
        %v1402 = vadd.f32 %v1355, %v1400
        %1403 = vrot.lane.b32.xlu0 %v1255, 1
        %v1404 = vpop.permute.xlu0 %1403
        %1405 = vrot.lane.b32.xlu0 %v1259, 1
        %v1406 = vpop.permute.xlu0 %1405
        %v1407 = vsel %vm602, %v1404, %v1406
        %v1408 = vsel %vm602, %v1406, %v1404
        %v1411 = vcombine.low %v1408, %v1407
        %v1413 = vunpack.c.l.s4 1966171168
        %v1414 = vunpack.c.0.s8 %v1413
        %v1415 = vlaneseq
        %v1416 = vshrl.u32 %v1415, 7
        %v1417 = vsub.s32 %v1414, %v1416
        %v1418 = vrot.slane %v1411, %v1417
        %v1420 = vunpack.c.l.s4 1966171168
        %v1421 = vunpack.c.0.s8 %v1420
        %v1422 = vlaneseq
        %v1423 = vshrl.u32 %v1422, 7
        %v1424 = vsub.s32 %v1421, %v1423
        %v1425 = vrot.slane %v1418, %v1424
        %v1427 = vsel %vm421, %v1425, 0.0
        %s1428 = scalar_lea.vmem %s3, 84
        %v1429 = vld [vmem:[%s1428] sm:$0xf]
        %1431 = vset.pattern.permute.xlu0 0
        %1432 = vperm.xlu0 %1431, %v1429
        %v1433 = vpop.permute.xlu0 %1432
        %v1436 = vlaneseq
        %v1437 = vshrl.u32 %v1436, 7
        %v1438 = vsub.s32 0, %v1437
        %v1439 = vrot.slane %v1427, %v1438
        %v1440 = vlaneseq
        %v1441 = vshrl.u32 %v1440, 7
        %v1442 = vsub.s32 1, %v1441
        %v1443 = vrot.slane %v1427, %v1442
        %v1446 = vmul.f32 %v1433, %v1439
        %v1447 = vmul.f32 %v1433, %v1443
        %v1448 = vadd.f32 %v1401, %v1446
        %v1449 = vadd.f32 %v1402, %v1447
        %s1450 = scalar_lea.vmem %s3, 88
        %v1451 = vld [vmem:[%s1450] sm:$0xf]
        %1453 = vset.pattern.permute.xlu0 0
        %1454 = vperm.xlu0 %1453, %v1451
        %v1455 = vpop.permute.xlu0 %1454
        %v1457 = vmul.f32 %v1455, %v1255
        %v1458 = vmul.f32 %v1455, %v1259
        %v1459 = vadd.f32 %v1448, %v1457
        %v1460 = vadd.f32 %v1449, %v1458
        %1461 = vrot.lane.b32.xlu0 %v1255, 127
        %v1462 = vpop.permute.xlu0 %1461
        %1463 = vrot.lane.b32.xlu0 %v1259, 127
        %v1464 = vpop.permute.xlu0 %1463
        %v1465 = vsel %vm661, %v1462, %v1464
        %v1466 = vsel %vm661, %v1464, %v1462
        %v1469 = vcombine.low %v1465, %v1466
        %v1471 = vunpack.c.l.s4 1966171168
        %v1472 = vunpack.c.0.s8 %v1471
        %v1473 = vlaneseq
        %v1474 = vshrl.u32 %v1473, 7
        %v1475 = vsub.s32 %v1472, %v1474
        %v1476 = vrot.slane %v1469, %v1475
        %v1478 = vunpack.c.l.s4 1966171168
        %v1479 = vunpack.c.0.s8 %v1478
        %v1480 = vlaneseq
        %v1481 = vshrl.u32 %v1480, 7
        %v1482 = vsub.s32 %v1479, %v1481
        %v1483 = vrot.slane %v1476, %v1482
        %v1485 = vsel %vm424, %v1483, 0.0
        %s1486 = scalar_lea.vmem %s3, 92
        %v1487 = vld [vmem:[%s1486] sm:$0xf]
        %1489 = vset.pattern.permute.xlu0 0
        %1490 = vperm.xlu0 %1489, %v1487
        %v1491 = vpop.permute.xlu0 %1490
        %v1494 = vlaneseq
        %v1495 = vshrl.u32 %v1494, 7
        %v1496 = vsub.s32 0, %v1495
        %v1497 = vrot.slane %v1485, %v1496
        %v1498 = vlaneseq
        %v1499 = vshrl.u32 %v1498, 7
        %v1500 = vsub.s32 1, %v1499
        %v1501 = vrot.slane %v1485, %v1500
        %v1504 = vmul.f32 %v1491, %v1497
        %v1505 = vmul.f32 %v1491, %v1501
        %v1506 = vadd.f32 %v1459, %v1504
        %v1507 = vadd.f32 %v1460, %v1505
        %1508 = vrot.lane.b32.xlu0 %v1255, 113
        %v1509 = vpop.permute.xlu0 %1508
        %1510 = vrot.lane.b32.xlu0 %v1259, 113
        %v1511 = vpop.permute.xlu0 %1510
        %v1512 = vsel %vm709, %v1509, %v1511
        %v1513 = vsel %vm709, %v1511, %v1509
        %v1516 = vcombine.low %v1512, %v1513
        %v1518 = vunpack.c.l.s4 1966171168
        %v1519 = vunpack.c.0.s8 %v1518
        %v1520 = vlaneseq
        %v1521 = vshrl.u32 %v1520, 7
        %v1522 = vsub.s32 %v1519, %v1521
        %v1523 = vrot.slane %v1516, %v1522
        %v1525 = vunpack.c.l.s4 1966171168
        %v1526 = vunpack.c.0.s8 %v1525
        %v1527 = vlaneseq
        %v1528 = vshrl.u32 %v1527, 7
        %v1529 = vsub.s32 %v1526, %v1528
        %v1530 = vrot.slane %v1523, %v1529
        %v1532 = vsel %vm427, %v1530, 0.0
        %s1533 = scalar_lea.vmem %s3, 96
        %v1534 = vld [vmem:[%s1533] sm:$0xf]
        %1536 = vset.pattern.permute.xlu0 0
        %1537 = vperm.xlu0 %1536, %v1534
        %v1538 = vpop.permute.xlu0 %1537
        %v1541 = vlaneseq
        %v1542 = vshrl.u32 %v1541, 7
        %v1543 = vsub.s32 0, %v1542
        %v1544 = vrot.slane %v1532, %v1543
        %v1545 = vlaneseq
        %v1546 = vshrl.u32 %v1545, 7
        %v1547 = vsub.s32 1, %v1546
        %v1548 = vrot.slane %v1532, %v1547
        %v1551 = vmul.f32 %v1538, %v1544
        %v1552 = vmul.f32 %v1538, %v1548
        %v1553 = vadd.f32 %v1506, %v1551
        %v1554 = vadd.f32 %v1507, %v1552
        %1555 = vrot.lane.b32.xlu0 %v1255, 112
        %v1556 = vpop.permute.xlu0 %1555
        %1557 = vrot.lane.b32.xlu0 %v1259, 112
        %v1558 = vpop.permute.xlu0 %1557
        %v1559 = vsel %vm757, %v1556, %v1558
        %v1560 = vsel %vm757, %v1558, %v1556
        %v1563 = vcombine.low %v1559, %v1560
        %v1565 = vunpack.c.l.s4 1966171168
        %v1566 = vunpack.c.0.s8 %v1565
        %v1567 = vlaneseq
        %v1568 = vshrl.u32 %v1567, 7
        %v1569 = vsub.s32 %v1566, %v1568
        %v1570 = vrot.slane %v1563, %v1569
        %v1572 = vunpack.c.l.s4 1966171168
        %v1573 = vunpack.c.0.s8 %v1572
        %v1574 = vlaneseq
        %v1575 = vshrl.u32 %v1574, 7
        %v1576 = vsub.s32 %v1573, %v1575
        %v1577 = vrot.slane %v1570, %v1576
        %v1579 = vsel %vm430, %v1577, 0.0
        %s1580 = scalar_lea.vmem %s3, 100
        %v1581 = vld [vmem:[%s1580] sm:$0xf]
        %1583 = vset.pattern.permute.xlu0 0
        %1584 = vperm.xlu0 %1583, %v1581
        %v1585 = vpop.permute.xlu0 %1584
        %v1588 = vlaneseq
        %v1589 = vshrl.u32 %v1588, 7
        %v1590 = vsub.s32 0, %v1589
        %v1591 = vrot.slane %v1579, %v1590
        %v1592 = vlaneseq
        %v1593 = vshrl.u32 %v1592, 7
        %v1594 = vsub.s32 1, %v1593
        %v1595 = vrot.slane %v1579, %v1594
        %v1598 = vmul.f32 %v1585, %v1591
        %v1599 = vmul.f32 %v1585, %v1595
        %v1600 = vadd.f32 %v1553, %v1598
        %v1601 = vadd.f32 %v1554, %v1599
        %1602 = vrot.lane.b32.xlu0 %v1255, 111
        %v1603 = vpop.permute.xlu0 %1602
        %1604 = vrot.lane.b32.xlu0 %v1259, 111
        %v1605 = vpop.permute.xlu0 %1604
        %v1606 = vsel %vm805, %v1603, %v1605
        %v1607 = vsel %vm805, %v1605, %v1603
        %v1610 = vcombine.low %v1606, %v1607
        %v1612 = vunpack.c.l.s4 1966171168
        %v1613 = vunpack.c.0.s8 %v1612
        %v1614 = vlaneseq
        %v1615 = vshrl.u32 %v1614, 7
        %v1616 = vsub.s32 %v1613, %v1615
        %v1617 = vrot.slane %v1610, %v1616
        %v1619 = vunpack.c.l.s4 1966171168
        %v1620 = vunpack.c.0.s8 %v1619
        %v1621 = vlaneseq
        %v1622 = vshrl.u32 %v1621, 7
        %v1623 = vsub.s32 %v1620, %v1622
        %v1624 = vrot.slane %v1617, %v1623
        %v1626 = vsel %vm433, %v1624, 0.0
        %s1627 = scalar_lea.vmem %s3, 104
        %v1628 = vld [vmem:[%s1627] sm:$0xf]
        %1630 = vset.pattern.permute.xlu0 0
        %1631 = vperm.xlu0 %1630, %v1628
        %v1632 = vpop.permute.xlu0 %1631
        %v1635 = vlaneseq
        %v1636 = vshrl.u32 %v1635, 7
        %v1637 = vsub.s32 0, %v1636
        %v1638 = vrot.slane %v1626, %v1637
        %v1639 = vlaneseq
        %v1640 = vshrl.u32 %v1639, 7
        %v1641 = vsub.s32 1, %v1640
        %v1642 = vrot.slane %v1626, %v1641
        %v1645 = vmul.f32 %v1632, %v1638
        %v1646 = vmul.f32 %v1632, %v1642
        %v1647 = vadd.f32 %v1600, %v1645
        %v1648 = vadd.f32 %v1601, %v1646
        %s1649 = scalar_lea.vmem %s371, 6 [#allocation2]
        %v1650 = vld [vmem:[%s1649] sm:$0x3]
        %v1652 = vlaneseq
        %v1653 = vshrl.u32 %v1652, 7
        %v1654 = vsub.s32 0, %v1653
        %v1655 = vrot.slane %v1650, %v1654
        %v1656 = vlaneseq
        %v1657 = vshrl.u32 %v1656, 7
        %v1658 = vsub.s32 1, %v1657
        %v1659 = vrot.slane %v1650, %v1658
        %1662 = vrot.lane.b32.xlu0 %v1655, 17
        %v1663 = vpop.permute.xlu0 %1662
        %1664 = vrot.lane.b32.xlu0 %v1659, 17
        %v1665 = vpop.permute.xlu0 %1664
        %v1666 = vsel %vm459, %v1663, %v1665
        %v1667 = vsel %vm459, %v1665, %v1663
        %v1670 = vcombine.low %v1667, %v1666
        %v1672 = vunpack.c.l.s4 1966171168
        %v1673 = vunpack.c.0.s8 %v1672
        %v1674 = vlaneseq
        %v1675 = vshrl.u32 %v1674, 7
        %v1676 = vsub.s32 %v1673, %v1675
        %v1677 = vrot.slane %v1670, %v1676
        %v1679 = vunpack.c.l.s4 1966171168
        %v1680 = vunpack.c.0.s8 %v1679
        %v1681 = vlaneseq
        %v1682 = vshrl.u32 %v1681, 7
        %v1683 = vsub.s32 %v1680, %v1682
        %v1684 = vrot.slane %v1677, %v1683
        %v1686 = vsel %vm412, %v1684, 0.0
        %s1687 = scalar_lea.vmem %s3, 108
        %v1688 = vld [vmem:[%s1687] sm:$0xf]
        %1690 = vset.pattern.permute.xlu0 0
        %1691 = vperm.xlu0 %1690, %v1688
        %v1692 = vpop.permute.xlu0 %1691
        %v1695 = vlaneseq
        %v1696 = vshrl.u32 %v1695, 7
        %v1697 = vsub.s32 0, %v1696
        %v1698 = vrot.slane %v1686, %v1697
        %v1699 = vlaneseq
        %v1700 = vshrl.u32 %v1699, 7
        %v1701 = vsub.s32 1, %v1700
        %v1702 = vrot.slane %v1686, %v1701
        %v1705 = vmul.f32 %v1692, %v1698
        %v1706 = vmul.f32 %v1692, %v1702
        %v1707 = vadd.f32 %v1647, %v1705
        %v1708 = vadd.f32 %v1648, %v1706
        %1709 = vrot.lane.b32.xlu0 %v1655, 16
        %v1710 = vpop.permute.xlu0 %1709
        %1711 = vrot.lane.b32.xlu0 %v1659, 16
        %v1712 = vpop.permute.xlu0 %1711
        %v1713 = vsel %vm506, %v1710, %v1712
        %v1714 = vsel %vm506, %v1712, %v1710
        %v1717 = vcombine.low %v1714, %v1713
        %v1719 = vunpack.c.l.s4 1966171168
        %v1720 = vunpack.c.0.s8 %v1719
        %v1721 = vlaneseq
        %v1722 = vshrl.u32 %v1721, 7
        %v1723 = vsub.s32 %v1720, %v1722
        %v1724 = vrot.slane %v1717, %v1723
        %v1726 = vunpack.c.l.s4 1966171168
        %v1727 = vunpack.c.0.s8 %v1726
        %v1728 = vlaneseq
        %v1729 = vshrl.u32 %v1728, 7
        %v1730 = vsub.s32 %v1727, %v1729
        %v1731 = vrot.slane %v1724, %v1730
        %v1733 = vsel %vm415, %v1731, 0.0
        %s1734 = scalar_lea.vmem %s3, 112
        %v1735 = vld [vmem:[%s1734] sm:$0xf]
        %1737 = vset.pattern.permute.xlu0 0
        %1738 = vperm.xlu0 %1737, %v1735
        %v1739 = vpop.permute.xlu0 %1738
        %v1742 = vlaneseq
        %v1743 = vshrl.u32 %v1742, 7
        %v1744 = vsub.s32 0, %v1743
        %v1745 = vrot.slane %v1733, %v1744
        %v1746 = vlaneseq
        %v1747 = vshrl.u32 %v1746, 7
        %v1748 = vsub.s32 1, %v1747
        %v1749 = vrot.slane %v1733, %v1748
        %v1752 = vmul.f32 %v1739, %v1745
        %v1753 = vmul.f32 %v1739, %v1749
        %v1754 = vadd.f32 %v1707, %v1752
        %v1755 = vadd.f32 %v1708, %v1753
        %1756 = vrot.lane.b32.xlu0 %v1655, 15
        %v1757 = vpop.permute.xlu0 %1756
        %1758 = vrot.lane.b32.xlu0 %v1659, 15
        %v1759 = vpop.permute.xlu0 %1758
        %v1760 = vsel %vm554, %v1757, %v1759
        %v1761 = vsel %vm554, %v1759, %v1757
        %v1764 = vcombine.low %v1761, %v1760
        %v1766 = vunpack.c.l.s4 1966171168
        %v1767 = vunpack.c.0.s8 %v1766
        %v1768 = vlaneseq
        %v1769 = vshrl.u32 %v1768, 7
        %v1770 = vsub.s32 %v1767, %v1769
        %v1771 = vrot.slane %v1764, %v1770
        %v1773 = vunpack.c.l.s4 1966171168
        %v1774 = vunpack.c.0.s8 %v1773
        %v1775 = vlaneseq
        %v1776 = vshrl.u32 %v1775, 7
        %v1777 = vsub.s32 %v1774, %v1776
        %v1778 = vrot.slane %v1771, %v1777
        %v1780 = vsel %vm418, %v1778, 0.0
        %s1781 = scalar_lea.vmem %s3, 116
        %v1782 = vld [vmem:[%s1781] sm:$0xf]
        %1784 = vset.pattern.permute.xlu0 0
        %1785 = vperm.xlu0 %1784, %v1782
        %v1786 = vpop.permute.xlu0 %1785
        %v1789 = vlaneseq
        %v1790 = vshrl.u32 %v1789, 7
        %v1791 = vsub.s32 0, %v1790
        %v1792 = vrot.slane %v1780, %v1791
        %v1793 = vlaneseq
        %v1794 = vshrl.u32 %v1793, 7
        %v1795 = vsub.s32 1, %v1794
        %v1796 = vrot.slane %v1780, %v1795
        %v1799 = vmul.f32 %v1786, %v1792
        %v1800 = vmul.f32 %v1786, %v1796
        %v1801 = vadd.f32 %v1754, %v1799
        %v1802 = vadd.f32 %v1755, %v1800
        %1803 = vrot.lane.b32.xlu0 %v1655, 1
        %v1804 = vpop.permute.xlu0 %1803
        %1805 = vrot.lane.b32.xlu0 %v1659, 1
        %v1806 = vpop.permute.xlu0 %1805
        %v1807 = vsel %vm602, %v1804, %v1806
        %v1808 = vsel %vm602, %v1806, %v1804
        %v1811 = vcombine.low %v1808, %v1807
        %v1813 = vunpack.c.l.s4 1966171168
        %v1814 = vunpack.c.0.s8 %v1813
        %v1815 = vlaneseq
        %v1816 = vshrl.u32 %v1815, 7
        %v1817 = vsub.s32 %v1814, %v1816
        %v1818 = vrot.slane %v1811, %v1817
        %v1820 = vunpack.c.l.s4 1966171168
        %v1821 = vunpack.c.0.s8 %v1820
        %v1822 = vlaneseq
        %v1823 = vshrl.u32 %v1822, 7
        %v1824 = vsub.s32 %v1821, %v1823
        %v1825 = vrot.slane %v1818, %v1824
        %v1827 = vsel %vm421, %v1825, 0.0
        %s1828 = scalar_lea.vmem %s3, 120
        %v1829 = vld [vmem:[%s1828] sm:$0xf]
        %1831 = vset.pattern.permute.xlu0 0
        %1832 = vperm.xlu0 %1831, %v1829
        %v1833 = vpop.permute.xlu0 %1832
        %v1836 = vlaneseq
        %v1837 = vshrl.u32 %v1836, 7
        %v1838 = vsub.s32 0, %v1837
        %v1839 = vrot.slane %v1827, %v1838
        %v1840 = vlaneseq
        %v1841 = vshrl.u32 %v1840, 7
        %v1842 = vsub.s32 1, %v1841
        %v1843 = vrot.slane %v1827, %v1842
        %v1846 = vmul.f32 %v1833, %v1839
        %v1847 = vmul.f32 %v1833, %v1843
        %v1848 = vadd.f32 %v1801, %v1846
        %v1849 = vadd.f32 %v1802, %v1847
        %s1850 = scalar_lea.vmem %s3, 124
        %v1851 = vld [vmem:[%s1850] sm:$0xf]
        %1853 = vset.pattern.permute.xlu0 0
        %1854 = vperm.xlu0 %1853, %v1851
        %v1855 = vpop.permute.xlu0 %1854
        %v1857 = vmul.f32 %v1855, %v1655
        %v1858 = vmul.f32 %v1855, %v1659
        %v1859 = vadd.f32 %v1848, %v1857
        %v1860 = vadd.f32 %v1849, %v1858
        %1861 = vrot.lane.b32.xlu0 %v1655, 127
        %v1862 = vpop.permute.xlu0 %1861
        %1863 = vrot.lane.b32.xlu0 %v1659, 127
        %v1864 = vpop.permute.xlu0 %1863
        %v1865 = vsel %vm661, %v1862, %v1864
        %v1866 = vsel %vm661, %v1864, %v1862
        %v1869 = vcombine.low %v1865, %v1866
        %v1871 = vunpack.c.l.s4 1966171168
        %v1872 = vunpack.c.0.s8 %v1871
        %v1873 = vlaneseq
        %v1874 = vshrl.u32 %v1873, 7
        %v1875 = vsub.s32 %v1872, %v1874
        %v1876 = vrot.slane %v1869, %v1875
        %v1878 = vunpack.c.l.s4 1966171168
        %v1879 = vunpack.c.0.s8 %v1878
        %v1880 = vlaneseq
        %v1881 = vshrl.u32 %v1880, 7
        %v1882 = vsub.s32 %v1879, %v1881
        %v1883 = vrot.slane %v1876, %v1882
        %v1885 = vsel %vm424, %v1883, 0.0
        %s1886 = scalar_lea.vmem %s3, 128
        %v1887 = vld [vmem:[%s1886] sm:$0xf]
        %1889 = vset.pattern.permute.xlu0 0
        %1890 = vperm.xlu0 %1889, %v1887
        %v1891 = vpop.permute.xlu0 %1890
        %v1894 = vlaneseq
        %v1895 = vshrl.u32 %v1894, 7
        %v1896 = vsub.s32 0, %v1895
        %v1897 = vrot.slane %v1885, %v1896
        %v1898 = vlaneseq
        %v1899 = vshrl.u32 %v1898, 7
        %v1900 = vsub.s32 1, %v1899
        %v1901 = vrot.slane %v1885, %v1900
        %v1904 = vmul.f32 %v1891, %v1897
        %v1905 = vmul.f32 %v1891, %v1901
        %v1906 = vadd.f32 %v1859, %v1904
        %v1907 = vadd.f32 %v1860, %v1905
        %1908 = vrot.lane.b32.xlu0 %v1655, 113
        %v1909 = vpop.permute.xlu0 %1908
        %1910 = vrot.lane.b32.xlu0 %v1659, 113
        %v1911 = vpop.permute.xlu0 %1910
        %v1912 = vsel %vm709, %v1909, %v1911
        %v1913 = vsel %vm709, %v1911, %v1909
        %v1916 = vcombine.low %v1912, %v1913
        %v1918 = vunpack.c.l.s4 1966171168
        %v1919 = vunpack.c.0.s8 %v1918
        %v1920 = vlaneseq
        %v1921 = vshrl.u32 %v1920, 7
        %v1922 = vsub.s32 %v1919, %v1921
        %v1923 = vrot.slane %v1916, %v1922
        %v1925 = vunpack.c.l.s4 1966171168
        %v1926 = vunpack.c.0.s8 %v1925
        %v1927 = vlaneseq
        %v1928 = vshrl.u32 %v1927, 7
        %v1929 = vsub.s32 %v1926, %v1928
        %v1930 = vrot.slane %v1923, %v1929
        %v1932 = vsel %vm427, %v1930, 0.0
        %s1933 = scalar_lea.vmem %s3, 132
        %v1934 = vld [vmem:[%s1933] sm:$0xf]
        %1936 = vset.pattern.permute.xlu0 0
        %1937 = vperm.xlu0 %1936, %v1934
        %v1938 = vpop.permute.xlu0 %1937
        %v1941 = vlaneseq
        %v1942 = vshrl.u32 %v1941, 7
        %v1943 = vsub.s32 0, %v1942
        %v1944 = vrot.slane %v1932, %v1943
        %v1945 = vlaneseq
        %v1946 = vshrl.u32 %v1945, 7
        %v1947 = vsub.s32 1, %v1946
        %v1948 = vrot.slane %v1932, %v1947
        %v1951 = vmul.f32 %v1938, %v1944
        %v1952 = vmul.f32 %v1938, %v1948
        %v1953 = vadd.f32 %v1906, %v1951
        %v1954 = vadd.f32 %v1907, %v1952
        %1955 = vrot.lane.b32.xlu0 %v1655, 112
        %v1956 = vpop.permute.xlu0 %1955
        %1957 = vrot.lane.b32.xlu0 %v1659, 112
        %v1958 = vpop.permute.xlu0 %1957
        %v1959 = vsel %vm757, %v1956, %v1958
        %v1960 = vsel %vm757, %v1958, %v1956
        %v1963 = vcombine.low %v1959, %v1960
        %v1965 = vunpack.c.l.s4 1966171168
        %v1966 = vunpack.c.0.s8 %v1965
        %v1967 = vlaneseq
        %v1968 = vshrl.u32 %v1967, 7
        %v1969 = vsub.s32 %v1966, %v1968
        %v1970 = vrot.slane %v1963, %v1969
        %v1972 = vunpack.c.l.s4 1966171168
        %v1973 = vunpack.c.0.s8 %v1972
        %v1974 = vlaneseq
        %v1975 = vshrl.u32 %v1974, 7
        %v1976 = vsub.s32 %v1973, %v1975
        %v1977 = vrot.slane %v1970, %v1976
        %v1979 = vsel %vm430, %v1977, 0.0
        %s1980 = scalar_lea.vmem %s3, 136
        %v1981 = vld [vmem:[%s1980] sm:$0xf]
        %1983 = vset.pattern.permute.xlu0 0
        %1984 = vperm.xlu0 %1983, %v1981
        %v1985 = vpop.permute.xlu0 %1984
        %v1988 = vlaneseq
        %v1989 = vshrl.u32 %v1988, 7
        %v1990 = vsub.s32 0, %v1989
        %v1991 = vrot.slane %v1979, %v1990
        %v1992 = vlaneseq
        %v1993 = vshrl.u32 %v1992, 7
        %v1994 = vsub.s32 1, %v1993
        %v1995 = vrot.slane %v1979, %v1994
        %v1998 = vmul.f32 %v1985, %v1991
        %v1999 = vmul.f32 %v1985, %v1995
        %v2000 = vadd.f32 %v1953, %v1998
        %v2001 = vadd.f32 %v1954, %v1999
        %2002 = vrot.lane.b32.xlu0 %v1655, 111
        %v2003 = vpop.permute.xlu0 %2002
        %2004 = vrot.lane.b32.xlu0 %v1659, 111
        %v2005 = vpop.permute.xlu0 %2004
        %v2006 = vsel %vm805, %v2003, %v2005
        %v2007 = vsel %vm805, %v2005, %v2003
        %v2010 = vcombine.low %v2006, %v2007
        %v2012 = vunpack.c.l.s4 1966171168
        %v2013 = vunpack.c.0.s8 %v2012
        %v2014 = vlaneseq
        %v2015 = vshrl.u32 %v2014, 7
        %v2016 = vsub.s32 %v2013, %v2015
        %v2017 = vrot.slane %v2010, %v2016
        %v2019 = vunpack.c.l.s4 1966171168
        %v2020 = vunpack.c.0.s8 %v2019
        %v2021 = vlaneseq
        %v2022 = vshrl.u32 %v2021, 7
        %v2023 = vsub.s32 %v2020, %v2022
        %v2024 = vrot.slane %v2017, %v2023
        %v2026 = vsel %vm433, %v2024, 0.0
        %s2027 = scalar_lea.vmem %s3, 140
        %v2028 = vld [vmem:[%s2027] sm:$0xf]
        %2030 = vset.pattern.permute.xlu0 0
        %2031 = vperm.xlu0 %2030, %v2028
        %v2032 = vpop.permute.xlu0 %2031
        %v2035 = vlaneseq
        %v2036 = vshrl.u32 %v2035, 7
        %v2037 = vsub.s32 0, %v2036
        %v2038 = vrot.slane %v2026, %v2037
        %v2039 = vlaneseq
        %v2040 = vshrl.u32 %v2039, 7
        %v2041 = vsub.s32 1, %v2040
        %v2042 = vrot.slane %v2026, %v2041
        %v2045 = vmul.f32 %v2032, %v2038
        %v2046 = vmul.f32 %v2032, %v2042
        %v2047 = vadd.f32 %v2000, %v2045
        %v2048 = vadd.f32 %v2001, %v2046
        %v2049 = vld [vmem:[%s378] sm:$0x3]
        %v2051 = vlaneseq
        %v2052 = vshrl.u32 %v2051, 7
        %v2053 = vsub.s32 0, %v2052
        %v2054 = vrot.slane %v2049, %v2053
        %v2055 = vlaneseq
        %v2056 = vshrl.u32 %v2055, 7
        %v2057 = vsub.s32 1, %v2056
        %v2058 = vrot.slane %v2049, %v2057
        %2061 = vrot.lane.b32.xlu0 %v2054, 17
        %v2062 = vpop.permute.xlu0 %2061
        %2063 = vrot.lane.b32.xlu0 %v2058, 17
        %v2064 = vpop.permute.xlu0 %2063
        %v2065 = vsel %vm459, %v2062, %v2064
        %v2066 = vsel %vm459, %v2064, %v2062
        %v2069 = vcombine.low %v2066, %v2065
        %v2071 = vunpack.c.l.s4 1966171168
        %v2072 = vunpack.c.0.s8 %v2071
        %v2073 = vlaneseq
        %v2074 = vshrl.u32 %v2073, 7
        %v2075 = vsub.s32 %v2072, %v2074
        %v2076 = vrot.slane %v2069, %v2075
        %v2078 = vunpack.c.l.s4 1966171168
        %v2079 = vunpack.c.0.s8 %v2078
        %v2080 = vlaneseq
        %v2081 = vshrl.u32 %v2080, 7
        %v2082 = vsub.s32 %v2079, %v2081
        %v2083 = vrot.slane %v2076, %v2082
        %v2085 = vsel %vm412, %v2083, 0.0
        %s2086 = scalar_lea.vmem %s3, 144
        %v2087 = vld [vmem:[%s2086] sm:$0xf]
        %2089 = vset.pattern.permute.xlu0 0
        %2090 = vperm.xlu0 %2089, %v2087
        %v2091 = vpop.permute.xlu0 %2090
        %v2094 = vlaneseq
        %v2095 = vshrl.u32 %v2094, 7
        %v2096 = vsub.s32 0, %v2095
        %v2097 = vrot.slane %v2085, %v2096
        %v2098 = vlaneseq
        %v2099 = vshrl.u32 %v2098, 7
        %v2100 = vsub.s32 1, %v2099
        %v2101 = vrot.slane %v2085, %v2100
        %v2104 = vmul.f32 %v2091, %v2097
        %v2105 = vmul.f32 %v2091, %v2101
        %v2106 = vadd.f32 %v2047, %v2104
        %v2107 = vadd.f32 %v2048, %v2105
        %2108 = vrot.lane.b32.xlu0 %v2054, 16
        %v2109 = vpop.permute.xlu0 %2108
        %2110 = vrot.lane.b32.xlu0 %v2058, 16
        %v2111 = vpop.permute.xlu0 %2110
        %v2112 = vsel %vm506, %v2109, %v2111
        %v2113 = vsel %vm506, %v2111, %v2109
        %v2116 = vcombine.low %v2113, %v2112
        %v2118 = vunpack.c.l.s4 1966171168
        %v2119 = vunpack.c.0.s8 %v2118
        %v2120 = vlaneseq
        %v2121 = vshrl.u32 %v2120, 7
        %v2122 = vsub.s32 %v2119, %v2121
        %v2123 = vrot.slane %v2116, %v2122
        %v2125 = vunpack.c.l.s4 1966171168
        %v2126 = vunpack.c.0.s8 %v2125
        %v2127 = vlaneseq
        %v2128 = vshrl.u32 %v2127, 7
        %v2129 = vsub.s32 %v2126, %v2128
        %v2130 = vrot.slane %v2123, %v2129
        %v2132 = vsel %vm415, %v2130, 0.0
        %s2133 = scalar_lea.vmem %s3, 148
        %v2134 = vld [vmem:[%s2133] sm:$0xf]
        %2136 = vset.pattern.permute.xlu0 0
        %2137 = vperm.xlu0 %2136, %v2134
        %v2138 = vpop.permute.xlu0 %2137
        %v2141 = vlaneseq
        %v2142 = vshrl.u32 %v2141, 7
        %v2143 = vsub.s32 0, %v2142
        %v2144 = vrot.slane %v2132, %v2143
        %v2145 = vlaneseq
        %v2146 = vshrl.u32 %v2145, 7
        %v2147 = vsub.s32 1, %v2146
        %v2148 = vrot.slane %v2132, %v2147
        %v2151 = vmul.f32 %v2138, %v2144
        %v2152 = vmul.f32 %v2138, %v2148
        %v2153 = vadd.f32 %v2106, %v2151
        %v2154 = vadd.f32 %v2107, %v2152
        %2155 = vrot.lane.b32.xlu0 %v2054, 15
        %v2156 = vpop.permute.xlu0 %2155
        %2157 = vrot.lane.b32.xlu0 %v2058, 15
        %v2158 = vpop.permute.xlu0 %2157
        %v2159 = vsel %vm554, %v2156, %v2158
        %v2160 = vsel %vm554, %v2158, %v2156
        %v2163 = vcombine.low %v2160, %v2159
        %v2165 = vunpack.c.l.s4 1966171168
        %v2166 = vunpack.c.0.s8 %v2165
        %v2167 = vlaneseq
        %v2168 = vshrl.u32 %v2167, 7
        %v2169 = vsub.s32 %v2166, %v2168
        %v2170 = vrot.slane %v2163, %v2169
        %v2172 = vunpack.c.l.s4 1966171168
        %v2173 = vunpack.c.0.s8 %v2172
        %v2174 = vlaneseq
        %v2175 = vshrl.u32 %v2174, 7
        %v2176 = vsub.s32 %v2173, %v2175
        %v2177 = vrot.slane %v2170, %v2176
        %v2179 = vsel %vm418, %v2177, 0.0
        %s2180 = scalar_lea.vmem %s3, 152
        %v2181 = vld [vmem:[%s2180] sm:$0xf]
        %2183 = vset.pattern.permute.xlu0 0
        %2184 = vperm.xlu0 %2183, %v2181
        %v2185 = vpop.permute.xlu0 %2184
        %v2188 = vlaneseq
        %v2189 = vshrl.u32 %v2188, 7
        %v2190 = vsub.s32 0, %v2189
        %v2191 = vrot.slane %v2179, %v2190
        %v2192 = vlaneseq
        %v2193 = vshrl.u32 %v2192, 7
        %v2194 = vsub.s32 1, %v2193
        %v2195 = vrot.slane %v2179, %v2194
        %v2198 = vmul.f32 %v2185, %v2191
        %v2199 = vmul.f32 %v2185, %v2195
        %v2200 = vadd.f32 %v2153, %v2198
        %v2201 = vadd.f32 %v2154, %v2199
        %2202 = vrot.lane.b32.xlu0 %v2054, 1
        %v2203 = vpop.permute.xlu0 %2202
        %2204 = vrot.lane.b32.xlu0 %v2058, 1
        %v2205 = vpop.permute.xlu0 %2204
        %v2206 = vsel %vm602, %v2203, %v2205
        %v2207 = vsel %vm602, %v2205, %v2203
        %v2210 = vcombine.low %v2207, %v2206
        %v2212 = vunpack.c.l.s4 1966171168
        %v2213 = vunpack.c.0.s8 %v2212
        %v2214 = vlaneseq
        %v2215 = vshrl.u32 %v2214, 7
        %v2216 = vsub.s32 %v2213, %v2215
        %v2217 = vrot.slane %v2210, %v2216
        %v2219 = vunpack.c.l.s4 1966171168
        %v2220 = vunpack.c.0.s8 %v2219
        %v2221 = vlaneseq
        %v2222 = vshrl.u32 %v2221, 7
        %v2223 = vsub.s32 %v2220, %v2222
        %v2224 = vrot.slane %v2217, %v2223
        %v2226 = vsel %vm421, %v2224, 0.0
        %s2227 = scalar_lea.vmem %s3, 156
        %v2228 = vld [vmem:[%s2227] sm:$0xf]
        %2230 = vset.pattern.permute.xlu0 0
        %2231 = vperm.xlu0 %2230, %v2228
        %v2232 = vpop.permute.xlu0 %2231
        %v2235 = vlaneseq
        %v2236 = vshrl.u32 %v2235, 7
        %v2237 = vsub.s32 0, %v2236
        %v2238 = vrot.slane %v2226, %v2237
        %v2239 = vlaneseq
        %v2240 = vshrl.u32 %v2239, 7
        %v2241 = vsub.s32 1, %v2240
        %v2242 = vrot.slane %v2226, %v2241
        %v2245 = vmul.f32 %v2232, %v2238
        %v2246 = vmul.f32 %v2232, %v2242
        %v2247 = vadd.f32 %v2200, %v2245
        %v2248 = vadd.f32 %v2201, %v2246
        %s2249 = scalar_lea.vmem %s3, 160
        %v2250 = vld [vmem:[%s2249] sm:$0xf]
        %2252 = vset.pattern.permute.xlu0 0
        %2253 = vperm.xlu0 %2252, %v2250
        %v2254 = vpop.permute.xlu0 %2253
        %v2256 = vmul.f32 %v2254, %v2054
        %v2257 = vmul.f32 %v2254, %v2058
        %v2258 = vadd.f32 %v2247, %v2256
        %v2259 = vadd.f32 %v2248, %v2257
        %2260 = vrot.lane.b32.xlu0 %v2054, 127
        %v2261 = vpop.permute.xlu0 %2260
        %2262 = vrot.lane.b32.xlu0 %v2058, 127
        %v2263 = vpop.permute.xlu0 %2262
        %v2264 = vsel %vm661, %v2261, %v2263
        %v2265 = vsel %vm661, %v2263, %v2261
        %v2268 = vcombine.low %v2264, %v2265
        %v2270 = vunpack.c.l.s4 1966171168
        %v2271 = vunpack.c.0.s8 %v2270
        %v2272 = vlaneseq
        %v2273 = vshrl.u32 %v2272, 7
        %v2274 = vsub.s32 %v2271, %v2273
        %v2275 = vrot.slane %v2268, %v2274
        %v2277 = vunpack.c.l.s4 1966171168
        %v2278 = vunpack.c.0.s8 %v2277
        %v2279 = vlaneseq
        %v2280 = vshrl.u32 %v2279, 7
        %v2281 = vsub.s32 %v2278, %v2280
        %v2282 = vrot.slane %v2275, %v2281
        %v2284 = vsel %vm424, %v2282, 0.0
        %s2285 = scalar_lea.vmem %s3, 164
        %v2286 = vld [vmem:[%s2285] sm:$0xf]
        %2288 = vset.pattern.permute.xlu0 0
        %2289 = vperm.xlu0 %2288, %v2286
        %v2290 = vpop.permute.xlu0 %2289
        %v2293 = vlaneseq
        %v2294 = vshrl.u32 %v2293, 7
        %v2295 = vsub.s32 0, %v2294
        %v2296 = vrot.slane %v2284, %v2295
        %v2297 = vlaneseq
        %v2298 = vshrl.u32 %v2297, 7
        %v2299 = vsub.s32 1, %v2298
        %v2300 = vrot.slane %v2284, %v2299
        %v2303 = vmul.f32 %v2290, %v2296
        %v2304 = vmul.f32 %v2290, %v2300
        %v2305 = vadd.f32 %v2258, %v2303
        %v2306 = vadd.f32 %v2259, %v2304
        %2307 = vrot.lane.b32.xlu0 %v2054, 113
        %v2308 = vpop.permute.xlu0 %2307
        %2309 = vrot.lane.b32.xlu0 %v2058, 113
        %v2310 = vpop.permute.xlu0 %2309
        %v2311 = vsel %vm709, %v2308, %v2310
        %v2312 = vsel %vm709, %v2310, %v2308
        %v2315 = vcombine.low %v2311, %v2312
        %v2317 = vunpack.c.l.s4 1966171168
        %v2318 = vunpack.c.0.s8 %v2317
        %v2319 = vlaneseq
        %v2320 = vshrl.u32 %v2319, 7
        %v2321 = vsub.s32 %v2318, %v2320
        %v2322 = vrot.slane %v2315, %v2321
        %v2324 = vunpack.c.l.s4 1966171168
        %v2325 = vunpack.c.0.s8 %v2324
        %v2326 = vlaneseq
        %v2327 = vshrl.u32 %v2326, 7
        %v2328 = vsub.s32 %v2325, %v2327
        %v2329 = vrot.slane %v2322, %v2328
        %v2331 = vsel %vm427, %v2329, 0.0
        %s2332 = scalar_lea.vmem %s3, 168
        %v2333 = vld [vmem:[%s2332] sm:$0xf]
        %2335 = vset.pattern.permute.xlu0 0
        %2336 = vperm.xlu0 %2335, %v2333
        %v2337 = vpop.permute.xlu0 %2336
        %v2340 = vlaneseq
        %v2341 = vshrl.u32 %v2340, 7
        %v2342 = vsub.s32 0, %v2341
        %v2343 = vrot.slane %v2331, %v2342
        %v2344 = vlaneseq
        %v2345 = vshrl.u32 %v2344, 7
        %v2346 = vsub.s32 1, %v2345
        %v2347 = vrot.slane %v2331, %v2346
        %v2350 = vmul.f32 %v2337, %v2343
        %v2351 = vmul.f32 %v2337, %v2347
        %v2352 = vadd.f32 %v2305, %v2350
        %v2353 = vadd.f32 %v2306, %v2351
        %2354 = vrot.lane.b32.xlu0 %v2054, 112
        %v2355 = vpop.permute.xlu0 %2354
        %2356 = vrot.lane.b32.xlu0 %v2058, 112
        %v2357 = vpop.permute.xlu0 %2356
        %v2358 = vsel %vm757, %v2355, %v2357
        %v2359 = vsel %vm757, %v2357, %v2355
        %v2362 = vcombine.low %v2358, %v2359
        %v2364 = vunpack.c.l.s4 1966171168
        %v2365 = vunpack.c.0.s8 %v2364
        %v2366 = vlaneseq
        %v2367 = vshrl.u32 %v2366, 7
        %v2368 = vsub.s32 %v2365, %v2367
        %v2369 = vrot.slane %v2362, %v2368
        %v2371 = vunpack.c.l.s4 1966171168
        %v2372 = vunpack.c.0.s8 %v2371
        %v2373 = vlaneseq
        %v2374 = vshrl.u32 %v2373, 7
        %v2375 = vsub.s32 %v2372, %v2374
        %v2376 = vrot.slane %v2369, %v2375
        %v2378 = vsel %vm430, %v2376, 0.0
        %s2379 = scalar_lea.vmem %s3, 172
        %v2380 = vld [vmem:[%s2379] sm:$0xf]
        %2382 = vset.pattern.permute.xlu0 0
        %2383 = vperm.xlu0 %2382, %v2380
        %v2384 = vpop.permute.xlu0 %2383
        %v2387 = vlaneseq
        %v2388 = vshrl.u32 %v2387, 7
        %v2389 = vsub.s32 0, %v2388
        %v2390 = vrot.slane %v2378, %v2389
        %v2391 = vlaneseq
        %v2392 = vshrl.u32 %v2391, 7
        %v2393 = vsub.s32 1, %v2392
        %v2394 = vrot.slane %v2378, %v2393
        %v2397 = vmul.f32 %v2384, %v2390
        %v2398 = vmul.f32 %v2384, %v2394
        %v2399 = vadd.f32 %v2352, %v2397
        %v2400 = vadd.f32 %v2353, %v2398
        %2401 = vrot.lane.b32.xlu0 %v2054, 111
        %v2402 = vpop.permute.xlu0 %2401
        %2403 = vrot.lane.b32.xlu0 %v2058, 111
        %v2404 = vpop.permute.xlu0 %2403
        %v2405 = vsel %vm805, %v2402, %v2404
        %v2406 = vsel %vm805, %v2404, %v2402
        %v2409 = vcombine.low %v2405, %v2406
        %v2411 = vunpack.c.l.s4 1966171168
        %v2412 = vunpack.c.0.s8 %v2411
        %v2413 = vlaneseq
        %v2414 = vshrl.u32 %v2413, 7
        %v2415 = vsub.s32 %v2412, %v2414
        %v2416 = vrot.slane %v2409, %v2415
        %v2418 = vunpack.c.l.s4 1966171168
        %v2419 = vunpack.c.0.s8 %v2418
        %v2420 = vlaneseq
        %v2421 = vshrl.u32 %v2420, 7
        %v2422 = vsub.s32 %v2419, %v2421
        %v2423 = vrot.slane %v2416, %v2422
        %v2425 = vsel %vm433, %v2423, 0.0
        %s2426 = scalar_lea.vmem %s3, 176
        %v2427 = vld [vmem:[%s2426] sm:$0xf]
        %2429 = vset.pattern.permute.xlu0 0
        %2430 = vperm.xlu0 %2429, %v2427
        %v2431 = vpop.permute.xlu0 %2430
        %v2434 = vlaneseq
        %v2435 = vshrl.u32 %v2434, 7
        %v2436 = vsub.s32 0, %v2435
        %v2437 = vrot.slane %v2425, %v2436
        %v2438 = vlaneseq
        %v2439 = vshrl.u32 %v2438, 7
        %v2440 = vsub.s32 1, %v2439
        %v2441 = vrot.slane %v2425, %v2440
        %v2444 = vmul.f32 %v2431, %v2437
        %v2445 = vmul.f32 %v2431, %v2441
        %v2446 = vadd.f32 %v2399, %v2444
        %v2447 = vadd.f32 %v2400, %v2445
        %s2448 = scalar_lea.vmem %s378, 2 [#allocation3]
        %v2449 = vld [vmem:[%s2448] sm:$0x3]
        %v2451 = vlaneseq
        %v2452 = vshrl.u32 %v2451, 7
        %v2453 = vsub.s32 0, %v2452
        %v2454 = vrot.slane %v2449, %v2453
        %v2455 = vlaneseq
        %v2456 = vshrl.u32 %v2455, 7
        %v2457 = vsub.s32 1, %v2456
        %v2458 = vrot.slane %v2449, %v2457
        %2461 = vrot.lane.b32.xlu0 %v2454, 17
        %v2462 = vpop.permute.xlu0 %2461
        %2463 = vrot.lane.b32.xlu0 %v2458, 17
        %v2464 = vpop.permute.xlu0 %2463
        %v2465 = vsel %vm459, %v2462, %v2464
        %v2466 = vsel %vm459, %v2464, %v2462
        %v2469 = vcombine.low %v2466, %v2465
        %v2471 = vunpack.c.l.s4 1966171168
        %v2472 = vunpack.c.0.s8 %v2471
        %v2473 = vlaneseq
        %v2474 = vshrl.u32 %v2473, 7
        %v2475 = vsub.s32 %v2472, %v2474
        %v2476 = vrot.slane %v2469, %v2475
        %v2478 = vunpack.c.l.s4 1966171168
        %v2479 = vunpack.c.0.s8 %v2478
        %v2480 = vlaneseq
        %v2481 = vshrl.u32 %v2480, 7
        %v2482 = vsub.s32 %v2479, %v2481
        %v2483 = vrot.slane %v2476, %v2482
        %v2485 = vsel %vm412, %v2483, 0.0
        %s2486 = scalar_lea.vmem %s3, 180
        %v2487 = vld [vmem:[%s2486] sm:$0xf]
        %2489 = vset.pattern.permute.xlu0 0
        %2490 = vperm.xlu0 %2489, %v2487
        %v2491 = vpop.permute.xlu0 %2490
        %v2494 = vlaneseq
        %v2495 = vshrl.u32 %v2494, 7
        %v2496 = vsub.s32 0, %v2495
        %v2497 = vrot.slane %v2485, %v2496
        %v2498 = vlaneseq
        %v2499 = vshrl.u32 %v2498, 7
        %v2500 = vsub.s32 1, %v2499
        %v2501 = vrot.slane %v2485, %v2500
        %v2504 = vmul.f32 %v2491, %v2497
        %v2505 = vmul.f32 %v2491, %v2501
        %v2506 = vadd.f32 %v2446, %v2504
        %v2507 = vadd.f32 %v2447, %v2505
        %2508 = vrot.lane.b32.xlu0 %v2454, 16
        %v2509 = vpop.permute.xlu0 %2508
        %2510 = vrot.lane.b32.xlu0 %v2458, 16
        %v2511 = vpop.permute.xlu0 %2510
        %v2512 = vsel %vm506, %v2509, %v2511
        %v2513 = vsel %vm506, %v2511, %v2509
        %v2516 = vcombine.low %v2513, %v2512
        %v2518 = vunpack.c.l.s4 1966171168
        %v2519 = vunpack.c.0.s8 %v2518
        %v2520 = vlaneseq
        %v2521 = vshrl.u32 %v2520, 7
        %v2522 = vsub.s32 %v2519, %v2521
        %v2523 = vrot.slane %v2516, %v2522
        %v2525 = vunpack.c.l.s4 1966171168
        %v2526 = vunpack.c.0.s8 %v2525
        %v2527 = vlaneseq
        %v2528 = vshrl.u32 %v2527, 7
        %v2529 = vsub.s32 %v2526, %v2528
        %v2530 = vrot.slane %v2523, %v2529
        %v2532 = vsel %vm415, %v2530, 0.0
        %s2533 = scalar_lea.vmem %s3, 184
        %v2534 = vld [vmem:[%s2533] sm:$0xf]
        %2536 = vset.pattern.permute.xlu0 0
        %2537 = vperm.xlu0 %2536, %v2534
        %v2538 = vpop.permute.xlu0 %2537
        %v2541 = vlaneseq
        %v2542 = vshrl.u32 %v2541, 7
        %v2543 = vsub.s32 0, %v2542
        %v2544 = vrot.slane %v2532, %v2543
        %v2545 = vlaneseq
        %v2546 = vshrl.u32 %v2545, 7
        %v2547 = vsub.s32 1, %v2546
        %v2548 = vrot.slane %v2532, %v2547
        %v2551 = vmul.f32 %v2538, %v2544
        %v2552 = vmul.f32 %v2538, %v2548
        %v2553 = vadd.f32 %v2506, %v2551
        %v2554 = vadd.f32 %v2507, %v2552
        %2555 = vrot.lane.b32.xlu0 %v2454, 15
        %v2556 = vpop.permute.xlu0 %2555
        %2557 = vrot.lane.b32.xlu0 %v2458, 15
        %v2558 = vpop.permute.xlu0 %2557
        %v2559 = vsel %vm554, %v2556, %v2558
        %v2560 = vsel %vm554, %v2558, %v2556
        %v2563 = vcombine.low %v2560, %v2559
        %v2565 = vunpack.c.l.s4 1966171168
        %v2566 = vunpack.c.0.s8 %v2565
        %v2567 = vlaneseq
        %v2568 = vshrl.u32 %v2567, 7
        %v2569 = vsub.s32 %v2566, %v2568
        %v2570 = vrot.slane %v2563, %v2569
        %v2572 = vunpack.c.l.s4 1966171168
        %v2573 = vunpack.c.0.s8 %v2572
        %v2574 = vlaneseq
        %v2575 = vshrl.u32 %v2574, 7
        %v2576 = vsub.s32 %v2573, %v2575
        %v2577 = vrot.slane %v2570, %v2576
        %v2579 = vsel %vm418, %v2577, 0.0
        %s2580 = scalar_lea.vmem %s3, 188
        %v2581 = vld [vmem:[%s2580] sm:$0xf]
        %2583 = vset.pattern.permute.xlu0 0
        %2584 = vperm.xlu0 %2583, %v2581
        %v2585 = vpop.permute.xlu0 %2584
        %v2588 = vlaneseq
        %v2589 = vshrl.u32 %v2588, 7
        %v2590 = vsub.s32 0, %v2589
        %v2591 = vrot.slane %v2579, %v2590
        %v2592 = vlaneseq
        %v2593 = vshrl.u32 %v2592, 7
        %v2594 = vsub.s32 1, %v2593
        %v2595 = vrot.slane %v2579, %v2594
        %v2598 = vmul.f32 %v2585, %v2591
        %v2599 = vmul.f32 %v2585, %v2595
        %v2600 = vadd.f32 %v2553, %v2598
        %v2601 = vadd.f32 %v2554, %v2599
        %2602 = vrot.lane.b32.xlu0 %v2454, 1
        %v2603 = vpop.permute.xlu0 %2602
        %2604 = vrot.lane.b32.xlu0 %v2458, 1
        %v2605 = vpop.permute.xlu0 %2604
        %v2606 = vsel %vm602, %v2603, %v2605
        %v2607 = vsel %vm602, %v2605, %v2603
        %v2610 = vcombine.low %v2607, %v2606
        %v2612 = vunpack.c.l.s4 1966171168
        %v2613 = vunpack.c.0.s8 %v2612
        %v2614 = vlaneseq
        %v2615 = vshrl.u32 %v2614, 7
        %v2616 = vsub.s32 %v2613, %v2615
        %v2617 = vrot.slane %v2610, %v2616
        %v2619 = vunpack.c.l.s4 1966171168
        %v2620 = vunpack.c.0.s8 %v2619
        %v2621 = vlaneseq
        %v2622 = vshrl.u32 %v2621, 7
        %v2623 = vsub.s32 %v2620, %v2622
        %v2624 = vrot.slane %v2617, %v2623
        %v2626 = vsel %vm421, %v2624, 0.0
        %s2627 = scalar_lea.vmem %s3, 192
        %v2628 = vld [vmem:[%s2627] sm:$0xf]
        %2630 = vset.pattern.permute.xlu0 0
        %2631 = vperm.xlu0 %2630, %v2628
        %v2632 = vpop.permute.xlu0 %2631
        %v2635 = vlaneseq
        %v2636 = vshrl.u32 %v2635, 7
        %v2637 = vsub.s32 0, %v2636
        %v2638 = vrot.slane %v2626, %v2637
        %v2639 = vlaneseq
        %v2640 = vshrl.u32 %v2639, 7
        %v2641 = vsub.s32 1, %v2640
        %v2642 = vrot.slane %v2626, %v2641
        %v2645 = vmul.f32 %v2632, %v2638
        %v2646 = vmul.f32 %v2632, %v2642
        %v2647 = vadd.f32 %v2600, %v2645
        %v2648 = vadd.f32 %v2601, %v2646
        %s2649 = scalar_lea.vmem %s3, 196
        %v2650 = vld [vmem:[%s2649] sm:$0xf]
        %2652 = vset.pattern.permute.xlu0 0
        %2653 = vperm.xlu0 %2652, %v2650
        %v2654 = vpop.permute.xlu0 %2653
        %v2656 = vmul.f32 %v2654, %v2454
        %v2657 = vmul.f32 %v2654, %v2458
        %v2658 = vadd.f32 %v2647, %v2656
        %v2659 = vadd.f32 %v2648, %v2657
        %2660 = vrot.lane.b32.xlu0 %v2454, 127
        %v2661 = vpop.permute.xlu0 %2660
        %2662 = vrot.lane.b32.xlu0 %v2458, 127
        %v2663 = vpop.permute.xlu0 %2662
        %v2664 = vsel %vm661, %v2661, %v2663
        %v2665 = vsel %vm661, %v2663, %v2661
        %v2668 = vcombine.low %v2664, %v2665
        %v2670 = vunpack.c.l.s4 1966171168
        %v2671 = vunpack.c.0.s8 %v2670
        %v2672 = vlaneseq
        %v2673 = vshrl.u32 %v2672, 7
        %v2674 = vsub.s32 %v2671, %v2673
        %v2675 = vrot.slane %v2668, %v2674
        %v2677 = vunpack.c.l.s4 1966171168
        %v2678 = vunpack.c.0.s8 %v2677
        %v2679 = vlaneseq
        %v2680 = vshrl.u32 %v2679, 7
        %v2681 = vsub.s32 %v2678, %v2680
        %v2682 = vrot.slane %v2675, %v2681
        %v2684 = vsel %vm424, %v2682, 0.0
        %s2685 = scalar_lea.vmem %s3, 200
        %v2686 = vld [vmem:[%s2685] sm:$0xf]
        %2688 = vset.pattern.permute.xlu0 0
        %2689 = vperm.xlu0 %2688, %v2686
        %v2690 = vpop.permute.xlu0 %2689
        %v2693 = vlaneseq
        %v2694 = vshrl.u32 %v2693, 7
        %v2695 = vsub.s32 0, %v2694
        %v2696 = vrot.slane %v2684, %v2695
        %v2697 = vlaneseq
        %v2698 = vshrl.u32 %v2697, 7
        %v2699 = vsub.s32 1, %v2698
        %v2700 = vrot.slane %v2684, %v2699
        %v2703 = vmul.f32 %v2690, %v2696
        %v2704 = vmul.f32 %v2690, %v2700
        %v2705 = vadd.f32 %v2658, %v2703
        %v2706 = vadd.f32 %v2659, %v2704
        %2707 = vrot.lane.b32.xlu0 %v2454, 113
        %v2708 = vpop.permute.xlu0 %2707
        %2709 = vrot.lane.b32.xlu0 %v2458, 113
        %v2710 = vpop.permute.xlu0 %2709
        %v2711 = vsel %vm709, %v2708, %v2710
        %v2712 = vsel %vm709, %v2710, %v2708
        %v2715 = vcombine.low %v2711, %v2712
        %v2717 = vunpack.c.l.s4 1966171168
        %v2718 = vunpack.c.0.s8 %v2717
        %v2719 = vlaneseq
        %v2720 = vshrl.u32 %v2719, 7
        %v2721 = vsub.s32 %v2718, %v2720
        %v2722 = vrot.slane %v2715, %v2721
        %v2724 = vunpack.c.l.s4 1966171168
        %v2725 = vunpack.c.0.s8 %v2724
        %v2726 = vlaneseq
        %v2727 = vshrl.u32 %v2726, 7
        %v2728 = vsub.s32 %v2725, %v2727
        %v2729 = vrot.slane %v2722, %v2728
        %v2731 = vsel %vm427, %v2729, 0.0
        %s2732 = scalar_lea.vmem %s3, 204
        %v2733 = vld [vmem:[%s2732] sm:$0xf]
        %2735 = vset.pattern.permute.xlu0 0
        %2736 = vperm.xlu0 %2735, %v2733
        %v2737 = vpop.permute.xlu0 %2736
        %v2740 = vlaneseq
        %v2741 = vshrl.u32 %v2740, 7
        %v2742 = vsub.s32 0, %v2741
        %v2743 = vrot.slane %v2731, %v2742
        %v2744 = vlaneseq
        %v2745 = vshrl.u32 %v2744, 7
        %v2746 = vsub.s32 1, %v2745
        %v2747 = vrot.slane %v2731, %v2746
        %v2750 = vmul.f32 %v2737, %v2743
        %v2751 = vmul.f32 %v2737, %v2747
        %v2752 = vadd.f32 %v2705, %v2750
        %v2753 = vadd.f32 %v2706, %v2751
        %2754 = vrot.lane.b32.xlu0 %v2454, 112
        %v2755 = vpop.permute.xlu0 %2754
        %2756 = vrot.lane.b32.xlu0 %v2458, 112
        %v2757 = vpop.permute.xlu0 %2756
        %v2758 = vsel %vm757, %v2755, %v2757
        %v2759 = vsel %vm757, %v2757, %v2755
        %v2762 = vcombine.low %v2758, %v2759
        %v2764 = vunpack.c.l.s4 1966171168
        %v2765 = vunpack.c.0.s8 %v2764
        %v2766 = vlaneseq
        %v2767 = vshrl.u32 %v2766, 7
        %v2768 = vsub.s32 %v2765, %v2767
        %v2769 = vrot.slane %v2762, %v2768
        %v2771 = vunpack.c.l.s4 1966171168
        %v2772 = vunpack.c.0.s8 %v2771
        %v2773 = vlaneseq
        %v2774 = vshrl.u32 %v2773, 7
        %v2775 = vsub.s32 %v2772, %v2774
        %v2776 = vrot.slane %v2769, %v2775
        %v2778 = vsel %vm430, %v2776, 0.0
        %s2779 = scalar_lea.vmem %s3, 208
        %v2780 = vld [vmem:[%s2779] sm:$0xf]
        %2782 = vset.pattern.permute.xlu0 0
        %2783 = vperm.xlu0 %2782, %v2780
        %v2784 = vpop.permute.xlu0 %2783
        %v2787 = vlaneseq
        %v2788 = vshrl.u32 %v2787, 7
        %v2789 = vsub.s32 0, %v2788
        %v2790 = vrot.slane %v2778, %v2789
        %v2791 = vlaneseq
        %v2792 = vshrl.u32 %v2791, 7
        %v2793 = vsub.s32 1, %v2792
        %v2794 = vrot.slane %v2778, %v2793
        %v2797 = vmul.f32 %v2784, %v2790
        %v2798 = vmul.f32 %v2784, %v2794
        %v2799 = vadd.f32 %v2752, %v2797
        %v2800 = vadd.f32 %v2753, %v2798
        %2801 = vrot.lane.b32.xlu0 %v2454, 111
        %v2802 = vpop.permute.xlu0 %2801
        %2803 = vrot.lane.b32.xlu0 %v2458, 111
        %v2804 = vpop.permute.xlu0 %2803
        %v2805 = vsel %vm805, %v2802, %v2804
        %v2806 = vsel %vm805, %v2804, %v2802
        %v2809 = vcombine.low %v2805, %v2806
        %v2811 = vunpack.c.l.s4 1966171168
        %v2812 = vunpack.c.0.s8 %v2811
        %v2813 = vlaneseq
        %v2814 = vshrl.u32 %v2813, 7
        %v2815 = vsub.s32 %v2812, %v2814
        %v2816 = vrot.slane %v2809, %v2815
        %v2818 = vunpack.c.l.s4 1966171168
        %v2819 = vunpack.c.0.s8 %v2818
        %v2820 = vlaneseq
        %v2821 = vshrl.u32 %v2820, 7
        %v2822 = vsub.s32 %v2819, %v2821
        %v2823 = vrot.slane %v2816, %v2822
        %v2825 = vsel %vm433, %v2823, 0.0
        %s2826 = scalar_lea.vmem %s3, 212
        %v2827 = vld [vmem:[%s2826] sm:$0xf]
        %2829 = vset.pattern.permute.xlu0 0
        %2830 = vperm.xlu0 %2829, %v2827
        %v2831 = vpop.permute.xlu0 %2830
        %v2834 = vlaneseq
        %v2835 = vshrl.u32 %v2834, 7
        %v2836 = vsub.s32 0, %v2835
        %v2837 = vrot.slane %v2825, %v2836
        %v2838 = vlaneseq
        %v2839 = vshrl.u32 %v2838, 7
        %v2840 = vsub.s32 1, %v2839
        %v2841 = vrot.slane %v2825, %v2840
        %v2844 = vmul.f32 %v2831, %v2837
        %v2845 = vmul.f32 %v2831, %v2841
        %v2846 = vadd.f32 %v2799, %v2844
        %v2847 = vadd.f32 %v2800, %v2845
        %s2848 = scalar_lea.vmem %s378, 4 [#allocation3]
        %v2849 = vld [vmem:[%s2848] sm:$0x3]
        %v2851 = vlaneseq
        %v2852 = vshrl.u32 %v2851, 7
        %v2853 = vsub.s32 0, %v2852
        %v2854 = vrot.slane %v2849, %v2853
        %v2855 = vlaneseq
        %v2856 = vshrl.u32 %v2855, 7
        %v2857 = vsub.s32 1, %v2856
        %v2858 = vrot.slane %v2849, %v2857
        %2861 = vrot.lane.b32.xlu0 %v2854, 17
        %v2862 = vpop.permute.xlu0 %2861
        %2863 = vrot.lane.b32.xlu0 %v2858, 17
        %v2864 = vpop.permute.xlu0 %2863
        %v2865 = vsel %vm459, %v2862, %v2864
        %v2866 = vsel %vm459, %v2864, %v2862
        %v2869 = vcombine.low %v2866, %v2865
        %v2871 = vunpack.c.l.s4 1966171168
        %v2872 = vunpack.c.0.s8 %v2871
        %v2873 = vlaneseq
        %v2874 = vshrl.u32 %v2873, 7
        %v2875 = vsub.s32 %v2872, %v2874
        %v2876 = vrot.slane %v2869, %v2875
        %v2878 = vunpack.c.l.s4 1966171168
        %v2879 = vunpack.c.0.s8 %v2878
        %v2880 = vlaneseq
        %v2881 = vshrl.u32 %v2880, 7
        %v2882 = vsub.s32 %v2879, %v2881
        %v2883 = vrot.slane %v2876, %v2882
        %v2885 = vsel %vm412, %v2883, 0.0
        %s2886 = scalar_lea.vmem %s3, 216
        %v2887 = vld [vmem:[%s2886] sm:$0xf]
        %2889 = vset.pattern.permute.xlu0 0
        %2890 = vperm.xlu0 %2889, %v2887
        %v2891 = vpop.permute.xlu0 %2890
        %v2894 = vlaneseq
        %v2895 = vshrl.u32 %v2894, 7
        %v2896 = vsub.s32 0, %v2895
        %v2897 = vrot.slane %v2885, %v2896
        %v2898 = vlaneseq
        %v2899 = vshrl.u32 %v2898, 7
        %v2900 = vsub.s32 1, %v2899
        %v2901 = vrot.slane %v2885, %v2900
        %v2904 = vmul.f32 %v2891, %v2897
        %v2905 = vmul.f32 %v2891, %v2901
        %v2906 = vadd.f32 %v2846, %v2904
        %v2907 = vadd.f32 %v2847, %v2905
        %2908 = vrot.lane.b32.xlu0 %v2854, 16
        %v2909 = vpop.permute.xlu0 %2908
        %2910 = vrot.lane.b32.xlu0 %v2858, 16
        %v2911 = vpop.permute.xlu0 %2910
        %v2912 = vsel %vm506, %v2909, %v2911
        %v2913 = vsel %vm506, %v2911, %v2909
        %v2916 = vcombine.low %v2913, %v2912
        %v2918 = vunpack.c.l.s4 1966171168
        %v2919 = vunpack.c.0.s8 %v2918
        %v2920 = vlaneseq
        %v2921 = vshrl.u32 %v2920, 7
        %v2922 = vsub.s32 %v2919, %v2921
        %v2923 = vrot.slane %v2916, %v2922
        %v2925 = vunpack.c.l.s4 1966171168
        %v2926 = vunpack.c.0.s8 %v2925
        %v2927 = vlaneseq
        %v2928 = vshrl.u32 %v2927, 7
        %v2929 = vsub.s32 %v2926, %v2928
        %v2930 = vrot.slane %v2923, %v2929
        %v2932 = vsel %vm415, %v2930, 0.0
        %s2933 = scalar_lea.vmem %s3, 220
        %v2934 = vld [vmem:[%s2933] sm:$0xf]
        %2936 = vset.pattern.permute.xlu0 0
        %2937 = vperm.xlu0 %2936, %v2934
        %v2938 = vpop.permute.xlu0 %2937
        %v2941 = vlaneseq
        %v2942 = vshrl.u32 %v2941, 7
        %v2943 = vsub.s32 0, %v2942
        %v2944 = vrot.slane %v2932, %v2943
        %v2945 = vlaneseq
        %v2946 = vshrl.u32 %v2945, 7
        %v2947 = vsub.s32 1, %v2946
        %v2948 = vrot.slane %v2932, %v2947
        %v2951 = vmul.f32 %v2938, %v2944
        %v2952 = vmul.f32 %v2938, %v2948
        %v2953 = vadd.f32 %v2906, %v2951
        %v2954 = vadd.f32 %v2907, %v2952
        %2955 = vrot.lane.b32.xlu0 %v2854, 15
        %v2956 = vpop.permute.xlu0 %2955
        %2957 = vrot.lane.b32.xlu0 %v2858, 15
        %v2958 = vpop.permute.xlu0 %2957
        %v2959 = vsel %vm554, %v2956, %v2958
        %v2960 = vsel %vm554, %v2958, %v2956
        %v2963 = vcombine.low %v2960, %v2959
        %v2965 = vunpack.c.l.s4 1966171168
        %v2966 = vunpack.c.0.s8 %v2965
        %v2967 = vlaneseq
        %v2968 = vshrl.u32 %v2967, 7
        %v2969 = vsub.s32 %v2966, %v2968
        %v2970 = vrot.slane %v2963, %v2969
        %v2972 = vunpack.c.l.s4 1966171168
        %v2973 = vunpack.c.0.s8 %v2972
        %v2974 = vlaneseq
        %v2975 = vshrl.u32 %v2974, 7
        %v2976 = vsub.s32 %v2973, %v2975
        %v2977 = vrot.slane %v2970, %v2976
        %v2979 = vsel %vm418, %v2977, 0.0
        %s2980 = scalar_lea.vmem %s3, 224
        %v2981 = vld [vmem:[%s2980] sm:$0xf]
        %2983 = vset.pattern.permute.xlu0 0
        %2984 = vperm.xlu0 %2983, %v2981
        %v2985 = vpop.permute.xlu0 %2984
        %v2988 = vlaneseq
        %v2989 = vshrl.u32 %v2988, 7
        %v2990 = vsub.s32 0, %v2989
        %v2991 = vrot.slane %v2979, %v2990
        %v2992 = vlaneseq
        %v2993 = vshrl.u32 %v2992, 7
        %v2994 = vsub.s32 1, %v2993
        %v2995 = vrot.slane %v2979, %v2994
        %v2998 = vmul.f32 %v2985, %v2991
        %v2999 = vmul.f32 %v2985, %v2995
        %v3000 = vadd.f32 %v2953, %v2998
        %v3001 = vadd.f32 %v2954, %v2999
        %3002 = vrot.lane.b32.xlu0 %v2854, 1
        %v3003 = vpop.permute.xlu0 %3002
        %3004 = vrot.lane.b32.xlu0 %v2858, 1
        %v3005 = vpop.permute.xlu0 %3004
        %v3006 = vsel %vm602, %v3003, %v3005
        %v3007 = vsel %vm602, %v3005, %v3003
        %v3010 = vcombine.low %v3007, %v3006
        %v3012 = vunpack.c.l.s4 1966171168
        %v3013 = vunpack.c.0.s8 %v3012
        %v3014 = vlaneseq
        %v3015 = vshrl.u32 %v3014, 7
        %v3016 = vsub.s32 %v3013, %v3015
        %v3017 = vrot.slane %v3010, %v3016
        %v3019 = vunpack.c.l.s4 1966171168
        %v3020 = vunpack.c.0.s8 %v3019
        %v3021 = vlaneseq
        %v3022 = vshrl.u32 %v3021, 7
        %v3023 = vsub.s32 %v3020, %v3022
        %v3024 = vrot.slane %v3017, %v3023
        %v3026 = vsel %vm421, %v3024, 0.0
        %s3027 = scalar_lea.vmem %s3, 228
        %v3028 = vld [vmem:[%s3027] sm:$0xf]
        %3030 = vset.pattern.permute.xlu0 0
        %3031 = vperm.xlu0 %3030, %v3028
        %v3032 = vpop.permute.xlu0 %3031
        %v3035 = vlaneseq
        %v3036 = vshrl.u32 %v3035, 7
        %v3037 = vsub.s32 0, %v3036
        %v3038 = vrot.slane %v3026, %v3037
        %v3039 = vlaneseq
        %v3040 = vshrl.u32 %v3039, 7
        %v3041 = vsub.s32 1, %v3040
        %v3042 = vrot.slane %v3026, %v3041
        %v3045 = vmul.f32 %v3032, %v3038
        %v3046 = vmul.f32 %v3032, %v3042
        %v3047 = vadd.f32 %v3000, %v3045
        %v3048 = vadd.f32 %v3001, %v3046
        %s3049 = scalar_lea.vmem %s3, 232
        %v3050 = vld [vmem:[%s3049] sm:$0xf]
        %3052 = vset.pattern.permute.xlu0 0
        %3053 = vperm.xlu0 %3052, %v3050
        %v3054 = vpop.permute.xlu0 %3053
        %v3056 = vmul.f32 %v3054, %v2854
        %v3057 = vmul.f32 %v3054, %v2858
        %v3058 = vadd.f32 %v3047, %v3056
        %v3059 = vadd.f32 %v3048, %v3057
        %3060 = vrot.lane.b32.xlu0 %v2854, 127
        %v3061 = vpop.permute.xlu0 %3060
        %3062 = vrot.lane.b32.xlu0 %v2858, 127
        %v3063 = vpop.permute.xlu0 %3062
        %v3064 = vsel %vm661, %v3061, %v3063
        %v3065 = vsel %vm661, %v3063, %v3061
        %v3068 = vcombine.low %v3064, %v3065
        %v3070 = vunpack.c.l.s4 1966171168
        %v3071 = vunpack.c.0.s8 %v3070
        %v3072 = vlaneseq
        %v3073 = vshrl.u32 %v3072, 7
        %v3074 = vsub.s32 %v3071, %v3073
        %v3075 = vrot.slane %v3068, %v3074
        %v3077 = vunpack.c.l.s4 1966171168
        %v3078 = vunpack.c.0.s8 %v3077
        %v3079 = vlaneseq
        %v3080 = vshrl.u32 %v3079, 7
        %v3081 = vsub.s32 %v3078, %v3080
        %v3082 = vrot.slane %v3075, %v3081
        %v3084 = vsel %vm424, %v3082, 0.0
        %s3085 = scalar_lea.vmem %s3, 236
        %v3086 = vld [vmem:[%s3085] sm:$0xf]
        %3088 = vset.pattern.permute.xlu0 0
        %3089 = vperm.xlu0 %3088, %v3086
        %v3090 = vpop.permute.xlu0 %3089
        %v3093 = vlaneseq
        %v3094 = vshrl.u32 %v3093, 7
        %v3095 = vsub.s32 0, %v3094
        %v3096 = vrot.slane %v3084, %v3095
        %v3097 = vlaneseq
        %v3098 = vshrl.u32 %v3097, 7
        %v3099 = vsub.s32 1, %v3098
        %v3100 = vrot.slane %v3084, %v3099
        %v3103 = vmul.f32 %v3090, %v3096
        %v3104 = vmul.f32 %v3090, %v3100
        %v3105 = vadd.f32 %v3058, %v3103
        %v3106 = vadd.f32 %v3059, %v3104
        %3107 = vrot.lane.b32.xlu0 %v2854, 113
        %v3108 = vpop.permute.xlu0 %3107
        %3109 = vrot.lane.b32.xlu0 %v2858, 113
        %v3110 = vpop.permute.xlu0 %3109
        %v3111 = vsel %vm709, %v3108, %v3110
        %v3112 = vsel %vm709, %v3110, %v3108
        %v3115 = vcombine.low %v3111, %v3112
        %v3117 = vunpack.c.l.s4 1966171168
        %v3118 = vunpack.c.0.s8 %v3117
        %v3119 = vlaneseq
        %v3120 = vshrl.u32 %v3119, 7
        %v3121 = vsub.s32 %v3118, %v3120
        %v3122 = vrot.slane %v3115, %v3121
        %v3124 = vunpack.c.l.s4 1966171168
        %v3125 = vunpack.c.0.s8 %v3124
        %v3126 = vlaneseq
        %v3127 = vshrl.u32 %v3126, 7
        %v3128 = vsub.s32 %v3125, %v3127
        %v3129 = vrot.slane %v3122, %v3128
        %v3131 = vsel %vm427, %v3129, 0.0
        %s3132 = scalar_lea.vmem %s3, 240
        %v3133 = vld [vmem:[%s3132] sm:$0xf]
        %3135 = vset.pattern.permute.xlu0 0
        %3136 = vperm.xlu0 %3135, %v3133
        %v3137 = vpop.permute.xlu0 %3136
        %v3140 = vlaneseq
        %v3141 = vshrl.u32 %v3140, 7
        %v3142 = vsub.s32 0, %v3141
        %v3143 = vrot.slane %v3131, %v3142
        %v3144 = vlaneseq
        %v3145 = vshrl.u32 %v3144, 7
        %v3146 = vsub.s32 1, %v3145
        %v3147 = vrot.slane %v3131, %v3146
        %v3150 = vmul.f32 %v3137, %v3143
        %v3151 = vmul.f32 %v3137, %v3147
        %v3152 = vadd.f32 %v3105, %v3150
        %v3153 = vadd.f32 %v3106, %v3151
        %3154 = vrot.lane.b32.xlu0 %v2854, 112
        %v3155 = vpop.permute.xlu0 %3154
        %3156 = vrot.lane.b32.xlu0 %v2858, 112
        %v3157 = vpop.permute.xlu0 %3156
        %v3158 = vsel %vm757, %v3155, %v3157
        %v3159 = vsel %vm757, %v3157, %v3155
        %v3162 = vcombine.low %v3158, %v3159
        %v3164 = vunpack.c.l.s4 1966171168
        %v3165 = vunpack.c.0.s8 %v3164
        %v3166 = vlaneseq
        %v3167 = vshrl.u32 %v3166, 7
        %v3168 = vsub.s32 %v3165, %v3167
        %v3169 = vrot.slane %v3162, %v3168
        %v3171 = vunpack.c.l.s4 1966171168
        %v3172 = vunpack.c.0.s8 %v3171
        %v3173 = vlaneseq
        %v3174 = vshrl.u32 %v3173, 7
        %v3175 = vsub.s32 %v3172, %v3174
        %v3176 = vrot.slane %v3169, %v3175
        %v3178 = vsel %vm430, %v3176, 0.0
        %s3179 = scalar_lea.vmem %s3, 244
        %v3180 = vld [vmem:[%s3179] sm:$0xf]
        %3182 = vset.pattern.permute.xlu0 0
        %3183 = vperm.xlu0 %3182, %v3180
        %v3184 = vpop.permute.xlu0 %3183
        %v3187 = vlaneseq
        %v3188 = vshrl.u32 %v3187, 7
        %v3189 = vsub.s32 0, %v3188
        %v3190 = vrot.slane %v3178, %v3189
        %v3191 = vlaneseq
        %v3192 = vshrl.u32 %v3191, 7
        %v3193 = vsub.s32 1, %v3192
        %v3194 = vrot.slane %v3178, %v3193
        %v3197 = vmul.f32 %v3184, %v3190
        %v3198 = vmul.f32 %v3184, %v3194
        %v3199 = vadd.f32 %v3152, %v3197
        %v3200 = vadd.f32 %v3153, %v3198
        %3201 = vrot.lane.b32.xlu0 %v2854, 111
        %v3202 = vpop.permute.xlu0 %3201
        %3203 = vrot.lane.b32.xlu0 %v2858, 111
        %v3204 = vpop.permute.xlu0 %3203
        %v3205 = vsel %vm805, %v3202, %v3204
        %v3206 = vsel %vm805, %v3204, %v3202
        %v3209 = vcombine.low %v3205, %v3206
        %v3211 = vunpack.c.l.s4 1966171168
        %v3212 = vunpack.c.0.s8 %v3211
        %v3213 = vlaneseq
        %v3214 = vshrl.u32 %v3213, 7
        %v3215 = vsub.s32 %v3212, %v3214
        %v3216 = vrot.slane %v3209, %v3215
        %v3218 = vunpack.c.l.s4 1966171168
        %v3219 = vunpack.c.0.s8 %v3218
        %v3220 = vlaneseq
        %v3221 = vshrl.u32 %v3220, 7
        %v3222 = vsub.s32 %v3219, %v3221
        %v3223 = vrot.slane %v3216, %v3222
        %v3225 = vsel %vm433, %v3223, 0.0
        %s3226 = scalar_lea.vmem %s3, 248
        %v3227 = vld [vmem:[%s3226] sm:$0xf]
        %3229 = vset.pattern.permute.xlu0 0
        %3230 = vperm.xlu0 %3229, %v3227
        %v3231 = vpop.permute.xlu0 %3230
        %v3234 = vlaneseq
        %v3235 = vshrl.u32 %v3234, 7
        %v3236 = vsub.s32 0, %v3235
        %v3237 = vrot.slane %v3225, %v3236
        %v3238 = vlaneseq
        %v3239 = vshrl.u32 %v3238, 7
        %v3240 = vsub.s32 1, %v3239
        %v3241 = vrot.slane %v3225, %v3240
        %v3244 = vmul.f32 %v3231, %v3237
        %v3245 = vmul.f32 %v3231, %v3241
        %v3246 = vadd.f32 %v3199, %v3244
        %v3247 = vadd.f32 %v3200, %v3245
        %s3248 = scalar_lea.vmem %s378, 6 [#allocation3]
        %v3249 = vld [vmem:[%s3248] sm:$0x3]
        %v3251 = vlaneseq
        %v3252 = vshrl.u32 %v3251, 7
        %v3253 = vsub.s32 0, %v3252
        %v3254 = vrot.slane %v3249, %v3253
        %v3255 = vlaneseq
        %v3256 = vshrl.u32 %v3255, 7
        %v3257 = vsub.s32 1, %v3256
        %v3258 = vrot.slane %v3249, %v3257
        %3261 = vrot.lane.b32.xlu0 %v3254, 17
        %v3262 = vpop.permute.xlu0 %3261
        %3263 = vrot.lane.b32.xlu0 %v3258, 17
        %v3264 = vpop.permute.xlu0 %3263
        %v3265 = vsel %vm459, %v3262, %v3264
        %v3266 = vsel %vm459, %v3264, %v3262
        %v3269 = vcombine.low %v3266, %v3265
        %v3271 = vunpack.c.l.s4 1966171168
        %v3272 = vunpack.c.0.s8 %v3271
        %v3273 = vlaneseq
        %v3274 = vshrl.u32 %v3273, 7
        %v3275 = vsub.s32 %v3272, %v3274
        %v3276 = vrot.slane %v3269, %v3275
        %v3278 = vunpack.c.l.s4 1966171168
        %v3279 = vunpack.c.0.s8 %v3278
        %v3280 = vlaneseq
        %v3281 = vshrl.u32 %v3280, 7
        %v3282 = vsub.s32 %v3279, %v3281
        %v3283 = vrot.slane %v3276, %v3282
        %v3285 = vsel %vm412, %v3283, 0.0
        %s3286 = scalar_lea.vmem %s3, 252
        %v3287 = vld [vmem:[%s3286] sm:$0xf]
        %3289 = vset.pattern.permute.xlu0 0
        %3290 = vperm.xlu0 %3289, %v3287
        %v3291 = vpop.permute.xlu0 %3290
        %v3294 = vlaneseq
        %v3295 = vshrl.u32 %v3294, 7
        %v3296 = vsub.s32 0, %v3295
        %v3297 = vrot.slane %v3285, %v3296
        %v3298 = vlaneseq
        %v3299 = vshrl.u32 %v3298, 7
        %v3300 = vsub.s32 1, %v3299
        %v3301 = vrot.slane %v3285, %v3300
        %v3304 = vmul.f32 %v3291, %v3297
        %v3305 = vmul.f32 %v3291, %v3301
        %v3306 = vadd.f32 %v3246, %v3304
        %v3307 = vadd.f32 %v3247, %v3305
        %3308 = vrot.lane.b32.xlu0 %v3254, 16
        %v3309 = vpop.permute.xlu0 %3308
        %3310 = vrot.lane.b32.xlu0 %v3258, 16
        %v3311 = vpop.permute.xlu0 %3310
        %v3312 = vsel %vm506, %v3309, %v3311
        %v3313 = vsel %vm506, %v3311, %v3309
        %v3316 = vcombine.low %v3313, %v3312
        %v3318 = vunpack.c.l.s4 1966171168
        %v3319 = vunpack.c.0.s8 %v3318
        %v3320 = vlaneseq
        %v3321 = vshrl.u32 %v3320, 7
        %v3322 = vsub.s32 %v3319, %v3321
        %v3323 = vrot.slane %v3316, %v3322
        %v3325 = vunpack.c.l.s4 1966171168
        %v3326 = vunpack.c.0.s8 %v3325
        %v3327 = vlaneseq
        %v3328 = vshrl.u32 %v3327, 7
        %v3329 = vsub.s32 %v3326, %v3328
        %v3330 = vrot.slane %v3323, %v3329
        %v3332 = vsel %vm415, %v3330, 0.0
        %s3333 = scalar_lea.vmem %s3, 256
        %v3334 = vld [vmem:[%s3333] sm:$0xf]
        %3336 = vset.pattern.permute.xlu0 0
        %3337 = vperm.xlu0 %3336, %v3334
        %v3338 = vpop.permute.xlu0 %3337
        %v3341 = vlaneseq
        %v3342 = vshrl.u32 %v3341, 7
        %v3343 = vsub.s32 0, %v3342
        %v3344 = vrot.slane %v3332, %v3343
        %v3345 = vlaneseq
        %v3346 = vshrl.u32 %v3345, 7
        %v3347 = vsub.s32 1, %v3346
        %v3348 = vrot.slane %v3332, %v3347
        %v3351 = vmul.f32 %v3338, %v3344
        %v3352 = vmul.f32 %v3338, %v3348
        %v3353 = vadd.f32 %v3306, %v3351
        %v3354 = vadd.f32 %v3307, %v3352
        %3355 = vrot.lane.b32.xlu0 %v3254, 15
        %v3356 = vpop.permute.xlu0 %3355
        %3357 = vrot.lane.b32.xlu0 %v3258, 15
        %v3358 = vpop.permute.xlu0 %3357
        %v3359 = vsel %vm554, %v3356, %v3358
        %v3360 = vsel %vm554, %v3358, %v3356
        %v3363 = vcombine.low %v3360, %v3359
        %v3365 = vunpack.c.l.s4 1966171168
        %v3366 = vunpack.c.0.s8 %v3365
        %v3367 = vlaneseq
        %v3368 = vshrl.u32 %v3367, 7
        %v3369 = vsub.s32 %v3366, %v3368
        %v3370 = vrot.slane %v3363, %v3369
        %v3372 = vunpack.c.l.s4 1966171168
        %v3373 = vunpack.c.0.s8 %v3372
        %v3374 = vlaneseq
        %v3375 = vshrl.u32 %v3374, 7
        %v3376 = vsub.s32 %v3373, %v3375
        %v3377 = vrot.slane %v3370, %v3376
        %v3379 = vsel %vm418, %v3377, 0.0
        %s3380 = scalar_lea.vmem %s3, 260
        %v3381 = vld [vmem:[%s3380] sm:$0xf]
        %3383 = vset.pattern.permute.xlu0 0
        %3384 = vperm.xlu0 %3383, %v3381
        %v3385 = vpop.permute.xlu0 %3384
        %v3388 = vlaneseq
        %v3389 = vshrl.u32 %v3388, 7
        %v3390 = vsub.s32 0, %v3389
        %v3391 = vrot.slane %v3379, %v3390
        %v3392 = vlaneseq
        %v3393 = vshrl.u32 %v3392, 7
        %v3394 = vsub.s32 1, %v3393
        %v3395 = vrot.slane %v3379, %v3394
        %v3398 = vmul.f32 %v3385, %v3391
        %v3399 = vmul.f32 %v3385, %v3395
        %v3400 = vadd.f32 %v3353, %v3398
        %v3401 = vadd.f32 %v3354, %v3399
        %3402 = vrot.lane.b32.xlu0 %v3254, 1
        %v3403 = vpop.permute.xlu0 %3402
        %3404 = vrot.lane.b32.xlu0 %v3258, 1
        %v3405 = vpop.permute.xlu0 %3404
        %v3406 = vsel %vm602, %v3403, %v3405
        %v3407 = vsel %vm602, %v3405, %v3403
        %v3410 = vcombine.low %v3407, %v3406
        %v3412 = vunpack.c.l.s4 1966171168
        %v3413 = vunpack.c.0.s8 %v3412
        %v3414 = vlaneseq
        %v3415 = vshrl.u32 %v3414, 7
        %v3416 = vsub.s32 %v3413, %v3415
        %v3417 = vrot.slane %v3410, %v3416
        %v3419 = vunpack.c.l.s4 1966171168
        %v3420 = vunpack.c.0.s8 %v3419
        %v3421 = vlaneseq
        %v3422 = vshrl.u32 %v3421, 7
        %v3423 = vsub.s32 %v3420, %v3422
        %v3424 = vrot.slane %v3417, %v3423
        %v3426 = vsel %vm421, %v3424, 0.0
        %s3427 = scalar_lea.vmem %s3, 264
        %v3428 = vld [vmem:[%s3427] sm:$0xf]
        %3430 = vset.pattern.permute.xlu0 0
        %3431 = vperm.xlu0 %3430, %v3428
        %v3432 = vpop.permute.xlu0 %3431
        %v3435 = vlaneseq
        %v3436 = vshrl.u32 %v3435, 7
        %v3437 = vsub.s32 0, %v3436
        %v3438 = vrot.slane %v3426, %v3437
        %v3439 = vlaneseq
        %v3440 = vshrl.u32 %v3439, 7
        %v3441 = vsub.s32 1, %v3440
        %v3442 = vrot.slane %v3426, %v3441
        %v3445 = vmul.f32 %v3432, %v3438
        %v3446 = vmul.f32 %v3432, %v3442
        %v3447 = vadd.f32 %v3400, %v3445
        %v3448 = vadd.f32 %v3401, %v3446
        %s3449 = scalar_lea.vmem %s3, 268
        %v3450 = vld [vmem:[%s3449] sm:$0xf]
        %3452 = vset.pattern.permute.xlu0 0
        %3453 = vperm.xlu0 %3452, %v3450
        %v3454 = vpop.permute.xlu0 %3453
        %v3456 = vmul.f32 %v3454, %v3254
        %v3457 = vmul.f32 %v3454, %v3258
        %v3458 = vadd.f32 %v3447, %v3456
        %v3459 = vadd.f32 %v3448, %v3457
        %3460 = vrot.lane.b32.xlu0 %v3254, 127
        %v3461 = vpop.permute.xlu0 %3460
        %3462 = vrot.lane.b32.xlu0 %v3258, 127
        %v3463 = vpop.permute.xlu0 %3462
        %v3464 = vsel %vm661, %v3461, %v3463
        %v3465 = vsel %vm661, %v3463, %v3461
        %v3468 = vcombine.low %v3464, %v3465
        %v3470 = vunpack.c.l.s4 1966171168
        %v3471 = vunpack.c.0.s8 %v3470
        %v3472 = vlaneseq
        %v3473 = vshrl.u32 %v3472, 7
        %v3474 = vsub.s32 %v3471, %v3473
        %v3475 = vrot.slane %v3468, %v3474
        %v3477 = vunpack.c.l.s4 1966171168
        %v3478 = vunpack.c.0.s8 %v3477
        %v3479 = vlaneseq
        %v3480 = vshrl.u32 %v3479, 7
        %v3481 = vsub.s32 %v3478, %v3480
        %v3482 = vrot.slane %v3475, %v3481
        %v3484 = vsel %vm424, %v3482, 0.0
        %s3485 = scalar_lea.vmem %s3, 272
        %v3486 = vld [vmem:[%s3485] sm:$0xf]
        %3488 = vset.pattern.permute.xlu0 0
        %3489 = vperm.xlu0 %3488, %v3486
        %v3490 = vpop.permute.xlu0 %3489
        %v3493 = vlaneseq
        %v3494 = vshrl.u32 %v3493, 7
        %v3495 = vsub.s32 0, %v3494
        %v3496 = vrot.slane %v3484, %v3495
        %v3497 = vlaneseq
        %v3498 = vshrl.u32 %v3497, 7
        %v3499 = vsub.s32 1, %v3498
        %v3500 = vrot.slane %v3484, %v3499
        %v3503 = vmul.f32 %v3490, %v3496
        %v3504 = vmul.f32 %v3490, %v3500
        %v3505 = vadd.f32 %v3458, %v3503
        %v3506 = vadd.f32 %v3459, %v3504
        %3507 = vrot.lane.b32.xlu0 %v3254, 113
        %v3508 = vpop.permute.xlu0 %3507
        %3509 = vrot.lane.b32.xlu0 %v3258, 113
        %v3510 = vpop.permute.xlu0 %3509
        %v3511 = vsel %vm709, %v3508, %v3510
        %v3512 = vsel %vm709, %v3510, %v3508
        %v3515 = vcombine.low %v3511, %v3512
        %v3517 = vunpack.c.l.s4 1966171168
        %v3518 = vunpack.c.0.s8 %v3517
        %v3519 = vlaneseq
        %v3520 = vshrl.u32 %v3519, 7
        %v3521 = vsub.s32 %v3518, %v3520
        %v3522 = vrot.slane %v3515, %v3521
        %v3524 = vunpack.c.l.s4 1966171168
        %v3525 = vunpack.c.0.s8 %v3524
        %v3526 = vlaneseq
        %v3527 = vshrl.u32 %v3526, 7
        %v3528 = vsub.s32 %v3525, %v3527
        %v3529 = vrot.slane %v3522, %v3528
        %v3531 = vsel %vm427, %v3529, 0.0
        %s3532 = scalar_lea.vmem %s3, 276
        %v3533 = vld [vmem:[%s3532] sm:$0xf]
        %3535 = vset.pattern.permute.xlu0 0
        %3536 = vperm.xlu0 %3535, %v3533
        %v3537 = vpop.permute.xlu0 %3536
        %v3540 = vlaneseq
        %v3541 = vshrl.u32 %v3540, 7
        %v3542 = vsub.s32 0, %v3541
        %v3543 = vrot.slane %v3531, %v3542
        %v3544 = vlaneseq
        %v3545 = vshrl.u32 %v3544, 7
        %v3546 = vsub.s32 1, %v3545
        %v3547 = vrot.slane %v3531, %v3546
        %v3550 = vmul.f32 %v3537, %v3543
        %v3551 = vmul.f32 %v3537, %v3547
        %v3552 = vadd.f32 %v3505, %v3550
        %v3553 = vadd.f32 %v3506, %v3551
        %3554 = vrot.lane.b32.xlu0 %v3254, 112
        %v3555 = vpop.permute.xlu0 %3554
        %3556 = vrot.lane.b32.xlu0 %v3258, 112
        %v3557 = vpop.permute.xlu0 %3556
        %v3558 = vsel %vm757, %v3555, %v3557
        %v3559 = vsel %vm757, %v3557, %v3555
        %v3562 = vcombine.low %v3558, %v3559
        %v3564 = vunpack.c.l.s4 1966171168
        %v3565 = vunpack.c.0.s8 %v3564
        %v3566 = vlaneseq
        %v3567 = vshrl.u32 %v3566, 7
        %v3568 = vsub.s32 %v3565, %v3567
        %v3569 = vrot.slane %v3562, %v3568
        %v3571 = vunpack.c.l.s4 1966171168
        %v3572 = vunpack.c.0.s8 %v3571
        %v3573 = vlaneseq
        %v3574 = vshrl.u32 %v3573, 7
        %v3575 = vsub.s32 %v3572, %v3574
        %v3576 = vrot.slane %v3569, %v3575
        %v3578 = vsel %vm430, %v3576, 0.0
        %s3579 = scalar_lea.vmem %s3, 280
        %v3580 = vld [vmem:[%s3579] sm:$0xf]
        %3582 = vset.pattern.permute.xlu0 0
        %3583 = vperm.xlu0 %3582, %v3580
        %v3584 = vpop.permute.xlu0 %3583
        %v3587 = vlaneseq
        %v3588 = vshrl.u32 %v3587, 7
        %v3589 = vsub.s32 0, %v3588
        %v3590 = vrot.slane %v3578, %v3589
        %v3591 = vlaneseq
        %v3592 = vshrl.u32 %v3591, 7
        %v3593 = vsub.s32 1, %v3592
        %v3594 = vrot.slane %v3578, %v3593
        %v3597 = vmul.f32 %v3584, %v3590
        %v3598 = vmul.f32 %v3584, %v3594
        %v3599 = vadd.f32 %v3552, %v3597
        %v3600 = vadd.f32 %v3553, %v3598
        %3601 = vrot.lane.b32.xlu0 %v3254, 111
        %v3602 = vpop.permute.xlu0 %3601
        %3603 = vrot.lane.b32.xlu0 %v3258, 111
        %v3604 = vpop.permute.xlu0 %3603
        %v3605 = vsel %vm805, %v3602, %v3604
        %v3606 = vsel %vm805, %v3604, %v3602
        %v3609 = vcombine.low %v3605, %v3606
        %v3611 = vunpack.c.l.s4 1966171168
        %v3612 = vunpack.c.0.s8 %v3611
        %v3613 = vlaneseq
        %v3614 = vshrl.u32 %v3613, 7
        %v3615 = vsub.s32 %v3612, %v3614
        %v3616 = vrot.slane %v3609, %v3615
        %v3618 = vunpack.c.l.s4 1966171168
        %v3619 = vunpack.c.0.s8 %v3618
        %v3620 = vlaneseq
        %v3621 = vshrl.u32 %v3620, 7
        %v3622 = vsub.s32 %v3619, %v3621
        %v3623 = vrot.slane %v3616, %v3622
        %v3625 = vsel %vm433, %v3623, 0.0
        %s3626 = scalar_lea.vmem %s3, 284
        %v3627 = vld [vmem:[%s3626] sm:$0xf]
        %3629 = vset.pattern.permute.xlu0 0
        %3630 = vperm.xlu0 %3629, %v3627
        %v3631 = vpop.permute.xlu0 %3630
        %v3634 = vlaneseq
        %v3635 = vshrl.u32 %v3634, 7
        %v3636 = vsub.s32 0, %v3635
        %v3637 = vrot.slane %v3625, %v3636
        %v3638 = vlaneseq
        %v3639 = vshrl.u32 %v3638, 7
        %v3640 = vsub.s32 1, %v3639
        %v3641 = vrot.slane %v3625, %v3640
        %v3644 = vmul.f32 %v3631, %v3637
        %v3645 = vmul.f32 %v3631, %v3641
        %v3646 = vadd.f32 %v3599, %v3644
        %v3647 = vadd.f32 %v3600, %v3645
        %s3648 = scalar_lea.vmem %s378, 8 [#allocation3]
        %v3649 = vld [vmem:[%s3648] sm:$0x3]
        %v3651 = vlaneseq
        %v3652 = vshrl.u32 %v3651, 7
        %v3653 = vsub.s32 0, %v3652
        %v3654 = vrot.slane %v3649, %v3653
        %v3655 = vlaneseq
        %v3656 = vshrl.u32 %v3655, 7
        %v3657 = vsub.s32 1, %v3656
        %v3658 = vrot.slane %v3649, %v3657
        %3661 = vrot.lane.b32.xlu0 %v3654, 17
        %v3662 = vpop.permute.xlu0 %3661
        %3663 = vrot.lane.b32.xlu0 %v3658, 17
        %v3664 = vpop.permute.xlu0 %3663
        %v3665 = vsel %vm459, %v3662, %v3664
        %v3666 = vsel %vm459, %v3664, %v3662
        %v3669 = vcombine.low %v3666, %v3665
        %v3671 = vunpack.c.l.s4 1966171168
        %v3672 = vunpack.c.0.s8 %v3671
        %v3673 = vlaneseq
        %v3674 = vshrl.u32 %v3673, 7
        %v3675 = vsub.s32 %v3672, %v3674
        %v3676 = vrot.slane %v3669, %v3675
        %v3678 = vunpack.c.l.s4 1966171168
        %v3679 = vunpack.c.0.s8 %v3678
        %v3680 = vlaneseq
        %v3681 = vshrl.u32 %v3680, 7
        %v3682 = vsub.s32 %v3679, %v3681
        %v3683 = vrot.slane %v3676, %v3682
        %v3685 = vsel %vm412, %v3683, 0.0
        %s3686 = scalar_lea.vmem %s3, 288
        %v3687 = vld [vmem:[%s3686] sm:$0xf]
        %3689 = vset.pattern.permute.xlu0 0
        %3690 = vperm.xlu0 %3689, %v3687
        %v3691 = vpop.permute.xlu0 %3690
        %v3694 = vlaneseq
        %v3695 = vshrl.u32 %v3694, 7
        %v3696 = vsub.s32 0, %v3695
        %v3697 = vrot.slane %v3685, %v3696
        %v3698 = vlaneseq
        %v3699 = vshrl.u32 %v3698, 7
        %v3700 = vsub.s32 1, %v3699
        %v3701 = vrot.slane %v3685, %v3700
        %v3704 = vmul.f32 %v3691, %v3697
        %v3705 = vmul.f32 %v3691, %v3701
        %v3706 = vadd.f32 %v3646, %v3704
        %v3707 = vadd.f32 %v3647, %v3705
        %3708 = vrot.lane.b32.xlu0 %v3654, 16
        %v3709 = vpop.permute.xlu0 %3708
        %3710 = vrot.lane.b32.xlu0 %v3658, 16
        %v3711 = vpop.permute.xlu0 %3710
        %v3712 = vsel %vm506, %v3709, %v3711
        %v3713 = vsel %vm506, %v3711, %v3709
        %v3716 = vcombine.low %v3713, %v3712
        %v3718 = vunpack.c.l.s4 1966171168
        %v3719 = vunpack.c.0.s8 %v3718
        %v3720 = vlaneseq
        %v3721 = vshrl.u32 %v3720, 7
        %v3722 = vsub.s32 %v3719, %v3721
        %v3723 = vrot.slane %v3716, %v3722
        %v3725 = vunpack.c.l.s4 1966171168
        %v3726 = vunpack.c.0.s8 %v3725
        %v3727 = vlaneseq
        %v3728 = vshrl.u32 %v3727, 7
        %v3729 = vsub.s32 %v3726, %v3728
        %v3730 = vrot.slane %v3723, %v3729
        %v3732 = vsel %vm415, %v3730, 0.0
        %s3733 = scalar_lea.vmem %s3, 292
        %v3734 = vld [vmem:[%s3733] sm:$0xf]
        %3736 = vset.pattern.permute.xlu0 0
        %3737 = vperm.xlu0 %3736, %v3734
        %v3738 = vpop.permute.xlu0 %3737
        %v3741 = vlaneseq
        %v3742 = vshrl.u32 %v3741, 7
        %v3743 = vsub.s32 0, %v3742
        %v3744 = vrot.slane %v3732, %v3743
        %v3745 = vlaneseq
        %v3746 = vshrl.u32 %v3745, 7
        %v3747 = vsub.s32 1, %v3746
        %v3748 = vrot.slane %v3732, %v3747
        %v3751 = vmul.f32 %v3738, %v3744
        %v3752 = vmul.f32 %v3738, %v3748
        %v3753 = vadd.f32 %v3706, %v3751
        %v3754 = vadd.f32 %v3707, %v3752
        %3755 = vrot.lane.b32.xlu0 %v3654, 15
        %v3756 = vpop.permute.xlu0 %3755
        %3757 = vrot.lane.b32.xlu0 %v3658, 15
        %v3758 = vpop.permute.xlu0 %3757
        %v3759 = vsel %vm554, %v3756, %v3758
        %v3760 = vsel %vm554, %v3758, %v3756
        %v3763 = vcombine.low %v3760, %v3759
        %v3765 = vunpack.c.l.s4 1966171168
        %v3766 = vunpack.c.0.s8 %v3765
        %v3767 = vlaneseq
        %v3768 = vshrl.u32 %v3767, 7
        %v3769 = vsub.s32 %v3766, %v3768
        %v3770 = vrot.slane %v3763, %v3769
        %v3772 = vunpack.c.l.s4 1966171168
        %v3773 = vunpack.c.0.s8 %v3772
        %v3774 = vlaneseq
        %v3775 = vshrl.u32 %v3774, 7
        %v3776 = vsub.s32 %v3773, %v3775
        %v3777 = vrot.slane %v3770, %v3776
        %v3779 = vsel %vm418, %v3777, 0.0
        %s3780 = scalar_lea.vmem %s3, 296
        %v3781 = vld [vmem:[%s3780] sm:$0xf]
        %3783 = vset.pattern.permute.xlu0 0
        %3784 = vperm.xlu0 %3783, %v3781
        %v3785 = vpop.permute.xlu0 %3784
        %v3788 = vlaneseq
        %v3789 = vshrl.u32 %v3788, 7
        %v3790 = vsub.s32 0, %v3789
        %v3791 = vrot.slane %v3779, %v3790
        %v3792 = vlaneseq
        %v3793 = vshrl.u32 %v3792, 7
        %v3794 = vsub.s32 1, %v3793
        %v3795 = vrot.slane %v3779, %v3794
        %v3798 = vmul.f32 %v3785, %v3791
        %v3799 = vmul.f32 %v3785, %v3795
        %v3800 = vadd.f32 %v3753, %v3798
        %v3801 = vadd.f32 %v3754, %v3799
        %3802 = vrot.lane.b32.xlu0 %v3654, 1
        %v3803 = vpop.permute.xlu0 %3802
        %3804 = vrot.lane.b32.xlu0 %v3658, 1
        %v3805 = vpop.permute.xlu0 %3804
        %v3806 = vsel %vm602, %v3803, %v3805
        %v3807 = vsel %vm602, %v3805, %v3803
        %v3810 = vcombine.low %v3807, %v3806
        %v3812 = vunpack.c.l.s4 1966171168
        %v3813 = vunpack.c.0.s8 %v3812
        %v3814 = vlaneseq
        %v3815 = vshrl.u32 %v3814, 7
        %v3816 = vsub.s32 %v3813, %v3815
        %v3817 = vrot.slane %v3810, %v3816
        %v3819 = vunpack.c.l.s4 1966171168
        %v3820 = vunpack.c.0.s8 %v3819
        %v3821 = vlaneseq
        %v3822 = vshrl.u32 %v3821, 7
        %v3823 = vsub.s32 %v3820, %v3822
        %v3824 = vrot.slane %v3817, %v3823
        %v3826 = vsel %vm421, %v3824, 0.0
        %s3827 = scalar_lea.vmem %s3, 300
        %v3828 = vld [vmem:[%s3827] sm:$0xf]
        %3830 = vset.pattern.permute.xlu0 0
        %3831 = vperm.xlu0 %3830, %v3828
        %v3832 = vpop.permute.xlu0 %3831
        %v3835 = vlaneseq
        %v3836 = vshrl.u32 %v3835, 7
        %v3837 = vsub.s32 0, %v3836
        %v3838 = vrot.slane %v3826, %v3837
        %v3839 = vlaneseq
        %v3840 = vshrl.u32 %v3839, 7
        %v3841 = vsub.s32 1, %v3840
        %v3842 = vrot.slane %v3826, %v3841
        %v3845 = vmul.f32 %v3832, %v3838
        %v3846 = vmul.f32 %v3832, %v3842
        %v3847 = vadd.f32 %v3800, %v3845
        %v3848 = vadd.f32 %v3801, %v3846
        %s3849 = scalar_lea.vmem %s3, 304
        %v3850 = vld [vmem:[%s3849] sm:$0xf]
        %3852 = vset.pattern.permute.xlu0 0
        %3853 = vperm.xlu0 %3852, %v3850
        %v3854 = vpop.permute.xlu0 %3853
        %v3856 = vmul.f32 %v3854, %v3654
        %v3857 = vmul.f32 %v3854, %v3658
        %v3858 = vadd.f32 %v3847, %v3856
        %v3859 = vadd.f32 %v3848, %v3857
        %3860 = vrot.lane.b32.xlu0 %v3654, 127
        %v3861 = vpop.permute.xlu0 %3860
        %3862 = vrot.lane.b32.xlu0 %v3658, 127
        %v3863 = vpop.permute.xlu0 %3862
        %v3864 = vsel %vm661, %v3861, %v3863
        %v3865 = vsel %vm661, %v3863, %v3861
        %v3868 = vcombine.low %v3864, %v3865
        %v3870 = vunpack.c.l.s4 1966171168
        %v3871 = vunpack.c.0.s8 %v3870
        %v3872 = vlaneseq
        %v3873 = vshrl.u32 %v3872, 7
        %v3874 = vsub.s32 %v3871, %v3873
        %v3875 = vrot.slane %v3868, %v3874
        %v3877 = vunpack.c.l.s4 1966171168
        %v3878 = vunpack.c.0.s8 %v3877
        %v3879 = vlaneseq
        %v3880 = vshrl.u32 %v3879, 7
        %v3881 = vsub.s32 %v3878, %v3880
        %v3882 = vrot.slane %v3875, %v3881
        %v3884 = vsel %vm424, %v3882, 0.0
        %s3885 = scalar_lea.vmem %s3, 308
        %v3886 = vld [vmem:[%s3885] sm:$0xf]
        %3888 = vset.pattern.permute.xlu0 0
        %3889 = vperm.xlu0 %3888, %v3886
        %v3890 = vpop.permute.xlu0 %3889
        %v3893 = vlaneseq
        %v3894 = vshrl.u32 %v3893, 7
        %v3895 = vsub.s32 0, %v3894
        %v3896 = vrot.slane %v3884, %v3895
        %v3897 = vlaneseq
        %v3898 = vshrl.u32 %v3897, 7
        %v3899 = vsub.s32 1, %v3898
        %v3900 = vrot.slane %v3884, %v3899
        %v3903 = vmul.f32 %v3890, %v3896
        %v3904 = vmul.f32 %v3890, %v3900
        %v3905 = vadd.f32 %v3858, %v3903
        %v3906 = vadd.f32 %v3859, %v3904
        %3907 = vrot.lane.b32.xlu0 %v3654, 113
        %v3908 = vpop.permute.xlu0 %3907
        %3909 = vrot.lane.b32.xlu0 %v3658, 113
        %v3910 = vpop.permute.xlu0 %3909
        %v3911 = vsel %vm709, %v3908, %v3910
        %v3912 = vsel %vm709, %v3910, %v3908
        %v3915 = vcombine.low %v3911, %v3912
        %v3917 = vunpack.c.l.s4 1966171168
        %v3918 = vunpack.c.0.s8 %v3917
        %v3919 = vlaneseq
        %v3920 = vshrl.u32 %v3919, 7
        %v3921 = vsub.s32 %v3918, %v3920
        %v3922 = vrot.slane %v3915, %v3921
        %v3924 = vunpack.c.l.s4 1966171168
        %v3925 = vunpack.c.0.s8 %v3924
        %v3926 = vlaneseq
        %v3927 = vshrl.u32 %v3926, 7
        %v3928 = vsub.s32 %v3925, %v3927
        %v3929 = vrot.slane %v3922, %v3928
        %v3931 = vsel %vm427, %v3929, 0.0
        %s3932 = scalar_lea.vmem %s3, 312
        %v3933 = vld [vmem:[%s3932] sm:$0xf]
        %3935 = vset.pattern.permute.xlu0 0
        %3936 = vperm.xlu0 %3935, %v3933
        %v3937 = vpop.permute.xlu0 %3936
        %v3940 = vlaneseq
        %v3941 = vshrl.u32 %v3940, 7
        %v3942 = vsub.s32 0, %v3941
        %v3943 = vrot.slane %v3931, %v3942
        %v3944 = vlaneseq
        %v3945 = vshrl.u32 %v3944, 7
        %v3946 = vsub.s32 1, %v3945
        %v3947 = vrot.slane %v3931, %v3946
        %v3950 = vmul.f32 %v3937, %v3943
        %v3951 = vmul.f32 %v3937, %v3947
        %v3952 = vadd.f32 %v3905, %v3950
        %v3953 = vadd.f32 %v3906, %v3951
        %3954 = vrot.lane.b32.xlu0 %v3654, 112
        %v3955 = vpop.permute.xlu0 %3954
        %3956 = vrot.lane.b32.xlu0 %v3658, 112
        %v3957 = vpop.permute.xlu0 %3956
        %v3958 = vsel %vm757, %v3955, %v3957
        %v3959 = vsel %vm757, %v3957, %v3955
        %v3962 = vcombine.low %v3958, %v3959
        %v3964 = vunpack.c.l.s4 1966171168
        %v3965 = vunpack.c.0.s8 %v3964
        %v3966 = vlaneseq
        %v3967 = vshrl.u32 %v3966, 7
        %v3968 = vsub.s32 %v3965, %v3967
        %v3969 = vrot.slane %v3962, %v3968
        %v3971 = vunpack.c.l.s4 1966171168
        %v3972 = vunpack.c.0.s8 %v3971
        %v3973 = vlaneseq
        %v3974 = vshrl.u32 %v3973, 7
        %v3975 = vsub.s32 %v3972, %v3974
        %v3976 = vrot.slane %v3969, %v3975
        %v3978 = vsel %vm430, %v3976, 0.0
        %s3979 = scalar_lea.vmem %s3, 316
        %v3980 = vld [vmem:[%s3979] sm:$0xf]
        %3982 = vset.pattern.permute.xlu0 0
        %3983 = vperm.xlu0 %3982, %v3980
        %v3984 = vpop.permute.xlu0 %3983
        %v3987 = vlaneseq
        %v3988 = vshrl.u32 %v3987, 7
        %v3989 = vsub.s32 0, %v3988
        %v3990 = vrot.slane %v3978, %v3989
        %v3991 = vlaneseq
        %v3992 = vshrl.u32 %v3991, 7
        %v3993 = vsub.s32 1, %v3992
        %v3994 = vrot.slane %v3978, %v3993
        %v3997 = vmul.f32 %v3984, %v3990
        %v3998 = vmul.f32 %v3984, %v3994
        %v3999 = vadd.f32 %v3952, %v3997
        %v4000 = vadd.f32 %v3953, %v3998
        %4001 = vrot.lane.b32.xlu0 %v3654, 111
        %v4002 = vpop.permute.xlu0 %4001
        %4003 = vrot.lane.b32.xlu0 %v3658, 111
        %v4004 = vpop.permute.xlu0 %4003
        %v4005 = vsel %vm805, %v4002, %v4004
        %v4006 = vsel %vm805, %v4004, %v4002
        %v4009 = vcombine.low %v4005, %v4006
        %v4011 = vunpack.c.l.s4 1966171168
        %v4012 = vunpack.c.0.s8 %v4011
        %v4013 = vlaneseq
        %v4014 = vshrl.u32 %v4013, 7
        %v4015 = vsub.s32 %v4012, %v4014
        %v4016 = vrot.slane %v4009, %v4015
        %v4018 = vunpack.c.l.s4 1966171168
        %v4019 = vunpack.c.0.s8 %v4018
        %v4020 = vlaneseq
        %v4021 = vshrl.u32 %v4020, 7
        %v4022 = vsub.s32 %v4019, %v4021
        %v4023 = vrot.slane %v4016, %v4022
        %v4025 = vsel %vm433, %v4023, 0.0
        %s4026 = scalar_lea.vmem %s3, 320
        %v4027 = vld [vmem:[%s4026] sm:$0xf]
        %4029 = vset.pattern.permute.xlu0 0
        %4030 = vperm.xlu0 %4029, %v4027
        %v4031 = vpop.permute.xlu0 %4030
        %v4034 = vlaneseq
        %v4035 = vshrl.u32 %v4034, 7
        %v4036 = vsub.s32 0, %v4035
        %v4037 = vrot.slane %v4025, %v4036
        %v4038 = vlaneseq
        %v4039 = vshrl.u32 %v4038, 7
        %v4040 = vsub.s32 1, %v4039
        %v4041 = vrot.slane %v4025, %v4040
        %v4044 = vmul.f32 %v4031, %v4037
        %v4045 = vmul.f32 %v4031, %v4041
        %v4046 = vadd.f32 %v3999, %v4044
        %v4047 = vadd.f32 %v4000, %v4045
        %s4048 = scalar_lea.vmem %s378, 10 [#allocation3]
        %v4049 = vld [vmem:[%s4048] sm:$0x3]
        %v4051 = vlaneseq
        %v4052 = vshrl.u32 %v4051, 7
        %v4053 = vsub.s32 0, %v4052
        %v4054 = vrot.slane %v4049, %v4053
        %v4055 = vlaneseq
        %v4056 = vshrl.u32 %v4055, 7
        %v4057 = vsub.s32 1, %v4056
        %v4058 = vrot.slane %v4049, %v4057
        %4061 = vrot.lane.b32.xlu0 %v4054, 17
        %v4062 = vpop.permute.xlu0 %4061
        %4063 = vrot.lane.b32.xlu0 %v4058, 17
        %v4064 = vpop.permute.xlu0 %4063
        %v4065 = vsel %vm459, %v4062, %v4064
        %v4066 = vsel %vm459, %v4064, %v4062
        %v4069 = vcombine.low %v4066, %v4065
        %v4071 = vunpack.c.l.s4 1966171168
        %v4072 = vunpack.c.0.s8 %v4071
        %v4073 = vlaneseq
        %v4074 = vshrl.u32 %v4073, 7
        %v4075 = vsub.s32 %v4072, %v4074
        %v4076 = vrot.slane %v4069, %v4075
        %v4078 = vunpack.c.l.s4 1966171168
        %v4079 = vunpack.c.0.s8 %v4078
        %v4080 = vlaneseq
        %v4081 = vshrl.u32 %v4080, 7
        %v4082 = vsub.s32 %v4079, %v4081
        %v4083 = vrot.slane %v4076, %v4082
        %v4085 = vsel %vm412, %v4083, 0.0
        %s4086 = scalar_lea.vmem %s3, 324
        %v4087 = vld [vmem:[%s4086] sm:$0xf]
        %4089 = vset.pattern.permute.xlu0 0
        %4090 = vperm.xlu0 %4089, %v4087
        %v4091 = vpop.permute.xlu0 %4090
        %v4094 = vlaneseq
        %v4095 = vshrl.u32 %v4094, 7
        %v4096 = vsub.s32 0, %v4095
        %v4097 = vrot.slane %v4085, %v4096
        %v4098 = vlaneseq
        %v4099 = vshrl.u32 %v4098, 7
        %v4100 = vsub.s32 1, %v4099
        %v4101 = vrot.slane %v4085, %v4100
        %v4104 = vmul.f32 %v4091, %v4097
        %v4105 = vmul.f32 %v4091, %v4101
        %v4106 = vadd.f32 %v4046, %v4104
        %v4107 = vadd.f32 %v4047, %v4105
        %4108 = vrot.lane.b32.xlu0 %v4054, 16
        %v4109 = vpop.permute.xlu0 %4108
        %4110 = vrot.lane.b32.xlu0 %v4058, 16
        %v4111 = vpop.permute.xlu0 %4110
        %v4112 = vsel %vm506, %v4109, %v4111
        %v4113 = vsel %vm506, %v4111, %v4109
        %v4116 = vcombine.low %v4113, %v4112
        %v4118 = vunpack.c.l.s4 1966171168
        %v4119 = vunpack.c.0.s8 %v4118
        %v4120 = vlaneseq
        %v4121 = vshrl.u32 %v4120, 7
        %v4122 = vsub.s32 %v4119, %v4121
        %v4123 = vrot.slane %v4116, %v4122
        %v4125 = vunpack.c.l.s4 1966171168
        %v4126 = vunpack.c.0.s8 %v4125
        %v4127 = vlaneseq
        %v4128 = vshrl.u32 %v4127, 7
        %v4129 = vsub.s32 %v4126, %v4128
        %v4130 = vrot.slane %v4123, %v4129
        %v4132 = vsel %vm415, %v4130, 0.0
        %s4133 = scalar_lea.vmem %s3, 328
        %v4134 = vld [vmem:[%s4133] sm:$0xf]
        %4136 = vset.pattern.permute.xlu0 0
        %4137 = vperm.xlu0 %4136, %v4134
        %v4138 = vpop.permute.xlu0 %4137
        %v4141 = vlaneseq
        %v4142 = vshrl.u32 %v4141, 7
        %v4143 = vsub.s32 0, %v4142
        %v4144 = vrot.slane %v4132, %v4143
        %v4145 = vlaneseq
        %v4146 = vshrl.u32 %v4145, 7
        %v4147 = vsub.s32 1, %v4146
        %v4148 = vrot.slane %v4132, %v4147
        %v4151 = vmul.f32 %v4138, %v4144
        %v4152 = vmul.f32 %v4138, %v4148
        %v4153 = vadd.f32 %v4106, %v4151
        %v4154 = vadd.f32 %v4107, %v4152
        %4155 = vrot.lane.b32.xlu0 %v4054, 15
        %v4156 = vpop.permute.xlu0 %4155
        %4157 = vrot.lane.b32.xlu0 %v4058, 15
        %v4158 = vpop.permute.xlu0 %4157
        %v4159 = vsel %vm554, %v4156, %v4158
        %v4160 = vsel %vm554, %v4158, %v4156
        %v4163 = vcombine.low %v4160, %v4159
        %v4165 = vunpack.c.l.s4 1966171168
        %v4166 = vunpack.c.0.s8 %v4165
        %v4167 = vlaneseq
        %v4168 = vshrl.u32 %v4167, 7
        %v4169 = vsub.s32 %v4166, %v4168
        %v4170 = vrot.slane %v4163, %v4169
        %v4172 = vunpack.c.l.s4 1966171168
        %v4173 = vunpack.c.0.s8 %v4172
        %v4174 = vlaneseq
        %v4175 = vshrl.u32 %v4174, 7
        %v4176 = vsub.s32 %v4173, %v4175
        %v4177 = vrot.slane %v4170, %v4176
        %v4179 = vsel %vm418, %v4177, 0.0
        %s4180 = scalar_lea.vmem %s3, 332
        %v4181 = vld [vmem:[%s4180] sm:$0xf]
        %4183 = vset.pattern.permute.xlu0 0
        %4184 = vperm.xlu0 %4183, %v4181
        %v4185 = vpop.permute.xlu0 %4184
        %v4188 = vlaneseq
        %v4189 = vshrl.u32 %v4188, 7
        %v4190 = vsub.s32 0, %v4189
        %v4191 = vrot.slane %v4179, %v4190
        %v4192 = vlaneseq
        %v4193 = vshrl.u32 %v4192, 7
        %v4194 = vsub.s32 1, %v4193
        %v4195 = vrot.slane %v4179, %v4194
        %v4198 = vmul.f32 %v4185, %v4191
        %v4199 = vmul.f32 %v4185, %v4195
        %v4200 = vadd.f32 %v4153, %v4198
        %v4201 = vadd.f32 %v4154, %v4199
        %4202 = vrot.lane.b32.xlu0 %v4054, 1
        %v4203 = vpop.permute.xlu0 %4202
        %4204 = vrot.lane.b32.xlu0 %v4058, 1
        %v4205 = vpop.permute.xlu0 %4204
        %v4206 = vsel %vm602, %v4203, %v4205
        %v4207 = vsel %vm602, %v4205, %v4203
        %v4210 = vcombine.low %v4207, %v4206
        %v4212 = vunpack.c.l.s4 1966171168
        %v4213 = vunpack.c.0.s8 %v4212
        %v4214 = vlaneseq
        %v4215 = vshrl.u32 %v4214, 7
        %v4216 = vsub.s32 %v4213, %v4215
        %v4217 = vrot.slane %v4210, %v4216
        %v4219 = vunpack.c.l.s4 1966171168
        %v4220 = vunpack.c.0.s8 %v4219
        %v4221 = vlaneseq
        %v4222 = vshrl.u32 %v4221, 7
        %v4223 = vsub.s32 %v4220, %v4222
        %v4224 = vrot.slane %v4217, %v4223
        %v4226 = vsel %vm421, %v4224, 0.0
        %s4227 = scalar_lea.vmem %s3, 336
        %v4228 = vld [vmem:[%s4227] sm:$0xf]
        %4230 = vset.pattern.permute.xlu0 0
        %4231 = vperm.xlu0 %4230, %v4228
        %v4232 = vpop.permute.xlu0 %4231
        %v4235 = vlaneseq
        %v4236 = vshrl.u32 %v4235, 7
        %v4237 = vsub.s32 0, %v4236
        %v4238 = vrot.slane %v4226, %v4237
        %v4239 = vlaneseq
        %v4240 = vshrl.u32 %v4239, 7
        %v4241 = vsub.s32 1, %v4240
        %v4242 = vrot.slane %v4226, %v4241
        %v4245 = vmul.f32 %v4232, %v4238
        %v4246 = vmul.f32 %v4232, %v4242
        %v4247 = vadd.f32 %v4200, %v4245
        %v4248 = vadd.f32 %v4201, %v4246
        %s4249 = scalar_lea.vmem %s3, 340
        %v4250 = vld [vmem:[%s4249] sm:$0xf]
        %4252 = vset.pattern.permute.xlu0 0
        %4253 = vperm.xlu0 %4252, %v4250
        %v4254 = vpop.permute.xlu0 %4253
        %v4256 = vmul.f32 %v4254, %v4054
        %v4257 = vmul.f32 %v4254, %v4058
        %v4258 = vadd.f32 %v4247, %v4256
        %v4259 = vadd.f32 %v4248, %v4257
        %4260 = vrot.lane.b32.xlu0 %v4054, 127
        %v4261 = vpop.permute.xlu0 %4260
        %4262 = vrot.lane.b32.xlu0 %v4058, 127
        %v4263 = vpop.permute.xlu0 %4262
        %v4264 = vsel %vm661, %v4261, %v4263
        %v4265 = vsel %vm661, %v4263, %v4261
        %v4268 = vcombine.low %v4264, %v4265
        %v4270 = vunpack.c.l.s4 1966171168
        %v4271 = vunpack.c.0.s8 %v4270
        %v4272 = vlaneseq
        %v4273 = vshrl.u32 %v4272, 7
        %v4274 = vsub.s32 %v4271, %v4273
        %v4275 = vrot.slane %v4268, %v4274
        %v4277 = vunpack.c.l.s4 1966171168
        %v4278 = vunpack.c.0.s8 %v4277
        %v4279 = vlaneseq
        %v4280 = vshrl.u32 %v4279, 7
        %v4281 = vsub.s32 %v4278, %v4280
        %v4282 = vrot.slane %v4275, %v4281
        %v4284 = vsel %vm424, %v4282, 0.0
        %s4285 = scalar_lea.vmem %s3, 344
        %v4286 = vld [vmem:[%s4285] sm:$0xf]
        %4288 = vset.pattern.permute.xlu0 0
        %4289 = vperm.xlu0 %4288, %v4286
        %v4290 = vpop.permute.xlu0 %4289
        %v4293 = vlaneseq
        %v4294 = vshrl.u32 %v4293, 7
        %v4295 = vsub.s32 0, %v4294
        %v4296 = vrot.slane %v4284, %v4295
        %v4297 = vlaneseq
        %v4298 = vshrl.u32 %v4297, 7
        %v4299 = vsub.s32 1, %v4298
        %v4300 = vrot.slane %v4284, %v4299
        %v4303 = vmul.f32 %v4290, %v4296
        %v4304 = vmul.f32 %v4290, %v4300
        %v4305 = vadd.f32 %v4258, %v4303
        %v4306 = vadd.f32 %v4259, %v4304
        %4307 = vrot.lane.b32.xlu0 %v4054, 113
        %v4308 = vpop.permute.xlu0 %4307
        %4309 = vrot.lane.b32.xlu0 %v4058, 113
        %v4310 = vpop.permute.xlu0 %4309
        %v4311 = vsel %vm709, %v4308, %v4310
        %v4312 = vsel %vm709, %v4310, %v4308
        %v4315 = vcombine.low %v4311, %v4312
        %v4317 = vunpack.c.l.s4 1966171168
        %v4318 = vunpack.c.0.s8 %v4317
        %v4319 = vlaneseq
        %v4320 = vshrl.u32 %v4319, 7
        %v4321 = vsub.s32 %v4318, %v4320
        %v4322 = vrot.slane %v4315, %v4321
        %v4324 = vunpack.c.l.s4 1966171168
        %v4325 = vunpack.c.0.s8 %v4324
        %v4326 = vlaneseq
        %v4327 = vshrl.u32 %v4326, 7
        %v4328 = vsub.s32 %v4325, %v4327
        %v4329 = vrot.slane %v4322, %v4328
        %v4331 = vsel %vm427, %v4329, 0.0
        %s4332 = scalar_lea.vmem %s3, 348
        %v4333 = vld [vmem:[%s4332] sm:$0xf]
        %4335 = vset.pattern.permute.xlu0 0
        %4336 = vperm.xlu0 %4335, %v4333
        %v4337 = vpop.permute.xlu0 %4336
        %v4340 = vlaneseq
        %v4341 = vshrl.u32 %v4340, 7
        %v4342 = vsub.s32 0, %v4341
        %v4343 = vrot.slane %v4331, %v4342
        %v4344 = vlaneseq
        %v4345 = vshrl.u32 %v4344, 7
        %v4346 = vsub.s32 1, %v4345
        %v4347 = vrot.slane %v4331, %v4346
        %v4350 = vmul.f32 %v4337, %v4343
        %v4351 = vmul.f32 %v4337, %v4347
        %v4352 = vadd.f32 %v4305, %v4350
        %v4353 = vadd.f32 %v4306, %v4351
        %4354 = vrot.lane.b32.xlu0 %v4054, 112
        %v4355 = vpop.permute.xlu0 %4354
        %4356 = vrot.lane.b32.xlu0 %v4058, 112
        %v4357 = vpop.permute.xlu0 %4356
        %v4358 = vsel %vm757, %v4355, %v4357
        %v4359 = vsel %vm757, %v4357, %v4355
        %v4362 = vcombine.low %v4358, %v4359
        %v4364 = vunpack.c.l.s4 1966171168
        %v4365 = vunpack.c.0.s8 %v4364
        %v4366 = vlaneseq
        %v4367 = vshrl.u32 %v4366, 7
        %v4368 = vsub.s32 %v4365, %v4367
        %v4369 = vrot.slane %v4362, %v4368
        %v4371 = vunpack.c.l.s4 1966171168
        %v4372 = vunpack.c.0.s8 %v4371
        %v4373 = vlaneseq
        %v4374 = vshrl.u32 %v4373, 7
        %v4375 = vsub.s32 %v4372, %v4374
        %v4376 = vrot.slane %v4369, %v4375
        %v4378 = vsel %vm430, %v4376, 0.0
        %s4379 = scalar_lea.vmem %s3, 352
        %v4380 = vld [vmem:[%s4379] sm:$0xf]
        %4382 = vset.pattern.permute.xlu0 0
        %4383 = vperm.xlu0 %4382, %v4380
        %v4384 = vpop.permute.xlu0 %4383
        %v4387 = vlaneseq
        %v4388 = vshrl.u32 %v4387, 7
        %v4389 = vsub.s32 0, %v4388
        %v4390 = vrot.slane %v4378, %v4389
        %v4391 = vlaneseq
        %v4392 = vshrl.u32 %v4391, 7
        %v4393 = vsub.s32 1, %v4392
        %v4394 = vrot.slane %v4378, %v4393
        %v4397 = vmul.f32 %v4384, %v4390
        %v4398 = vmul.f32 %v4384, %v4394
        %v4399 = vadd.f32 %v4352, %v4397
        %v4400 = vadd.f32 %v4353, %v4398
        %4401 = vrot.lane.b32.xlu0 %v4054, 111
        %v4402 = vpop.permute.xlu0 %4401
        %4403 = vrot.lane.b32.xlu0 %v4058, 111
        %v4404 = vpop.permute.xlu0 %4403
        %v4405 = vsel %vm805, %v4402, %v4404
        %v4406 = vsel %vm805, %v4404, %v4402
        %v4409 = vcombine.low %v4405, %v4406
        %v4411 = vunpack.c.l.s4 1966171168
        %v4412 = vunpack.c.0.s8 %v4411
        %v4413 = vlaneseq
        %v4414 = vshrl.u32 %v4413, 7
        %v4415 = vsub.s32 %v4412, %v4414
        %v4416 = vrot.slane %v4409, %v4415
        %v4418 = vunpack.c.l.s4 1966171168
        %v4419 = vunpack.c.0.s8 %v4418
        %v4420 = vlaneseq
        %v4421 = vshrl.u32 %v4420, 7
        %v4422 = vsub.s32 %v4419, %v4421
        %v4423 = vrot.slane %v4416, %v4422
        %v4425 = vsel %vm433, %v4423, 0.0
        %s4426 = scalar_lea.vmem %s3, 356
        %v4427 = vld [vmem:[%s4426] sm:$0xf]
        %4429 = vset.pattern.permute.xlu0 0
        %4430 = vperm.xlu0 %4429, %v4427
        %v4431 = vpop.permute.xlu0 %4430
        %v4434 = vlaneseq
        %v4435 = vshrl.u32 %v4434, 7
        %v4436 = vsub.s32 0, %v4435
        %v4437 = vrot.slane %v4425, %v4436
        %v4438 = vlaneseq
        %v4439 = vshrl.u32 %v4438, 7
        %v4440 = vsub.s32 1, %v4439
        %v4441 = vrot.slane %v4425, %v4440
        %v4444 = vmul.f32 %v4431, %v4437
        %v4445 = vmul.f32 %v4431, %v4441
        %v4446 = vadd.f32 %v4399, %v4444
        %v4447 = vadd.f32 %v4400, %v4445
        %vm4448 = vcmask 1043456
        %v4449 = vsel %vm4448, %v4446, 0.0
        %v4450 = vsel %vm4448, %v4447, 0.0
        %v4451 = vadd.f32 %v4449, %v4450
        %4452 = vadd.xlane.f32.xlu0 %v4451
        %v4453 = vpop.xlane.xlu0 %4452
        %v4454 = vmul.f32 %v4453, 0.00390625
        %v4455 = vsub.f32 %v4446, %v4454
        %v4456 = vsub.f32 %v4447, %v4454
        %v4457 = vmul.f32 %v4455, %v4455
        %v4458 = vmul.f32 %v4456, %v4456
        %v4459 = vsel %vm4448, %v4457, 0.0
        %v4460 = vsel %vm4448, %v4458, 0.0
        %v4461 = vadd.f32 %v4459, %v4460
        %4462 = vadd.xlane.f32.xlu0 %v4461
        %v4463 = vpop.xlane.xlu0 %4462
        %v4464 = vmul.f32 %v4463, 0.00390625
        %v4465 = vadd.f32 %v4464, 1e-05
        %v4466 = vrsqrt.pop %v4465
        %v4467 = vld [vmem:[%s5] sm:$0xf]
        %v4468 = vmul.f32 %v4466, %v4467
        %4470 = vset.pattern.permute.xlu0 0
        %4471 = vperm.xlu0 %4470, %v4468
        %v4472 = vpop.permute.xlu0 %4471
        %v4474 = vmul.f32 %v4455, %v4472
        %v4475 = vmul.f32 %v4456, %v4472
        %v4476 = vld [vmem:[%s6] sm:$0xf]
        %4478 = vset.pattern.permute.xlu0 0
        %4479 = vperm.xlu0 %4478, %v4476
        %v4480 = vpop.permute.xlu0 %4479
        %v4482 = vadd.f32 %v4474, %v4480
        %v4483 = vadd.f32 %v4475, %v4480
        %vm4484 = vcmp.gt.f32.partialorder %v4482, 0.0
        %vm4485 = vcmp.gt.f32.partialorder %v4483, 0.0
        %v4486 = vmin.f32 %v4482, 0.0
        %v4487 = vmin.f32 %v4483, 0.0
        %v4488 = vmul.f32 %v4486, 1.442695
        %v4489 = vpow.pop %v4488
        %v4490 = vmul.f32 %v4487, 1.442695
        %v4491 = vpow.pop %v4490
        %v4492 = vsub.f32 %v4489, 1.0
        %v4493 = vsub.f32 %v4491, 1.0
        %v4494 = vsel %vm4484, %v4482, %v4492
        %v4495 = vsel %vm4485, %v4483, %v4493
        %v4498 = vcombine.low %v4494, %v4495
        %4500 = vst [vmem:[%s410] sm:$0xff] %v4498
        %s4501 = sand.u32 %s186, 1
        %s4502 = scalar_lea.sflag [#allocation5], %s4501
        %s4503 = sand.u32 %s186, 1
        %s4504 = smul.addr %s4503, 8
        %s4505 = scalar_lea.vmem [#allocation4], %s4504
        // Predicated region
        $region131: #{tpu_custom_call.1} parent=121 // pred_check
          %p4506 = pneg %p196
        $region132: #{tpu_custom_call.1} parent=121 // pred_check_branch
          %4508 = sbr.rel (%p4506) target = $region134
        $region133: #{tpu_custom_call.1} parent=121 // pred_region
          %s4510 = ssub.s32 128, 128
          %4511 = vsyncadd %s4502, %s4510
          %s4512 = smul.addr %s21, 2
          %s4513 = smul.addr %s4512, 64
          %s4514 = scalar_lea.hbm %s7, %s4513
          %s4516 = sshll.u32 %s4505, 4
          %s4517 = int_to_ptr.vmem [resolvable:$true] %s4516
          %4519 = dma.vmem_to_hbm [thread:$0]  %s4517, 128, %s4514, %s4502
        $region134: #{tpu_custom_call.1} parent=121 // pred_fallthru
          _
      $region122: #{tpu_custom_call.1} parent=5 // pred_fallthru
        _
      %p4520 = scmp.le.s32.totalorder 2, %s16
      // Predicated region
      $region135: #{tpu_custom_call.1} parent=5 // pred_check
        %p4521 = pneg %p4520
      $region136: #{tpu_custom_call.1} parent=5 // pred_check_branch
        %4523 = sbr.rel (%p4521) target = $region138
      $region137: #{tpu_custom_call.1} parent=5 // pred_region
        %s4524 = ssub.s32 %s16, 2
        // Predicated region
        $region139: #{tpu_custom_call.1} parent=137 // pred_check
          %p4525 = pneg %p202
        $region140: #{tpu_custom_call.1} parent=137 // pred_check_branch
          %4527 = sbr.rel (%p4525) target = $region142
        $region141: #{tpu_custom_call.1} parent=137 // pred_region
          %s4528 = sand.u32 %s187, 1
          %s4529 = scalar_lea.sflag [#allocation5], %s4528
          %s4530 = sand.u32 %s187, 1
          %s4531 = smul.addr %s4530, 8
          %s4532 = scalar_lea.vmem [#allocation4], %s4531
          %4533 = dma.done %s4529, 128
        $region142: #{tpu_custom_call.1} parent=137 // pred_fallthru
          _
      $region138: #{tpu_custom_call.1} parent=5 // pred_fallthru
        _
    $region6: #{tpu_custom_call.1} parent=1 // loop_footer
      %s20 = sadd.s32 1, %s16
    $region7: #{tpu_custom_call.1} parent=1 // loop_footer_branch
      %15 = sbr.rel target = $region3
    $region8: #{tpu_custom_call.1} parent=1 // loop_exit
      _
    %4534 = vsyncpa [#allocation5], 1
    %s4535 = scalar_lea.sflag [#allocation5], 1
    %4536 = vsyncpa %s4535, 1

</llo_original>
